<compile_context>
chip_gen: v6e
topology: v6e:2x2x1
jax: 0.10.0
libtpu: 0.0.40
codegen_flags: <defaults>
</compile_context>

<pallas_src>
import functools
import math

import jax
import jax.numpy as jnp
from jax.experimental import pallas as pl
from jax.experimental.pallas import tpu as pltpu

_HI = jax.lax.Precision.HIGHEST


# ----------------------------------------------------------------------------
# Kernels
# ----------------------------------------------------------------------------
def _attention_kernel(x_ref, wq_ref, bq_ref, wk_ref, bk_ref, wv_ref, bv_ref,
                      out_ref, w_ref, wx_ref, *, sqrt_key_size):
    # x_ref block: (1, C, L)  (feature-major; time on lanes)
    x = x_ref[0]                                                            # (C, L)
    q = jnp.dot(wq_ref[...], x, preferred_element_type=jnp.float32, precision=_HI) + bq_ref[...]
    k = jnp.dot(wk_ref[...], x, preferred_element_type=jnp.float32, precision=_HI) + bk_ref[...]
    v = jnp.dot(wv_ref[...], x, preferred_element_type=jnp.float32, precision=_HI) + bv_ref[...]
    # Scores laid out (key i, query j) so the softmax axis (queries: torch dim=1) is the lane axis.
    s = jnp.dot(k.T, q, preferred_element_type=jnp.float32, precision=_HI) / sqrt_key_size
    L = s.shape[0]
    key_i = jax.lax.broadcasted_iota(jnp.int32, (L, L), 0)
    qry_j = jax.lax.broadcasted_iota(jnp.int32, (L, L), 1)
    s = jnp.where(key_i > qry_j, jnp.float32(-1e30), s)                     # causal mask (i > j)
    s = s - jnp.max(s, axis=1, keepdims=True)
    e = jnp.exp(s)
    w_t = e / jnp.sum(e, axis=1, keepdims=True)                             # w_t[i, j] = weight[j, i]
    attn = jnp.dot(v, w_t, preferred_element_type=jnp.float32, precision=_HI)   # (C, L)
    out_ref[0] = attn.astype(out_ref.dtype)
    w_ref[0] = w_t.T.astype(w_ref.dtype)                                    # torch layout (query, key)
    rs = jnp.sum(w_t, axis=0, keepdims=True)                                # sum over keys -> (1, L)
    rs = rs - jnp.max(rs, axis=1, keepdims=True)
    e2 = jnp.exp(rs)
    wx_ref[0] = (e2 / jnp.sum(e2, axis=1, keepdims=True)).astype(wx_ref.dtype)


def _causal_conv_kernel(xp_ref, w_ref, b_ref, o_ref, *, dilation, apply_relu):
    # xp_ref block: (1, Cin, pad + L) with the causal left-pad already present,
    # so each tap is just a static slice (no in-kernel shift/scatter needed).
    xp = xp_ref[0]                                                          # (Cin, pad + L)
    ksize, cout, _ = w_ref.shape
    pad = (ksize - 1) * dilation
    L = xp.shape[1] - pad
    acc = jnp.zeros((cout, L), jnp.float32) + b_ref[...]
    for i in range(ksize):
        start = pad - (ksize - 1 - i) * dilation
        acc = acc + jnp.dot(w_ref[i], xp[:, start:start + L],
                            preferred_element_type=jnp.float32, precision=_HI)
    if apply_relu:
        acc = jnp.maximum(acc, 0.0)
    o_ref[0] = acc.astype(o_ref.dtype)


def _decoder_kernel(y_ref, w_ref, b_ref, o_ref):
    y = y_ref[0]                                                            # (C, L)
    logits = jnp.dot(w_ref[...], y, preferred_element_type=jnp.float32, precision=_HI)  # (V, L)
    o_ref[0] = (logits.T + b_ref[...]).astype(o_ref.dtype)                  # (L, V)


def _combine_en_res_kernel(out_ref, res_ref, x_ref, wx_ref, o_ref):
    # relu(out + res + wx * x): the channel-shared multiply (wx broadcasts over the
    # C sublane axis) is fused here instead of being a standalone pass over x.
    y = out_ref[...] + res_ref[...] + wx_ref[...] * x_ref[...]
    o_ref[...] = jnp.maximum(y, 0.0).astype(o_ref.dtype)


def _combine_kernel(out_ref, res_ref, o_ref):
    o_ref[...] = jnp.maximum(out_ref[...] + res_ref[...], 0.0).astype(o_ref.dtype)


# ----------------------------------------------------------------------------
# Tiling helpers (elementwise combine kernel)
# ----------------------------------------------------------------------------
def _vmem_budget():
    """Returns (usable scoped-VMEM bytes, vmem_limit_bytes to request or None)."""
    try:
        phys = pltpu.get_tpu_info().vmem_capacity_bytes
    except Exception:
        phys = None
    if not phys:
        return 16 * 1024 * 1024, None           # conservative (v5e default scoped limit)
    limit = int(min((3 * phys) // 4, 48 * 1024 * 1024))
    return limit, limit


def _choose_tiles(B, C, T, itemsize, n_big_streams):
    sub = max(8, 32 // max(1, int(itemsize)))    # sublane multiple: 8 f32 / 16 bf16 / 32 int8
    avail, vmem_limit = _vmem_budget()
    per_block = max(avail // (2 * n_big_streams + 4), 64 * 1024)

    def padded_bytes(bt, ct, tt):
        cp = -(-ct // sub) * sub
        tp = -(-tt // 128) * 128
        return bt * cp * tp * itemsize

    # Lane tile: full T unless it blows the budget; then a multiple of 128, preferring
    # one that divides T so the tail tile stays lane-dense.
    tt = T
    if padded_bytes(1, C, tt) > per_block and T > 128:
        cp = -(-C // sub) * sub
        max_tt = max(128, (per_block // (cp * itemsize)) // 128 * 128)
        divs = [m for m in range(128, min(max_tt, T) + 1, 128) if T % m == 0]
        tt = divs[-1] if divs else min(max_tt, max(128, (T // 128) * 128))
    # Channel tile only when a single (1, C, tt) block still exceeds budget.
    ct = C
    if padded_bytes(1, ct, tt) > per_block:
        tp = -(-tt // 128) * 128
        ct = min(C, max(sub, (per_block // (tp * itemsize)) // sub * sub))
    # Batch tile: pack rows to amortize the ~0.35us per-step fixed cost.
    bt = max(1, min(B, per_block // max(1, padded_bytes(1, ct, tt))))
    # Keep >=2 grid steps so ("parallel",...) can shard across both v7x TensorCores.
    if B >= 2 and pl.cdiv(B, bt) * pl.cdiv(C, ct) * pl.cdiv(T, tt) < 2:
        bt = (B + 1) // 2
    return bt, ct, tt, vmem_limit


# ----------------------------------------------------------------------------
# Pallas wrappers
# ----------------------------------------------------------------------------
def attention_block(x, wq, bq, wk, bk, wv, bv):
    """TCAN AttentionBlock: returns (attn_out (B,C,L), attn_weights (B,L,L), weight_x (B,1,L))."""
    B, C, L = x.shape
    ks = wq.shape[0]
    kern = functools.partial(_attention_kernel, sqrt_key_size=float(math.sqrt(ks)))
    return pl.pallas_call(
        kern,
        out_shape=(jax.ShapeDtypeStruct((B, C, L), x.dtype),
                   jax.ShapeDtypeStruct((B, L, L), jnp.float32),
                   jax.ShapeDtypeStruct((B, 1, L), jnp.float32)),
        grid=(B,),
        in_specs=[
            pl.BlockSpec((1, C, L), lambda b: (b, 0, 0)),
            pl.BlockSpec((ks, C), lambda b: (0, 0)),
            pl.BlockSpec((ks, 1), lambda b: (0, 0)),
            pl.BlockSpec((ks, C), lambda b: (0, 0)),
            pl.BlockSpec((ks, 1), lambda b: (0, 0)),
            pl.BlockSpec((C, C), lambda b: (0, 0)),
            pl.BlockSpec((C, 1), lambda b: (0, 0)),
        ],
        out_specs=(
            pl.BlockSpec((1, C, L), lambda b: (b, 0, 0)),
            pl.BlockSpec((1, L, L), lambda b: (b, 0, 0)),
            pl.BlockSpec((1, 1, L), lambda b: (b, 0, 0)),
        ),
        compiler_params=pltpu.CompilerParams(dimension_semantics=("parallel",)),
    )(x, wq, bq.reshape(-1, 1), wk, bk.reshape(-1, 1), wv, bv.reshape(-1, 1))


def causal_conv1d(x, weight, bias, dilation, apply_relu=True):
    """weight-normed Conv1d(+pad)+Chomp(+ReLU): weight is torch layout (Cout, Cin, K)."""
    B, Cin, L = x.shape
    Cout, _, K = weight.shape
    pad = (K - 1) * dilation
    xp = jnp.pad(x, ((0, 0), (0, 0), (pad, 0)))                 # causal left pad (XLA, fuses upstream)
    w_knl = jnp.transpose(weight, (2, 0, 1))                     # (K, Cout, Cin)
    kern = functools.partial(_causal_conv_kernel, dilation=dilation, apply_relu=apply_relu)
    return pl.pallas_call(
        kern,
        out_shape=jax.ShapeDtypeStruct((B, Cout, L), x.dtype),
        grid=(B,),
        in_specs=[
            pl.BlockSpec((1, Cin, pad + L), lambda b: (b, 0, 0)),
            pl.BlockSpec((K, Cout, Cin), lambda b: (0, 0, 0)),
            pl.BlockSpec((Cout, 1), lambda b: (0, 0)),
        ],
        out_specs=pl.BlockSpec((1, Cout, L), lambda b: (b, 0, 0)),
        compiler_params=pltpu.CompilerParams(dimension_semantics=("parallel",)),
    )(xp, w_knl, bias.reshape(Cout, 1))


def decoder_linear(y, w, b):
    """decoder(y.transpose(1,2)): y (B, C, L), w (V, C), b (V,) -> (B, L, V)."""
    B, C, L = y.shape
    V = w.shape[0]
    return pl.pallas_call(
        _decoder_kernel,
        out_shape=jax.ShapeDtypeStruct((B, L, V), y.dtype),
        grid=(B,),
        in_specs=[
            pl.BlockSpec((1, C, L), lambda b: (b, 0, 0)),
            pl.BlockSpec((V, C), lambda b: (0, 0)),
            pl.BlockSpec((1, V), lambda b: (0, 0)),
        ],
        out_specs=pl.BlockSpec((1, L, V), lambda b: (b, 0, 0)),
        compiler_params=pltpu.CompilerParams(dimension_semantics=("parallel",)),
    )(y, w, b.reshape(1, V))


def fused_residual_relu(out, res, x=None, wx=None):
    """relu(out + res [+ wx * x]) with the channel-shared multiply fused (en_res path)."""
    B, C, T = out.shape
    n_big = 4 if x is not None else 3
    bt, ct, tt, vmem_limit = _choose_tiles(B, C, T, out.dtype.itemsize, n_big)
    grid = (pl.cdiv(B, bt), pl.cdiv(C, ct), pl.cdiv(T, tt))
    big = lambda: pl.BlockSpec((bt, ct, tt), lambda b, c, t: (b, c, t))
    cp_kwargs = dict(dimension_semantics=("parallel", "parallel", "parallel"))
    if vmem_limit is not None:
        cp_kwargs["vmem_limit_bytes"] = int(vmem_limit)
    if x is not None:
        kernel = _combine_en_res_kernel
        in_specs = [big(), big(), big(),
                    pl.BlockSpec((bt, 1, tt), lambda b, c, t: (b, 0, t))]
        args = (out, res, x, wx.astype(out.dtype))
    else:
        kernel = _combine_kernel
        in_specs = [big(), big()]
        args = (out, res)
    # No input_output_aliases: the caller keeps using its inputs, so aliasing would
    # force XLA to insert a defensive copy (an extra full HBM pass).
    return pl.pallas_call(
        kernel,
        out_shape=jax.ShapeDtypeStruct((B, C, T), out.dtype),
        grid=grid,
        in_specs=in_specs,
        out_specs=big(),
        compiler_params=pltpu.CompilerParams(**cp_kwargs),
    )(*args)


# ----------------------------------------------------------------------------
# Model: parameters, Pallas forward, pure-jnp reference
# ----------------------------------------------------------------------------
def _weight_norm(v, g):
    return g * v / jnp.sqrt(jnp.sum(v * v, axis=(1, 2), keepdims=True))


def init_tcanet_params(key, *, vocab, emb_size, num_channels, key_size,
                       kernel_size, num_sub_blocks):
    keys = iter(jax.random.split(key, 64))

    def nrm(shape, s):
        return (s * jax.random.normal(next(keys), shape)).astype(jnp.float32)

    params = {"embedding": nrm((vocab, emb_size), 0.3)}
    levels, in_ch = [], emb_size
    for i, out_ch in enumerate(num_channels):
        lvl = {
            "wq": nrm((key_size, in_ch), 0.25), "bq": nrm((key_size,), 0.05),
            "wk": nrm((key_size, in_ch), 0.25), "bk": nrm((key_size,), 0.05),
            "wv": nrm((in_ch, in_ch), 0.25), "bv": nrm((in_ch,), 0.05),
            "dilation": 2 ** i,
        }
        convs, c_in = [], in_ch
        for _ in range(num_sub_blocks):
            convs.append({"v": nrm((out_ch, c_in, kernel_size), 0.2),
                          "g": 1.0 + nrm((out_ch, 1, 1), 0.05),
                          "b": nrm((out_ch,), 0.05)})
            c_in = out_ch
        lvl["convs"] = convs
        lvl["downsample"] = (None if in_ch == out_ch else
                             {"w": nrm((out_ch, in_ch, 1), 0.2), "b": nrm((out_ch,), 0.05)})
        levels.append(lvl)
        in_ch = out_ch
    params["levels"] = levels
    params["decoder_w"] = nrm((vocab, num_channels[-1]), 0.2)
    params["decoder_b"] = jnp.zeros((vocab,), jnp.float32)
    return params


def _pallas_temporal_block(lvl, x, en_res):
    out_attn, attn_w, weight_x = attention_block(
        x, lvl["wq"], lvl["bq"], lvl["wk"], lvl["bk"], lvl["wv"], lvl["bv"])
    h = out_attn
    for cv in lvl["convs"]:
        w = _weight_norm(cv["v"], cv["g"])
        h = causal_conv1d(h, w, cv["b"], lvl["dilation"], apply_relu=True)
    if lvl["downsample"] is None:
        if en_res:
            return fused_residual_relu(h, x, x, weight_x), attn_w
        return fused_residual_relu(h, x), attn_w
    ds = lvl["downsample"]
    res = causal_conv1d(x, ds["w"], ds["b"], 1, apply_relu=False)
    if en_res:
        en_x = causal_conv1d(weight_x * x, ds["w"], ds["b"], 1, apply_relu=False)
        ones = jnp.ones((x.shape[0], 1, x.shape[2]), x.dtype)
        return fused_residual_relu(h, res, en_x, ones), attn_w
    return fused_residual_relu(h, res), attn_w


def tcanet_forward(params, tokens, *, en_res=True):
    # TODO(synk): embedding gather + eval-mode dropouts are kept in plain jnp (tiny, fuse in XLA).
    emb = jnp.take(params["embedding"], tokens, axis=0)          # (B, L, E)
    x = jnp.transpose(emb, (0, 2, 1))                            # (B, E, L)
    attn_ws = []
    for lvl in params["levels"]:
        x, aw = _pallas_temporal_block(lvl, x, en_res)
        attn_ws.append(aw)
    logits = decoder_linear(x, params["decoder_w"], params["decoder_b"])
    nl = len(attn_ws)
    return logits, [attn_ws[0], attn_ws[nl // 2], attn_ws[-1]]


# ---- pure-jnp reference (same params, same math) ----
def _ref_attention(x, wq, bq, wk, bk, wv, bv):
    L = x.shape[2]
    inp = jnp.transpose(x, (0, 2, 1))
    q = jnp.einsum("blc,kc->blk", inp, wq, precision=_HI) + bq
    k = jnp.einsum("blc,kc->blk", inp, wk, precision=_HI) + bk
    v = jnp.einsum("blc,vc->blv", inp, wv, precision=_HI) + bv
    temp = jnp.einsum("bjk,bik->bji", q, k, precision=_HI)
    mask = jnp.arange(L)[None, :] > jnp.arange(L)[:, None]
    temp = jnp.where(mask[None], jnp.float32(-1e30), temp)
    w = jax.nn.softmax(temp / math.sqrt(wq.shape[0]), axis=1)
    out = jnp.transpose(jnp.einsum("bji,biv->bjv", w, v, precision=_HI), (0, 2, 1))
    weight_x = jax.nn.softmax(jnp.sum(w, axis=2), axis=1)
    return out, w, weight_x


def _ref_conv(x, w, b, dilation):
    Cout, _, K = w.shape
    B, _, L = x.shape
    p = (K - 1) * dilation
    xp = jnp.pad(x, ((0, 0), (0, 0), (p, 0)))
    out = jnp.zeros((B, Cout, L), jnp.float32) + b[None, :, None]
    for i in range(K):
        start = p - (K - 1 - i) * dilation
        out = out + jnp.einsum("oc,bcl->bol", w[:, :, i], xp[:, :, start:start + L], precision=_HI)
    return out


def ref_tcanet_forward(params, tokens, *, en_res=True):
    emb = jnp.take(params["embedding"], tokens, axis=0)
    x = jnp.transpose(emb, (0, 2, 1))
    attn_ws = []
    for lvl in params["levels"]:
        out_attn, attn_w, weight_x = _ref_attention(
            x, lvl["wq"], lvl["bq"], lvl["wk"], lvl["bk"], lvl["wv"], lvl["bv"])
        h = out_attn
        for cv in lvl["convs"]:
            w = _weight_norm(cv["v"], cv["g"])
            h = jnp.maximum(_ref_conv(h, w, cv["b"], lvl["dilation"]), 0.0)
        if lvl["downsample"] is None:
            res, en_x = x, weight_x[:, None, :] * x
        else:
            ds = lvl["downsample"]
            res = _ref_conv(x, ds["w"], ds["b"], 1)
            en_x = _ref_conv(weight_x[:, None, :] * x, ds["w"], ds["b"], 1)
        x = jnp.maximum(h + res + en_x, 0.0) if en_res else jnp.maximum(h + res, 0.0)
        attn_ws.append(attn_w)
    logits = (jnp.einsum("bcl,vc->blv", x, params["decoder_w"], precision=_HI)
              + params["decoder_b"][None, None, :])
    nl = len(attn_ws)
    return logits, [attn_ws[0], attn_ws[nl // 2], attn_ws[-1]]


# ----------------------------------------------------------------------------
# Demo / correctness check
# ----------------------------------------------------------------------------
if __name__ == "__main__":
    root = jax.random.PRNGKey(0)
    k_par, k_tok, k_a, k_b, k_c, k_d = jax.random.split(root, 6)

    vocab, emb_size, key_size, kernel_size, num_sub_blocks = 50, 32, 16, 2, 2
    num_channels = [32, 32]
    batch, seq_len = 2, 8

    params = init_tcanet_params(k_par, vocab=vocab, emb_size=emb_size,
                                num_channels=num_channels, key_size=key_size,
                                kernel_size=kernel_size, num_sub_blocks=num_sub_blocks)
    tokens = jax.random.randint(k_tok, (batch, seq_len), 0, vocab)

    logits, attn_list = tcanet_forward(params, tokens, en_res=True)
    logits = jax.block_until_ready(logits)
    ref_logits, ref_attn = ref_tcanet_forward(params, tokens, en_res=True)

    assert logits.shape == (batch, seq_len, vocab) and logits.dtype == jnp.float32
    assert bool(jnp.allclose(logits, ref_logits, atol=1e-3, rtol=1e-3))
    for got_w, ref_w in zip(attn_list, ref_attn):
        assert bool(jnp.allclose(got_w, ref_w, atol=1e-4, rtol=1e-3))

    # Standalone multi-step-grid check of the fused residual / channel-shared-multiply kernel
    # (the stage the previous standalone dropout kernel covered, now fused).
    Bc, Cc, Tc = 4, 48, 1024
    o = jax.random.normal(k_a, (Bc, Cc, Tc), jnp.float32)
    r = jax.random.normal(k_b, (Bc, Cc, Tc), jnp.float32)
    xx = jax.random.normal(k_c, (Bc, Cc, Tc), jnp.float32)
    wxx = jax.random.uniform(k_d, (Bc, 1, Tc), jnp.float32)
    got = jax.block_until_ready(fused_residual_relu(o, r, xx, wxx))
    assert bool(jnp.allclose(got, jnp.maximum(o + r + wxx * xx, 0.0), atol=1e-5, rtol=1e-5))

    print("KERNEL_OK")
</pallas_src>

<mosaic_0001>
module attributes {stable_mosaic.version = 11 : i64} {
  func.func @_attention_kernel(%arg0: i32, %arg1: memref<1x32x8xf32, #tpu.memory_space<vmem>>, %arg2: memref<16x32xf32, #tpu.memory_space<vmem>>, %arg3: memref<16x1xf32, #tpu.memory_space<vmem>>, %arg4: memref<16x32xf32, #tpu.memory_space<vmem>>, %arg5: memref<16x1xf32, #tpu.memory_space<vmem>>, %arg6: memref<32x32xf32, #tpu.memory_space<vmem>>, %arg7: memref<32x1xf32, #tpu.memory_space<vmem>>, %arg8: memref<1x32x8xf32, #tpu.memory_space<vmem>>, %arg9: memref<1x8x8xf32, #tpu.memory_space<vmem>>, %arg10: memref<1x1x8xf32, #tpu.memory_space<vmem>>) attributes {dimension_semantics = [#tpu.dimension_semantics<parallel>], iteration_bounds = array<i64: 2>, scalar_prefetch = 0 : i64, scratch_operands = 0 : i64, tpu.core_type = #tpu.core_type<tc>, window_params = [{transform_indices = @transform_0, window_bounds = array<i64: 1, 32, 8>}, {pipeline_mode = #tpu.pipeline_mode<synchronous>, transform_indices = @transform_1, window_bounds = array<i64: 16, 32>}, {pipeline_mode = #tpu.pipeline_mode<synchronous>, transform_indices = @transform_2, window_bounds = array<i64: 16, 1>}, {pipeline_mode = #tpu.pipeline_mode<synchronous>, transform_indices = @transform_3, window_bounds = array<i64: 16, 32>}, {pipeline_mode = #tpu.pipeline_mode<synchronous>, transform_indices = @transform_4, window_bounds = array<i64: 16, 1>}, {pipeline_mode = #tpu.pipeline_mode<synchronous>, transform_indices = @transform_5, window_bounds = array<i64: 32, 32>}, {pipeline_mode = #tpu.pipeline_mode<synchronous>, transform_indices = @transform_6, window_bounds = array<i64: 32, 1>}, {transform_indices = @transform_7, window_bounds = array<i64: 1, 32, 8>}, {transform_indices = @transform_8, window_bounds = array<i64: 1, 8, 8>}, {transform_indices = @transform_9, window_bounds = array<i64: 1, 1, 8>}]} {
    %c0 = arith.constant 0 : index
    %c0_0 = arith.constant 0 : index
    %c0_1 = arith.constant 0 : index
    %0 = vector.load %arg1[%c0, %c0_0, %c0_1] : memref<1x32x8xf32, #tpu.memory_space<vmem>>, vector<1x32x8xf32>
    %1 = vector.shape_cast %0 : vector<1x32x8xf32> to vector<32x8xf32>
    %c0_2 = arith.constant 0 : index
    %c0_3 = arith.constant 0 : index
    %2 = vector.load %arg2[%c0_2, %c0_3] : memref<16x32xf32, #tpu.memory_space<vmem>>, vector<16x32xf32>
    %cst = arith.constant dense<0.000000e+00> : vector<16x8xf32>
    %3 = tpu.matmul %2, %1, %cst {dimension_numbers = #tpu.dot_dimension_numbers<[1], [0], [0], [1], [0, 0, 1, 1], [], []>, precision = #tpu.contract_precision<fp32>} : vector<16x32xf32>, vector<32x8xf32>, vector<16x8xf32> -> vector<16x8xf32>
    %c0_4 = arith.constant 0 : index
    %c0_5 = arith.constant 0 : index
    %4 = vector.load %arg3[%c0_4, %c0_5] : memref<16x1xf32, #tpu.memory_space<vmem>>, vector<16x1xf32>
    %5 = vector.broadcast %4 : vector<16x1xf32> to vector<16x8xf32>
    %6 = arith.addf %3, %5 : vector<16x8xf32>
    %c0_6 = arith.constant 0 : index
    %c0_7 = arith.constant 0 : index
    %7 = vector.load %arg4[%c0_6, %c0_7] : memref<16x32xf32, #tpu.memory_space<vmem>>, vector<16x32xf32>
    %cst_8 = arith.constant dense<0.000000e+00> : vector<16x8xf32>
    %8 = tpu.matmul %7, %1, %cst_8 {dimension_numbers = #tpu.dot_dimension_numbers<[1], [0], [0], [1], [0, 0, 1, 1], [], []>, precision = #tpu.contract_precision<fp32>} : vector<16x32xf32>, vector<32x8xf32>, vector<16x8xf32> -> vector<16x8xf32>
    %c0_9 = arith.constant 0 : index
    %c0_10 = arith.constant 0 : index
    %9 = vector.load %arg5[%c0_9, %c0_10] : memref<16x1xf32, #tpu.memory_space<vmem>>, vector<16x1xf32>
    %10 = vector.broadcast %9 : vector<16x1xf32> to vector<16x8xf32>
    %11 = arith.addf %8, %10 : vector<16x8xf32>
    %c0_11 = arith.constant 0 : index
    %c0_12 = arith.constant 0 : index
    %12 = vector.load %arg6[%c0_11, %c0_12] : memref<32x32xf32, #tpu.memory_space<vmem>>, vector<32x32xf32>
    %cst_13 = arith.constant dense<0.000000e+00> : vector<32x8xf32>
    %13 = tpu.matmul %12, %1, %cst_13 {dimension_numbers = #tpu.dot_dimension_numbers<[1], [0], [0], [1], [0, 0, 1, 1], [], []>, precision = #tpu.contract_precision<fp32>} : vector<32x32xf32>, vector<32x8xf32>, vector<32x8xf32> -> vector<32x8xf32>
    %c0_14 = arith.constant 0 : index
    %c0_15 = arith.constant 0 : index
    %14 = vector.load %arg7[%c0_14, %c0_15] : memref<32x1xf32, #tpu.memory_space<vmem>>, vector<32x1xf32>
    %15 = vector.broadcast %14 : vector<32x1xf32> to vector<32x8xf32>
    %16 = arith.addf %13, %15 : vector<32x8xf32>
    %17 = tpu.transpose %11, [1, 0] : vector<16x8xf32> -> vector<8x16xf32>
    %cst_16 = arith.constant dense<0.000000e+00> : vector<8x8xf32>
    %18 = tpu.matmul %17, %6, %cst_16 {dimension_numbers = #tpu.dot_dimension_numbers<[1], [0], [0], [1], [0, 0, 1, 1], [], []>, precision = #tpu.contract_precision<fp32>} : vector<8x16xf32>, vector<16x8xf32>, vector<8x8xf32> -> vector<8x8xf32>
    %cst_17 = arith.constant 4.000000e+00 : f32
    %19 = vector.broadcast %cst_17 : f32 to vector<8x8xf32>
    %20 = arith.divf %18, %19 : vector<8x8xf32>
    %21 = tpu.iota {dimensions = array<i32: 0>} : vector<8x8xi32>
    %22 = tpu.iota {dimensions = array<i32: 1>} : vector<8x8xi32>
    %23 = arith.cmpi sgt, %21, %22 : vector<8x8xi32>
    %cst_18 = arith.constant -1.000000e+30 : f32
    %24 = vector.broadcast %cst_18 : f32 to vector<8x8xf32>
    %25 = arith.select %23, %24, %20 : vector<8x8xi1>, vector<8x8xf32>
    %cst_19 = arith.constant dense<0xFF800000> : vector<8xf32>
    %26 = vector.multi_reduction <maximumf>, %25, %cst_19 [1] : vector<8x8xf32> to vector<8xf32>
    %27 = vector.shape_cast %26 : vector<8xf32> to vector<8x1xf32>
    %28 = vector.broadcast %27 : vector<8x1xf32> to vector<8x8xf32>
    %29 = arith.subf %25, %28 : vector<8x8xf32>
    %30 = math.exp %29 : vector<8x8xf32>
    %cst_20 = arith.constant dense<0.000000e+00> : vector<8xf32>
    %31 = vector.multi_reduction <add>, %30, %cst_20 [1] : vector<8x8xf32> to vector<8xf32>
    %32 = vector.shape_cast %31 : vector<8xf32> to vector<8x1xf32>
    %33 = vector.broadcast %32 : vector<8x1xf32> to vector<8x8xf32>
    %34 = arith.divf %30, %33 : vector<8x8xf32>
    %cst_21 = arith.constant dense<0.000000e+00> : vector<32x8xf32>
    %35 = tpu.matmul %16, %34, %cst_21 {dimension_numbers = #tpu.dot_dimension_numbers<[1], [0], [0], [1], [0, 0, 1, 1], [], []>, precision = #tpu.contract_precision<fp32>} : vector<32x8xf32>, vector<8x8xf32>, vector<32x8xf32> -> vector<32x8xf32>
    %c0_22 = arith.constant 0 : index
    %c0_23 = arith.constant 0 : index
    %c0_24 = arith.constant 0 : index
    %36 = vector.load %arg8[%c0_22, %c0_23, %c0_24] : memref<1x32x8xf32, #tpu.memory_space<vmem>>, vector<1x32x8xf32>
    %37 = vector.shape_cast %36 : vector<1x32x8xf32> to vector<32x8xf32>
    %38 = vector.shape_cast %35 : vector<32x8xf32> to vector<1x32x8xf32>
    tpu.vector_store %arg8[%c0_22, %c0_23, %c0_24], %38 {strides = array<i32>} : memref<1x32x8xf32, #tpu.memory_space<vmem>>, vector<1x32x8xf32>,
    %39 = tpu.transpose %34, [1, 0] : vector<8x8xf32> -> vector<8x8xf32>
    %c0_25 = arith.constant 0 : index
    %c0_26 = arith.constant 0 : index
    %c0_27 = arith.constant 0 : index
    %40 = vector.load %arg9[%c0_25, %c0_26, %c0_27] : memref<1x8x8xf32, #tpu.memory_space<vmem>>, vector<1x8x8xf32>
    %41 = vector.shape_cast %40 : vector<1x8x8xf32> to vector<8x8xf32>
    %42 = vector.shape_cast %39 : vector<8x8xf32> to vector<1x8x8xf32>
    tpu.vector_store %arg9[%c0_25, %c0_26, %c0_27], %42 {strides = array<i32>} : memref<1x8x8xf32, #tpu.memory_space<vmem>>, vector<1x8x8xf32>,
    %cst_28 = arith.constant dense<0.000000e+00> : vector<8xf32>
    %43 = vector.multi_reduction <add>, %34, %cst_28 [0] : vector<8x8xf32> to vector<8xf32>
    %44 = vector.shape_cast %43 : vector<8xf32> to vector<1x8xf32>
    %cst_29 = arith.constant dense<0xFF800000> : vector<1xf32>
    %45 = vector.multi_reduction <maximumf>, %44, %cst_29 [1] : vector<1x8xf32> to vector<1xf32>
    %46 = vector.shape_cast %45 : vector<1xf32> to vector<1x1xf32>
    %47 = vector.broadcast %46 : vector<1x1xf32> to vector<1x8xf32>
    %48 = arith.subf %44, %47 : vector<1x8xf32>
    %49 = math.exp %48 : vector<1x8xf32>
    %cst_30 = arith.constant dense<0.000000e+00> : vector<1xf32>
    %50 = vector.multi_reduction <add>, %49, %cst_30 [1] : vector<1x8xf32> to vector<1xf32>
    %51 = vector.shape_cast %50 : vector<1xf32> to vector<1x1xf32>
    %52 = vector.broadcast %51 : vector<1x1xf32> to vector<1x8xf32>
    %53 = arith.divf %49, %52 : vector<1x8xf32>
    %c0_31 = arith.constant 0 : index
    %c0_32 = arith.constant 0 : index
    %c0_33 = arith.constant 0 : index
    %54 = vector.load %arg10[%c0_31, %c0_32, %c0_33] : memref<1x1x8xf32, #tpu.memory_space<vmem>>, vector<1x1x8xf32>
    %55 = vector.shape_cast %54 : vector<1x1x8xf32> to vector<1x8xf32>
    %56 = vector.shape_cast %53 : vector<1x8xf32> to vector<1x1x8xf32>
    tpu.vector_store %arg10[%c0_31, %c0_32, %c0_33], %56 {strides = array<i32>} : memref<1x1x8xf32, #tpu.memory_space<vmem>>, vector<1x1x8xf32>,
    return
  }
  func.func @transform_0(%arg0: i32) -> (i32, i32, i32) {
    %c0_i32 = arith.constant 0 : i32
    %c0_i32_0 = arith.constant 0 : i32
    %c0_i32_1 = arith.constant 0 : i32
    return %arg0, %c0_i32, %c0_i32_0 : i32, i32, i32
  }
  func.func @transform_1(%arg0: i32) -> (i32, i32) {
    %c0_i32 = arith.constant 0 : i32
    %c0_i32_0 = arith.constant 0 : i32
    %c0_i32_1 = arith.constant 0 : i32
    return %c0_i32, %c0_i32_0 : i32, i32
  }
  func.func @transform_2(%arg0: i32) -> (i32, i32) {
    %c0_i32 = arith.constant 0 : i32
    %c0_i32_0 = arith.constant 0 : i32
    %c0_i32_1 = arith.constant 0 : i32
    return %c0_i32, %c0_i32_0 : i32, i32
  }
  func.func @transform_3(%arg0: i32) -> (i32, i32) {
    %c0_i32 = arith.constant 0 : i32
    %c0_i32_0 = arith.constant 0 : i32
    %c0_i32_1 = arith.constant 0 : i32
    return %c0_i32, %c0_i32_0 : i32, i32
  }
  func.func @transform_4(%arg0: i32) -> (i32, i32) {
    %c0_i32 = arith.constant 0 : i32
    %c0_i32_0 = arith.constant 0 : i32
    %c0_i32_1 = arith.constant 0 : i32
    return %c0_i32, %c0_i32_0 : i32, i32
  }
  func.func @transform_5(%arg0: i32) -> (i32, i32) {
    %c0_i32 = arith.constant 0 : i32
    %c0_i32_0 = arith.constant 0 : i32
    %c0_i32_1 = arith.constant 0 : i32
    return %c0_i32, %c0_i32_0 : i32, i32
  }
  func.func @transform_6(%arg0: i32) -> (i32, i32) {
    %c0_i32 = arith.constant 0 : i32
    %c0_i32_0 = arith.constant 0 : i32
    %c0_i32_1 = arith.constant 0 : i32
    return %c0_i32, %c0_i32_0 : i32, i32
  }
  func.func @transform_7(%arg0: i32) -> (i32, i32, i32) {
    %c0_i32 = arith.constant 0 : i32
    %c0_i32_0 = arith.constant 0 : i32
    %c0_i32_1 = arith.constant 0 : i32
    return %arg0, %c0_i32, %c0_i32_0 : i32, i32, i32
  }
  func.func @transform_8(%arg0: i32) -> (i32, i32, i32) {
    %c0_i32 = arith.constant 0 : i32
    %c0_i32_0 = arith.constant 0 : i32
    %c0_i32_1 = arith.constant 0 : i32
    return %arg0, %c0_i32, %c0_i32_0 : i32, i32, i32
  }
  func.func @transform_9(%arg0: i32) -> (i32, i32, i32) {
    %c0_i32 = arith.constant 0 : i32
    %c0_i32_0 = arith.constant 0 : i32
    %c0_i32_1 = arith.constant 0 : i32
    return %arg0, %c0_i32, %c0_i32_0 : i32, i32, i32
  }
}

</mosaic_0001>

<llo_original>
// kernel: tpu_custom_call.1
$region0: #{tpu_custom_call.1}
  #allocation0 [shape = 'u32[]', space=smem, size = 0x4, offset = 0x4, fixed_abs, tag = 'smem constant byte address 0x4 - core index']
  #allocation1 [shape = 'u32[144,128]{1,0:T(1,128)}', space=vmem, size = 0x12000, scoped, tag = 'internal scratch']
  %s0 = inlined_call_operand.vmem [shape: f32[2,32,8], index: 0, kind: input, shape index: {}]
  %s1 = inlined_call_operand.vmem [shape: f32[16,32], index: 1, kind: input, shape index: {}]
  %s2 = inlined_call_operand.vmem [shape: f32[16,1], index: 2, kind: input, shape index: {}]
  %s3 = inlined_call_operand.vmem [shape: f32[16,32], index: 3, kind: input, shape index: {}]
  %s4 = inlined_call_operand.vmem [shape: f32[16,1], index: 4, kind: input, shape index: {}]
  %s5 = inlined_call_operand.vmem [shape: f32[32,32], index: 5, kind: input, shape index: {}]
  %s6 = inlined_call_operand.vmem [shape: f32[32,1], index: 6, kind: input, shape index: {}]
  %s7 = inlined_call_operand.vmem [shape: f32[2,32,8], index: 7, kind: output, shape index: {0}]
  %s8 = inlined_call_operand.hbm [shape: f32[2,8,8], index: 8, kind: output, shape index: {1}]
  %s9 = inlined_call_operand.hbm [shape: f32[2,1,8], index: 9, kind: output, shape index: {2}]
  %10 = xla_tuple %s7, %s8, %s9
  %s11 = sld [smem:[#allocation0]]
  $region77: #{tpu_custom_call.1} parent=0
    _
  %s13 = ssub.s32 1, %s11
  %s14 = scalar_select 0, %s13, %s11
  $region1: #{tpu_custom_call.1} parent=0
    #allocation2 [shape = 'u8[8192]{0}', space=vmem, size = 0x2000, scoped, tag = 'output window, operand 1']
    #allocation3 [shape = 's32[2]{0}', space=sflag, size = 0x8, scoped, tag = 'scoped memory for tpu_custom_call.1']
    #allocation4 [shape = 'u8[1024]{0}', space=vmem, size = 0x400, scoped, tag = 'output window, operand 2']
    #allocation5 [shape = 's32[2]{0}', space=sflag, size = 0x8, scoped, tag = 'scoped memory for tpu_custom_call.1']
    %15 = vsyncpa [#allocation3], 0
    %s16 = scalar_lea.sflag [#allocation3], 1
    %17 = vsyncpa %s16, 0
    %18 = vsyncpa [#allocation5], 0
    %s19 = scalar_lea.sflag [#allocation5], 1
    %20 = vsyncpa %s19, 0
    loop: start=0, step=1, limit=4
    $region2: #{tpu_custom_call.1} parent=1 // loop_pre_header
      _
    $region3: #{tpu_custom_call.1} parent=1 // loop_header
      %s22 = sphi 0, %s26
      %p23 = scmp.ge.s32.totalorder %s22, 4
      %s32 = sphi 0, %s34
      %s35 = sphi 0, %s32
      %s36 = sphi 0, %s35
      %s52 = sphi 0, %s36
      %s56 = sphi 0, %s56
      %s58 = sphi 0, %s56
      %s59 = sphi 0, %s58
      %s73 = sphi 0, %s59
      %s77 = sphi 0, %s77
      %s79 = sphi 0, %s77
      %s80 = sphi 0, %s79
      %s94 = sphi 0, %s80
      %s98 = sphi 0, %s98
      %s100 = sphi 0, %s98
      %s101 = sphi 0, %s100
      %s115 = sphi 0, %s101
      %s119 = sphi 0, %s119
      %s121 = sphi 0, %s119
      %s122 = sphi 0, %s121
      %s136 = sphi 0, %s122
      %s140 = sphi 0, %s140
      %s142 = sphi 0, %s140
      %s143 = sphi 0, %s142
      %s157 = sphi 0, %s143
      %s161 = sphi 0, %s161
      %s163 = sphi 0, %s161
      %s164 = sphi 0, %s163
      %s178 = sphi 0, %s164
      %s184 = sphi 0, %s186
      %s187 = sphi 0, %s184
      %s188 = sphi 0, %s187
      %s204 = sphi 0, %s188
      %s210 = sphi 0, %s212
      %s213 = sphi 0, %s210
      %s214 = sphi 0, %s213
      %s230 = sphi 0, %s214
      %s236 = sphi 0, %s238
      %s239 = sphi 0, %s236
      %s240 = sphi 0, %s239
      %s256 = sphi 0, %s240
    $region4: #{tpu_custom_call.1} parent=1 // loop_header_branch
      %25 = sbr.rel (%p23) target = $region8
    $region5: #{tpu_custom_call.1} parent=1 // loop_body
      %s27 = ssub.s32 %s22, 1
      %s28 = ssub.s32 %s22, 2
      %s29 = sadd.s32 %s22, 1
      %s30 = ssub.s32 %s22, %s29
      %p31 = scmp.eq.s32.totalorder %s30, 0
      %s33 = sadd.s32 %s32, 1
      %s34 = scalar_select %p31, %s32, %s33
      %p37 = pneg %p31
      %p38 = scmp.eq.s32.totalorder %s22, 1
      %p39 = por %p37, %p38
      %p40 = scmp.ne.s32.totalorder %s32, %s35
      %p41 = scmp.eq.s32.totalorder %s22, 0
      %p42 = por %p40, %p41
      %p43 = scmp.ne.s32.totalorder %s32, %s35
      %p44 = scmp.eq.s32.totalorder %s27, 1
      %p45 = por %p43, %p44
      %p46 = scmp.ne.s32.totalorder %s35, %s36
      %p47 = scmp.eq.s32.totalorder %s27, 0
      %p48 = por %p46, %p47
      %p49 = scmp.ne.s32.totalorder %s35, %s36
      %p50 = scmp.eq.s32.totalorder %s28, 1
      %p51 = por %p49, %p50
      %p53 = scmp.ne.s32.totalorder %s36, %s52
      %p54 = scmp.eq.s32.totalorder %s28, 0
      %p55 = por %p53, %p54
      %s57 = sadd.s32 %s56, 1
      %p60 = scmp.eq.s32.totalorder %s22, 1
      %p61 = scmp.ne.s32.totalorder %s56, %s58
      %p62 = scmp.eq.s32.totalorder %s22, 0
      %p63 = por %p61, %p62
      %p64 = scmp.ne.s32.totalorder %s56, %s58
      %p65 = scmp.eq.s32.totalorder %s27, 1
      %p66 = por %p64, %p65
      %p67 = scmp.ne.s32.totalorder %s58, %s59
      %p68 = scmp.eq.s32.totalorder %s27, 0
      %p69 = por %p67, %p68
      %p70 = scmp.ne.s32.totalorder %s58, %s59
      %p71 = scmp.eq.s32.totalorder %s28, 1
      %p72 = por %p70, %p71
      %p74 = scmp.ne.s32.totalorder %s59, %s73
      %p75 = scmp.eq.s32.totalorder %s28, 0
      %p76 = por %p74, %p75
      %s78 = sadd.s32 %s77, 1
      %p81 = scmp.eq.s32.totalorder %s22, 1
      %p82 = scmp.ne.s32.totalorder %s77, %s79
      %p83 = scmp.eq.s32.totalorder %s22, 0
      %p84 = por %p82, %p83
      %p85 = scmp.ne.s32.totalorder %s77, %s79
      %p86 = scmp.eq.s32.totalorder %s27, 1
      %p87 = por %p85, %p86
      %p88 = scmp.ne.s32.totalorder %s79, %s80
      %p89 = scmp.eq.s32.totalorder %s27, 0
      %p90 = por %p88, %p89
      %p91 = scmp.ne.s32.totalorder %s79, %s80
      %p92 = scmp.eq.s32.totalorder %s28, 1
      %p93 = por %p91, %p92
      %p95 = scmp.ne.s32.totalorder %s80, %s94
      %p96 = scmp.eq.s32.totalorder %s28, 0
      %p97 = por %p95, %p96
      %s99 = sadd.s32 %s98, 1
      %p102 = scmp.eq.s32.totalorder %s22, 1
      %p103 = scmp.ne.s32.totalorder %s98, %s100
      %p104 = scmp.eq.s32.totalorder %s22, 0
      %p105 = por %p103, %p104
      %p106 = scmp.ne.s32.totalorder %s98, %s100
      %p107 = scmp.eq.s32.totalorder %s27, 1
      %p108 = por %p106, %p107
      %p109 = scmp.ne.s32.totalorder %s100, %s101
      %p110 = scmp.eq.s32.totalorder %s27, 0
      %p111 = por %p109, %p110
      %p112 = scmp.ne.s32.totalorder %s100, %s101
      %p113 = scmp.eq.s32.totalorder %s28, 1
      %p114 = por %p112, %p113
      %p116 = scmp.ne.s32.totalorder %s101, %s115
      %p117 = scmp.eq.s32.totalorder %s28, 0
      %p118 = por %p116, %p117
      %s120 = sadd.s32 %s119, 1
      %p123 = scmp.eq.s32.totalorder %s22, 1
      %p124 = scmp.ne.s32.totalorder %s119, %s121
      %p125 = scmp.eq.s32.totalorder %s22, 0
      %p126 = por %p124, %p125
      %p127 = scmp.ne.s32.totalorder %s119, %s121
      %p128 = scmp.eq.s32.totalorder %s27, 1
      %p129 = por %p127, %p128
      %p130 = scmp.ne.s32.totalorder %s121, %s122
      %p131 = scmp.eq.s32.totalorder %s27, 0
      %p132 = por %p130, %p131
      %p133 = scmp.ne.s32.totalorder %s121, %s122
      %p134 = scmp.eq.s32.totalorder %s28, 1
      %p135 = por %p133, %p134
      %p137 = scmp.ne.s32.totalorder %s122, %s136
      %p138 = scmp.eq.s32.totalorder %s28, 0
      %p139 = por %p137, %p138
      %s141 = sadd.s32 %s140, 1
      %p144 = scmp.eq.s32.totalorder %s22, 1
      %p145 = scmp.ne.s32.totalorder %s140, %s142
      %p146 = scmp.eq.s32.totalorder %s22, 0
      %p147 = por %p145, %p146
      %p148 = scmp.ne.s32.totalorder %s140, %s142
      %p149 = scmp.eq.s32.totalorder %s27, 1
      %p150 = por %p148, %p149
      %p151 = scmp.ne.s32.totalorder %s142, %s143
      %p152 = scmp.eq.s32.totalorder %s27, 0
      %p153 = por %p151, %p152
      %p154 = scmp.ne.s32.totalorder %s142, %s143
      %p155 = scmp.eq.s32.totalorder %s28, 1
      %p156 = por %p154, %p155
      %p158 = scmp.ne.s32.totalorder %s143, %s157
      %p159 = scmp.eq.s32.totalorder %s28, 0
      %p160 = por %p158, %p159
      %s162 = sadd.s32 %s161, 1
      %p165 = scmp.eq.s32.totalorder %s22, 1
      %p166 = scmp.ne.s32.totalorder %s161, %s163
      %p167 = scmp.eq.s32.totalorder %s22, 0
      %p168 = por %p166, %p167
      %p169 = scmp.ne.s32.totalorder %s161, %s163
      %p170 = scmp.eq.s32.totalorder %s27, 1
      %p171 = por %p169, %p170
      %p172 = scmp.ne.s32.totalorder %s163, %s164
      %p173 = scmp.eq.s32.totalorder %s27, 0
      %p174 = por %p172, %p173
      %p175 = scmp.ne.s32.totalorder %s163, %s164
      %p176 = scmp.eq.s32.totalorder %s28, 1
      %p177 = por %p175, %p176
      %p179 = scmp.ne.s32.totalorder %s164, %s178
      %p180 = scmp.eq.s32.totalorder %s28, 0
      %p181 = por %p179, %p180
      %s182 = ssub.s32 %s22, %s29
      %p183 = scmp.eq.s32.totalorder %s182, 0
      %s185 = sadd.s32 %s184, 1
      %s186 = scalar_select %p183, %s184, %s185
      %p189 = pneg %p183
      %p190 = scmp.eq.s32.totalorder %s22, 1
      %p191 = por %p189, %p190
      %p192 = scmp.ne.s32.totalorder %s184, %s187
      %p193 = scmp.eq.s32.totalorder %s22, 0
      %p194 = por %p192, %p193
      %p195 = scmp.ne.s32.totalorder %s184, %s187
      %p196 = scmp.eq.s32.totalorder %s27, 1
      %p197 = por %p195, %p196
      %p198 = scmp.ne.s32.totalorder %s187, %s188
      %p199 = scmp.eq.s32.totalorder %s27, 0
      %p200 = por %p198, %p199
      %p201 = scmp.ne.s32.totalorder %s187, %s188
      %p202 = scmp.eq.s32.totalorder %s28, 1
      %p203 = por %p201, %p202
      %p205 = scmp.ne.s32.totalorder %s188, %s204
      %p206 = scmp.eq.s32.totalorder %s28, 0
      %p207 = por %p205, %p206
      %s208 = ssub.s32 %s22, %s29
      %p209 = scmp.eq.s32.totalorder %s208, 0
      %s211 = sadd.s32 %s210, 1
      %s212 = scalar_select %p209, %s210, %s211
      %p215 = pneg %p209
      %p216 = scmp.eq.s32.totalorder %s22, 1
      %p217 = por %p215, %p216
      %p218 = scmp.ne.s32.totalorder %s210, %s213
      %p219 = scmp.eq.s32.totalorder %s22, 0
      %p220 = por %p218, %p219
      %p221 = scmp.ne.s32.totalorder %s210, %s213
      %p222 = scmp.eq.s32.totalorder %s27, 1
      %p223 = por %p221, %p222
      %p224 = scmp.ne.s32.totalorder %s213, %s214
      %p225 = scmp.eq.s32.totalorder %s27, 0
      %p226 = por %p224, %p225
      %p227 = scmp.ne.s32.totalorder %s213, %s214
      %p228 = scmp.eq.s32.totalorder %s28, 1
      %p229 = por %p227, %p228
      %p231 = scmp.ne.s32.totalorder %s214, %s230
      %p232 = scmp.eq.s32.totalorder %s28, 0
      %p233 = por %p231, %p232
      %s234 = ssub.s32 %s22, %s29
      %p235 = scmp.eq.s32.totalorder %s234, 0
      %s237 = sadd.s32 %s236, 1
      %s238 = scalar_select %p235, %s236, %s237
      %p241 = pneg %p235
      %p242 = scmp.eq.s32.totalorder %s22, 1
      %p243 = por %p241, %p242
      %p244 = scmp.ne.s32.totalorder %s236, %s239
      %p245 = scmp.eq.s32.totalorder %s22, 0
      %p246 = por %p244, %p245
      %p247 = scmp.ne.s32.totalorder %s236, %s239
      %p248 = scmp.eq.s32.totalorder %s27, 1
      %p249 = por %p247, %p248
      %p250 = scmp.ne.s32.totalorder %s239, %s240
      %p251 = scmp.eq.s32.totalorder %s27, 0
      %p252 = por %p250, %p251
      %p253 = scmp.ne.s32.totalorder %s239, %s240
      %p254 = scmp.eq.s32.totalorder %s28, 1
      %p255 = por %p253, %p254
      %p257 = scmp.ne.s32.totalorder %s240, %s256
      %p258 = scmp.eq.s32.totalorder %s28, 0
      %p259 = por %p257, %p258
      %p260 = scmp.le.s32.totalorder 1, %s22
      %p261 = scmp.lt.s32.totalorder %s22, 3
      %p262 = pnand %p260, %p261
      %p263 = pneg %p262
      // Predicated region
      $region9: #{tpu_custom_call.1} parent=5 // pred_check
        _
      $region10: #{tpu_custom_call.1} parent=5 // pred_check_branch
        %265 = sbr.rel (%p262) target = $region12
      $region11: #{tpu_custom_call.1} parent=5 // pred_region
        %s266 = ssub.s32 %s22, 1
        // Predicated region
        $region13: #{tpu_custom_call.1} parent=11 // pred_check
          %p267 = pneg %p69
        $region14: #{tpu_custom_call.1} parent=11 // pred_check_branch
          %269 = sbr.rel (%p267) target = $region16
        $region15: #{tpu_custom_call.1} parent=11 // pred_region
          _
        $region16: #{tpu_custom_call.1} parent=11 // pred_fallthru
          _
        // Predicated region
        $region17: #{tpu_custom_call.1} parent=11 // pred_check
          %p270 = pneg %p90
        $region18: #{tpu_custom_call.1} parent=11 // pred_check_branch
          %272 = sbr.rel (%p270) target = $region20
        $region19: #{tpu_custom_call.1} parent=11 // pred_region
          _
        $region20: #{tpu_custom_call.1} parent=11 // pred_fallthru
          _
        // Predicated region
        $region21: #{tpu_custom_call.1} parent=11 // pred_check
          %p273 = pneg %p111
        $region22: #{tpu_custom_call.1} parent=11 // pred_check_branch
          %275 = sbr.rel (%p273) target = $region24
        $region23: #{tpu_custom_call.1} parent=11 // pred_region
          _
        $region24: #{tpu_custom_call.1} parent=11 // pred_fallthru
          _
        // Predicated region
        $region25: #{tpu_custom_call.1} parent=11 // pred_check
          %p276 = pneg %p132
        $region26: #{tpu_custom_call.1} parent=11 // pred_check_branch
          %278 = sbr.rel (%p276) target = $region28
        $region27: #{tpu_custom_call.1} parent=11 // pred_region
          _
        $region28: #{tpu_custom_call.1} parent=11 // pred_fallthru
          _
        // Predicated region
        $region29: #{tpu_custom_call.1} parent=11 // pred_check
          %p279 = pneg %p153
        $region30: #{tpu_custom_call.1} parent=11 // pred_check_branch
          %281 = sbr.rel (%p279) target = $region32
        $region31: #{tpu_custom_call.1} parent=11 // pred_region
          _
        $region32: #{tpu_custom_call.1} parent=11 // pred_fallthru
          _
        // Predicated region
        $region33: #{tpu_custom_call.1} parent=11 // pred_check
          %p282 = pneg %p174
        $region34: #{tpu_custom_call.1} parent=11 // pred_check_branch
          %284 = sbr.rel (%p282) target = $region36
        $region35: #{tpu_custom_call.1} parent=11 // pred_region
          _
        $region36: #{tpu_custom_call.1} parent=11 // pred_fallthru
          _
      $region12: #{tpu_custom_call.1} parent=5 // pred_fallthru
        _
      %p285 = scmp.lt.s32.totalorder %s22, 2
      // Predicated region
      $region37: #{tpu_custom_call.1} parent=5 // pred_check
        %p286 = pneg %p285
      $region38: #{tpu_custom_call.1} parent=5 // pred_check_branch
        %288 = sbr.rel (%p286) target = $region40
      $region39: #{tpu_custom_call.1} parent=5 // pred_region
        // Predicated region
        $region41: #{tpu_custom_call.1} parent=39 // pred_check
          %p289 = pneg %p42
        $region42: #{tpu_custom_call.1} parent=39 // pred_check_branch
          %291 = sbr.rel (%p289) target = $region44
        $region43: #{tpu_custom_call.1} parent=39 // pred_region
          %p292 = scmp.lt.s32.totalorder %s22, 1
          %s293 = scalar_select %p292, %s22, 1
          %s294 = smul.addr %s293, 4
          %s295 = smul.addr %s294, 8
          %s296 = scalar_lea.vmem %s0, %s295
        $region44: #{tpu_custom_call.1} parent=39 // pred_fallthru
          _
      $region40: #{tpu_custom_call.1} parent=5 // pred_fallthru
        _
      %p297 = scmp.le.s32.totalorder 1, %s22
      %p298 = scmp.lt.s32.totalorder %s22, 3
      %p299 = pnand %p297, %p298
      %p300 = pneg %p299
      // Predicated region
      $region45: #{tpu_custom_call.1} parent=5 // pred_check
        _
      $region46: #{tpu_custom_call.1} parent=5 // pred_check_branch
        %302 = sbr.rel (%p299) target = $region48
      $region47: #{tpu_custom_call.1} parent=5 // pred_region
        %s303 = ssub.s32 %s22, 1
        %p304 = scmp.lt.s32.totalorder %s27, 1
        %s305 = scalar_select %p304, %s27, 1
        %s306 = smul.addr %s305, 4
        %s307 = smul.addr %s306, 8
        %s308 = scalar_lea.vmem %s0, %s307
        %p309 = pneg %p48
        %p310 = pneg %p45
        %p311 = pneg %p69
        %p312 = pneg %p66
        %p313 = pneg %p90
        %p314 = pneg %p87
        %p315 = pneg %p111
        %p316 = pneg %p108
        %p317 = pneg %p132
        %p318 = pneg %p129
        %p319 = pneg %p153
        %p320 = pneg %p150
        %p321 = pneg %p174
        %p322 = pneg %p171
        %p323 = pneg %p200
        %p324 = pneg %p197
        %p325 = scmp.lt.s32.totalorder %s27, 1
        %s326 = scalar_select %p325, %s27, 1
        %s327 = smul.addr %s326, 4
        %s328 = smul.addr %s327, 8
        %s329 = scalar_lea.vmem %s7, %s328
        %p330 = pneg %p226
        %p331 = pneg %p223
        %s332 = sand.u32 %s213, 1
        %s333 = scalar_lea.sflag [#allocation3], %s332
        %s334 = sand.u32 %s213, 1
        %s335 = smul.addr %s334, 8
        %s336 = scalar_lea.vmem [#allocation2], %s335
        %p337 = pneg %p252
        %p338 = pneg %p249
        %s339 = sand.u32 %s239, 1
        %s340 = scalar_lea.sflag [#allocation5], %s339
        %s341 = sand.u32 %s239, 1
        %s342 = scalar_lea.vmem [#allocation4], %s341
        %p343 = scmp.lt.s32.totalorder %s27, 1
        %s344 = scalar_select %p343, %s27, 1
        %s345 = smul.addr %s344, 4
        %s346 = smul.addr %s345, 8
        %s347 = scalar_lea.vmem %s0, %s346
        %p348 = scmp.lt.s32.totalorder %s27, 1
        %s349 = scalar_select %p348, %s27, 1
        %s350 = smul.addr %s349, 4
        %s351 = smul.addr %s350, 8
        %s352 = scalar_lea.vmem %s7, %s351
        %v353 = vld [vmem:[%s347] sm:$0xff]
        %v354 = vld [vmem:[%s347 + $0x8] sm:$0xff]
        %v355 = vld [vmem:[%s347 + $0x10] sm:$0xff]
        %v356 = vld [vmem:[%s347 + $0x18] sm:$0xff]
        %v357 = vld [vmem:[%s1] sm:$0xff]
        %v358 = vld [vmem:[%s1 + $0x8] sm:$0xff]
        %v359 = vld [vmem:[%s2] sm:$0xff]
        %v360 = vld [vmem:[%s2 + $0x8] sm:$0xff]
        %362 = vset.pattern.permute.xlu0 0
        %363 = vperm.xlu0 %362, %v359
        %v364 = vpop.permute.xlu0 %363
        %367 = vset.pattern.permute.xlu0 0
        %368 = vperm.xlu0 %367, %v360
        %v369 = vpop.permute.xlu0 %368
        %vm371 = vcmask 261120
        %v373 = vsel %vm371, %v357, 0
        %v376 = vsel %vm371, %v358, 0
        %378 = vmatprep.subr.mxu0 0.0
        %379 = vmatpush1.msra.mxu0 0.0
        %380 = vmatprep.subr.mxu0 0.0
        %381 = vmatpush1.msra.mxu0 0.0
        %382 = vmatprep.subr.mxu0 0.0
        %383 = vmatpush1.msra.mxu0 0.0
        %384 = vmatprep.subr.mxu0 0.0
        %385 = vmatpush1.msra.mxu0 0.0
        %386 = vmatprep.subr.mxu0 0.0
        %387 = vmatpush1.msra.mxu0 0.0
        %388 = vmatprep.subr.mxu0 0.0
        %389 = vmatpush1.msra.mxu0 0.0
        %390 = vmatprep.subr.mxu0 0.0
        %391 = vmatpush1.msra.mxu0 0.0
        %392 = vmatprep.subr.mxu0 0.0
        %393 = vmatpush1.msra.mxu0 0.0
        %394 = vmatprep.subr.mxu0 0.0
        %395 = vmatpush1.msra.mxu0 0.0
        %396 = vmatprep.subr.mxu0 0.0
        %397 = vmatpush1.msra.mxu0 0.0
        %398 = vmatprep.subr.mxu0 0.0
        %399 = vmatpush1.msra.mxu0 0.0
        %400 = vmatprep.subr.mxu0 0.0
        %401 = vmatpush1.msra.mxu0 0.0
        %402 = vmatprep.subr.mxu0 0.0
        %v403 = vand.u32 %v356, 4294901760
        %404 = vmatpush1.msra.mxu0 %v403
        %405 = vmatprep.subr.mxu0 0.0
        %v406 = vand.u32 %v355, 4294901760
        %407 = vmatpush1.msra.mxu0 %v406
        %408 = vmatprep.subr.mxu0 0.0
        %v409 = vand.u32 %v354, 4294901760
        %410 = vmatpush1.msra.mxu0 %v409
        %411 = vmatprep.subr.mxu0 0.0
        %v412 = vand.u32 %v353, 4294901760
        %413 = vmatpush1.msra.mxu0 %v412
        %414 = vmatprep.subr.mxu0 0.0
        %415 = vmatpush2.msra.mxu0 0.0
        %416 = vmatprep.subr.mxu0 0.0
        %417 = vmatpush2.msra.mxu0 0.0
        %418 = vmatprep.subr.mxu0 0.0
        %419 = vmatpush2.msra.mxu0 0.0
        %420 = vmatprep.subr.mxu0 0.0
        %421 = vmatpush2.msra.mxu0 0.0
        %422 = vmatprep.subr.mxu0 0.0
        %423 = vmatpush2.msra.mxu0 0.0
        %424 = vmatprep.subr.mxu0 0.0
        %425 = vmatpush2.msra.mxu0 0.0
        %426 = vmatprep.subr.mxu0 0.0
        %427 = vmatpush2.msra.mxu0 0.0
        %428 = vmatprep.subr.mxu0 0.0
        %429 = vmatpush2.msra.mxu0 0.0
        %430 = vmatprep.subr.mxu0 0.0
        %431 = vmatpush2.msra.mxu0 0.0
        %432 = vmatprep.subr.mxu0 0.0
        %433 = vmatpush2.msra.mxu0 0.0
        %434 = vmatprep.subr.mxu0 0.0
        %435 = vmatpush2.msra.mxu0 0.0
        %436 = vmatprep.subr.mxu0 0.0
        %437 = vmatpush2.msra.mxu0 0.0
        %438 = vmatprep.subr.mxu0 0.0
        %439 = vmatpush2.msra.mxu0 0.0
        %440 = vmatprep.subr.mxu0 0.0
        %441 = vmatpush2.msra.mxu0 0.0
        %442 = vmatprep.subr.mxu0 0.0
        %443 = vmatpush2.msra.mxu0 0.0
        %444 = vmatprep.subr.mxu0 0.0
        %445 = vmatpush2.msra.mxu0 0.0
        %446 = vmatprep.mubr.f32.mxu0 0.0
        %v447 = vand.u32 %v373, 4294901760
        %v448 = vsub.f32 %v373, %v447
        %v449 = vand.u32 %v448, 4294901760
        %v450 = vsub.f32 %v448, %v449
        %v451 = vand.u32 %v450, 4294901760
        %452 = vmatmul.mubr.f32.gmra.mxu0 %v451
        %v453 = vpop.f32.mrf.mxu0
        %v454 = vadd.f32 %v364, %v453
        %v455 = vpop.f32.mrf.mxu0
        %456 = vmatprep.mubr.f32.mxu0 0.0
        %v457 = vand.u32 %v376, 4294901760
        %v458 = vsub.f32 %v376, %v457
        %v459 = vand.u32 %v458, 4294901760
        %v460 = vsub.f32 %v458, %v459
        %v461 = vand.u32 %v460, 4294901760
        %462 = vmatmul.mubr.f32.gmra.mxu0 %v461
        %v463 = vpop.f32.mrf.mxu0
        %v464 = vadd.f32 %v369, %v463
        %v465 = vpop.f32.mrf.mxu0
        %466 = vdwg.mxu0
        %467 = vmatprep.subr.mxu0 0.0
        %468 = vmatpush1.msra.mxu0 0.0
        %469 = vmatprep.subr.mxu0 0.0
        %470 = vmatpush1.msra.mxu0 0.0
        %471 = vmatprep.subr.mxu0 0.0
        %472 = vmatpush1.msra.mxu0 0.0
        %473 = vmatprep.subr.mxu0 0.0
        %474 = vmatpush1.msra.mxu0 0.0
        %475 = vmatprep.subr.mxu0 0.0
        %476 = vmatpush1.msra.mxu0 0.0
        %477 = vmatprep.subr.mxu0 0.0
        %478 = vmatpush1.msra.mxu0 0.0
        %479 = vmatprep.subr.mxu0 0.0
        %480 = vmatpush1.msra.mxu0 0.0
        %481 = vmatprep.subr.mxu0 0.0
        %482 = vmatpush1.msra.mxu0 0.0
        %483 = vmatprep.subr.mxu0 0.0
        %484 = vmatpush1.msra.mxu0 0.0
        %485 = vmatprep.subr.mxu0 0.0
        %486 = vmatpush1.msra.mxu0 0.0
        %487 = vmatprep.subr.mxu0 0.0
        %488 = vmatpush1.msra.mxu0 0.0
        %489 = vmatprep.subr.mxu0 0.0
        %490 = vmatpush1.msra.mxu0 0.0
        %491 = vmatprep.subr.mxu0 0.0
        %v492 = vand.u32 %v356, 4294901760
        %v493 = vsub.f32 %v356, %v492
        %v494 = vand.u32 %v493, 4294901760
        %v495 = vsub.f32 %v493, %v494
        %v496 = vand.u32 %v495, 4294901760
        %497 = vmatpush1.msra.mxu0 %v496
        %498 = vmatprep.subr.mxu0 0.0
        %v499 = vand.u32 %v355, 4294901760
        %v500 = vsub.f32 %v355, %v499
        %v501 = vand.u32 %v500, 4294901760
        %v502 = vsub.f32 %v500, %v501
        %v503 = vand.u32 %v502, 4294901760
        %504 = vmatpush1.msra.mxu0 %v503
        %505 = vmatprep.subr.mxu0 0.0
        %v506 = vand.u32 %v354, 4294901760
        %v507 = vsub.f32 %v354, %v506
        %v508 = vand.u32 %v507, 4294901760
        %v509 = vsub.f32 %v507, %v508
        %v510 = vand.u32 %v509, 4294901760
        %511 = vmatpush1.msra.mxu0 %v510
        %512 = vmatprep.subr.mxu0 0.0
        %v513 = vand.u32 %v353, 4294901760
        %v514 = vsub.f32 %v353, %v513
        %v515 = vand.u32 %v514, 4294901760
        %v516 = vsub.f32 %v514, %v515
        %v517 = vand.u32 %v516, 4294901760
        %518 = vmatpush1.msra.mxu0 %v517
        %519 = vmatprep.subr.mxu0 0.0
        %520 = vmatpush2.msra.mxu0 0.0
        %521 = vmatprep.subr.mxu0 0.0
        %522 = vmatpush2.msra.mxu0 0.0
        %523 = vmatprep.subr.mxu0 0.0
        %524 = vmatpush2.msra.mxu0 0.0
        %525 = vmatprep.subr.mxu0 0.0
        %526 = vmatpush2.msra.mxu0 0.0
        %527 = vmatprep.subr.mxu0 0.0
        %528 = vmatpush2.msra.mxu0 0.0
        %529 = vmatprep.subr.mxu0 0.0
        %530 = vmatpush2.msra.mxu0 0.0
        %531 = vmatprep.subr.mxu0 0.0
        %532 = vmatpush2.msra.mxu0 0.0
        %533 = vmatprep.subr.mxu0 0.0
        %534 = vmatpush2.msra.mxu0 0.0
        %535 = vmatprep.subr.mxu0 0.0
        %536 = vmatpush2.msra.mxu0 0.0
        %537 = vmatprep.subr.mxu0 0.0
        %538 = vmatpush2.msra.mxu0 0.0
        %539 = vmatprep.subr.mxu0 0.0
        %540 = vmatpush2.msra.mxu0 0.0
        %541 = vmatprep.subr.mxu0 0.0
        %542 = vmatpush2.msra.mxu0 0.0
        %543 = vmatprep.subr.mxu0 0.0
        %544 = vmatpush2.msra.mxu0 0.0
        %545 = vmatprep.subr.mxu0 0.0
        %546 = vmatpush2.msra.mxu0 0.0
        %547 = vmatprep.subr.mxu0 0.0
        %548 = vmatpush2.msra.mxu0 0.0
        %549 = vmatprep.subr.mxu0 0.0
        %550 = vmatpush2.msra.mxu0 0.0
        %551 = vmatprep.mubr.f32.mxu0 0.0
        %v552 = vand.u32 %v373, 4294901760
        %553 = vmatmul.mubr.f32.gmra.mxu0 %v552
        %v554 = vpop.f32.mrf.mxu0
        %v555 = vadd.f32 %v454, %v554
        %v556 = vpop.f32.mrf.mxu0
        %557 = vmatprep.mubr.f32.mxu0 0.0
        %v558 = vand.u32 %v376, 4294901760
        %559 = vmatmul.mubr.f32.gmra.mxu0 %v558
        %v560 = vpop.f32.mrf.mxu0
        %v561 = vadd.f32 %v464, %v560
        %v562 = vpop.f32.mrf.mxu0
        %563 = vdwg.mxu0
        %564 = vmatprep.subr.mxu0 0.0
        %565 = vmatpush1.msra.mxu0 0.0
        %566 = vmatprep.subr.mxu0 0.0
        %567 = vmatpush1.msra.mxu0 0.0
        %568 = vmatprep.subr.mxu0 0.0
        %569 = vmatpush1.msra.mxu0 0.0
        %570 = vmatprep.subr.mxu0 0.0
        %571 = vmatpush1.msra.mxu0 0.0
        %572 = vmatprep.subr.mxu0 0.0
        %573 = vmatpush1.msra.mxu0 0.0
        %574 = vmatprep.subr.mxu0 0.0
        %575 = vmatpush1.msra.mxu0 0.0
        %576 = vmatprep.subr.mxu0 0.0
        %577 = vmatpush1.msra.mxu0 0.0
        %578 = vmatprep.subr.mxu0 0.0
        %579 = vmatpush1.msra.mxu0 0.0
        %580 = vmatprep.subr.mxu0 0.0
        %581 = vmatpush1.msra.mxu0 0.0
        %582 = vmatprep.subr.mxu0 0.0
        %583 = vmatpush1.msra.mxu0 0.0
        %584 = vmatprep.subr.mxu0 0.0
        %585 = vmatpush1.msra.mxu0 0.0
        %586 = vmatprep.subr.mxu0 0.0
        %587 = vmatpush1.msra.mxu0 0.0
        %588 = vmatprep.subr.mxu0 0.0
        %v589 = vand.u32 %v356, 4294901760
        %v590 = vsub.f32 %v356, %v589
        %591 = vmatpush1.msra.mxu0 %v590
        %592 = vmatprep.subr.mxu0 0.0
        %v593 = vand.u32 %v355, 4294901760
        %v594 = vsub.f32 %v355, %v593
        %595 = vmatpush1.msra.mxu0 %v594
        %596 = vmatprep.subr.mxu0 0.0
        %v597 = vand.u32 %v354, 4294901760
        %v598 = vsub.f32 %v354, %v597
        %599 = vmatpush1.msra.mxu0 %v598
        %600 = vmatprep.subr.mxu0 0.0
        %v601 = vand.u32 %v353, 4294901760
        %v602 = vsub.f32 %v353, %v601
        %603 = vmatpush1.msra.mxu0 %v602
        %604 = vmatprep.subr.mxu0 0.0
        %605 = vmatpush2.msra.mxu0 0.0
        %606 = vmatprep.subr.mxu0 0.0
        %607 = vmatpush2.msra.mxu0 0.0
        %608 = vmatprep.subr.mxu0 0.0
        %609 = vmatpush2.msra.mxu0 0.0
        %610 = vmatprep.subr.mxu0 0.0
        %611 = vmatpush2.msra.mxu0 0.0
        %612 = vmatprep.subr.mxu0 0.0
        %613 = vmatpush2.msra.mxu0 0.0
        %614 = vmatprep.subr.mxu0 0.0
        %615 = vmatpush2.msra.mxu0 0.0
        %616 = vmatprep.subr.mxu0 0.0
        %617 = vmatpush2.msra.mxu0 0.0
        %618 = vmatprep.subr.mxu0 0.0
        %619 = vmatpush2.msra.mxu0 0.0
        %620 = vmatprep.subr.mxu0 0.0
        %621 = vmatpush2.msra.mxu0 0.0
        %622 = vmatprep.subr.mxu0 0.0
        %623 = vmatpush2.msra.mxu0 0.0
        %624 = vmatprep.subr.mxu0 0.0
        %625 = vmatpush2.msra.mxu0 0.0
        %626 = vmatprep.subr.mxu0 0.0
        %627 = vmatpush2.msra.mxu0 0.0
        %628 = vmatprep.subr.mxu0 0.0
        %629 = vmatpush2.msra.mxu0 0.0
        %630 = vmatprep.subr.mxu0 0.0
        %631 = vmatpush2.msra.mxu0 0.0
        %632 = vmatprep.subr.mxu0 0.0
        %633 = vmatpush2.msra.mxu0 0.0
        %634 = vmatprep.subr.mxu0 0.0
        %635 = vmatpush2.msra.mxu0 0.0
        %636 = vmatprep.mubr.f32.mxu0 0.0
        %v637 = vand.u32 %v373, 4294901760
        %v638 = vsub.f32 %v373, %v637
        %639 = vmatmul.mubr.f32.gmra.mxu0 %v638
        %v640 = vpop.f32.mrf.mxu0
        %v641 = vadd.f32 %v555, %v640
        %v642 = vpop.f32.mrf.mxu0
        %643 = vmatprep.mubr.f32.mxu0 0.0
        %v644 = vand.u32 %v376, 4294901760
        %v645 = vsub.f32 %v376, %v644
        %646 = vmatmul.mubr.f32.gmra.mxu0 %v645
        %v647 = vpop.f32.mrf.mxu0
        %v648 = vadd.f32 %v561, %v647
        %v649 = vpop.f32.mrf.mxu0
        %650 = vdwg.mxu0
        %651 = vmatprep.subr.mxu0 0.0
        %652 = vmatpush1.msra.mxu0 0.0
        %653 = vmatprep.subr.mxu0 0.0
        %654 = vmatpush1.msra.mxu0 0.0
        %655 = vmatprep.subr.mxu0 0.0
        %656 = vmatpush1.msra.mxu0 0.0
        %657 = vmatprep.subr.mxu0 0.0
        %658 = vmatpush1.msra.mxu0 0.0
        %659 = vmatprep.subr.mxu0 0.0
        %660 = vmatpush1.msra.mxu0 0.0
        %661 = vmatprep.subr.mxu0 0.0
        %662 = vmatpush1.msra.mxu0 0.0
        %663 = vmatprep.subr.mxu0 0.0
        %664 = vmatpush1.msra.mxu0 0.0
        %665 = vmatprep.subr.mxu0 0.0
        %666 = vmatpush1.msra.mxu0 0.0
        %667 = vmatprep.subr.mxu0 0.0
        %668 = vmatpush1.msra.mxu0 0.0
        %669 = vmatprep.subr.mxu0 0.0
        %670 = vmatpush1.msra.mxu0 0.0
        %671 = vmatprep.subr.mxu0 0.0
        %672 = vmatpush1.msra.mxu0 0.0
        %673 = vmatprep.subr.mxu0 0.0
        %674 = vmatpush1.msra.mxu0 0.0
        %675 = vmatprep.subr.mxu0 0.0
        %v676 = vand.u32 %v356, 4294901760
        %677 = vmatpush1.msra.mxu0 %v676
        %678 = vmatprep.subr.mxu0 0.0
        %v679 = vand.u32 %v355, 4294901760
        %680 = vmatpush1.msra.mxu0 %v679
        %681 = vmatprep.subr.mxu0 0.0
        %v682 = vand.u32 %v354, 4294901760
        %683 = vmatpush1.msra.mxu0 %v682
        %684 = vmatprep.subr.mxu0 0.0
        %v685 = vand.u32 %v353, 4294901760
        %686 = vmatpush1.msra.mxu0 %v685
        %687 = vmatprep.subr.mxu0 0.0
        %688 = vmatpush2.msra.mxu0 0.0
        %689 = vmatprep.subr.mxu0 0.0
        %690 = vmatpush2.msra.mxu0 0.0
        %691 = vmatprep.subr.mxu0 0.0
        %692 = vmatpush2.msra.mxu0 0.0
        %693 = vmatprep.subr.mxu0 0.0
        %694 = vmatpush2.msra.mxu0 0.0
        %695 = vmatprep.subr.mxu0 0.0
        %696 = vmatpush2.msra.mxu0 0.0
        %697 = vmatprep.subr.mxu0 0.0
        %698 = vmatpush2.msra.mxu0 0.0
        %699 = vmatprep.subr.mxu0 0.0
        %700 = vmatpush2.msra.mxu0 0.0
        %701 = vmatprep.subr.mxu0 0.0
        %702 = vmatpush2.msra.mxu0 0.0
        %703 = vmatprep.subr.mxu0 0.0
        %704 = vmatpush2.msra.mxu0 0.0
        %705 = vmatprep.subr.mxu0 0.0
        %706 = vmatpush2.msra.mxu0 0.0
        %707 = vmatprep.subr.mxu0 0.0
        %708 = vmatpush2.msra.mxu0 0.0
        %709 = vmatprep.subr.mxu0 0.0
        %710 = vmatpush2.msra.mxu0 0.0
        %711 = vmatprep.subr.mxu0 0.0
        %712 = vmatpush2.msra.mxu0 0.0
        %713 = vmatprep.subr.mxu0 0.0
        %714 = vmatpush2.msra.mxu0 0.0
        %715 = vmatprep.subr.mxu0 0.0
        %716 = vmatpush2.msra.mxu0 0.0
        %717 = vmatprep.subr.mxu0 0.0
        %718 = vmatpush2.msra.mxu0 0.0
        %719 = vmatprep.mubr.f32.mxu0 0.0
        %v720 = vand.u32 %v373, 4294901760
        %v721 = vsub.f32 %v373, %v720
        %v722 = vand.u32 %v721, 4294901760
        %723 = vmatmul.mubr.f32.gmra.mxu0 %v722
        %v724 = vpop.f32.mrf.mxu0
        %v725 = vadd.f32 %v641, %v724
        %v726 = vpop.f32.mrf.mxu0
        %727 = vmatprep.mubr.f32.mxu0 0.0
        %v728 = vand.u32 %v376, 4294901760
        %v729 = vsub.f32 %v376, %v728
        %v730 = vand.u32 %v729, 4294901760
        %731 = vmatmul.mubr.f32.gmra.mxu0 %v730
        %v732 = vpop.f32.mrf.mxu0
        %v733 = vadd.f32 %v648, %v732
        %v734 = vpop.f32.mrf.mxu0
        %735 = vdwg.mxu0
        %736 = vmatprep.subr.mxu0 0.0
        %737 = vmatpush1.msra.mxu0 0.0
        %738 = vmatprep.subr.mxu0 0.0
        %739 = vmatpush1.msra.mxu0 0.0
        %740 = vmatprep.subr.mxu0 0.0
        %741 = vmatpush1.msra.mxu0 0.0
        %742 = vmatprep.subr.mxu0 0.0
        %743 = vmatpush1.msra.mxu0 0.0
        %744 = vmatprep.subr.mxu0 0.0
        %745 = vmatpush1.msra.mxu0 0.0
        %746 = vmatprep.subr.mxu0 0.0
        %747 = vmatpush1.msra.mxu0 0.0
        %748 = vmatprep.subr.mxu0 0.0
        %749 = vmatpush1.msra.mxu0 0.0
        %750 = vmatprep.subr.mxu0 0.0
        %751 = vmatpush1.msra.mxu0 0.0
        %752 = vmatprep.subr.mxu0 0.0
        %753 = vmatpush1.msra.mxu0 0.0
        %754 = vmatprep.subr.mxu0 0.0
        %755 = vmatpush1.msra.mxu0 0.0
        %756 = vmatprep.subr.mxu0 0.0
        %757 = vmatpush1.msra.mxu0 0.0
        %758 = vmatprep.subr.mxu0 0.0
        %759 = vmatpush1.msra.mxu0 0.0
        %760 = vmatprep.subr.mxu0 0.0
        %v761 = vand.u32 %v356, 4294901760
        %v762 = vsub.f32 %v356, %v761
        %v763 = vand.u32 %v762, 4294901760
        %764 = vmatpush1.msra.mxu0 %v763
        %765 = vmatprep.subr.mxu0 0.0
        %v766 = vand.u32 %v355, 4294901760
        %v767 = vsub.f32 %v355, %v766
        %v768 = vand.u32 %v767, 4294901760
        %769 = vmatpush1.msra.mxu0 %v768
        %770 = vmatprep.subr.mxu0 0.0
        %v771 = vand.u32 %v354, 4294901760
        %v772 = vsub.f32 %v354, %v771
        %v773 = vand.u32 %v772, 4294901760
        %774 = vmatpush1.msra.mxu0 %v773
        %775 = vmatprep.subr.mxu0 0.0
        %v776 = vand.u32 %v353, 4294901760
        %v777 = vsub.f32 %v353, %v776
        %v778 = vand.u32 %v777, 4294901760
        %779 = vmatpush1.msra.mxu0 %v778
        %780 = vmatprep.subr.mxu0 0.0
        %781 = vmatpush2.msra.mxu0 0.0
        %782 = vmatprep.subr.mxu0 0.0
        %783 = vmatpush2.msra.mxu0 0.0
        %784 = vmatprep.subr.mxu0 0.0
        %785 = vmatpush2.msra.mxu0 0.0
        %786 = vmatprep.subr.mxu0 0.0
        %787 = vmatpush2.msra.mxu0 0.0
        %788 = vmatprep.subr.mxu0 0.0
        %789 = vmatpush2.msra.mxu0 0.0
        %790 = vmatprep.subr.mxu0 0.0
        %791 = vmatpush2.msra.mxu0 0.0
        %792 = vmatprep.subr.mxu0 0.0
        %793 = vmatpush2.msra.mxu0 0.0
        %794 = vmatprep.subr.mxu0 0.0
        %795 = vmatpush2.msra.mxu0 0.0
        %796 = vmatprep.subr.mxu0 0.0
        %797 = vmatpush2.msra.mxu0 0.0
        %798 = vmatprep.subr.mxu0 0.0
        %799 = vmatpush2.msra.mxu0 0.0
        %800 = vmatprep.subr.mxu0 0.0
        %801 = vmatpush2.msra.mxu0 0.0
        %802 = vmatprep.subr.mxu0 0.0
        %803 = vmatpush2.msra.mxu0 0.0
        %804 = vmatprep.subr.mxu0 0.0
        %805 = vmatpush2.msra.mxu0 0.0
        %806 = vmatprep.subr.mxu0 0.0
        %807 = vmatpush2.msra.mxu0 0.0
        %808 = vmatprep.subr.mxu0 0.0
        %809 = vmatpush2.msra.mxu0 0.0
        %810 = vmatprep.subr.mxu0 0.0
        %811 = vmatpush2.msra.mxu0 0.0
        %812 = vmatprep.mubr.f32.mxu0 0.0
        %v813 = vand.u32 %v373, 4294901760
        %814 = vmatmul.mubr.f32.gmra.mxu0 %v813
        %v815 = vpop.f32.mrf.mxu0
        %v816 = vadd.f32 %v725, %v815
        %v817 = vpop.f32.mrf.mxu0
        %818 = vmatprep.mubr.f32.mxu0 0.0
        %v819 = vand.u32 %v376, 4294901760
        %820 = vmatmul.mubr.f32.gmra.mxu0 %v819
        %v821 = vpop.f32.mrf.mxu0
        %v822 = vadd.f32 %v733, %v821
        %v823 = vpop.f32.mrf.mxu0
        %824 = vdwg.mxu0
        %825 = vmatprep.subr.mxu0 0.0
        %826 = vmatpush1.msra.mxu0 0.0
        %827 = vmatprep.subr.mxu0 0.0
        %828 = vmatpush1.msra.mxu0 0.0
        %829 = vmatprep.subr.mxu0 0.0
        %830 = vmatpush1.msra.mxu0 0.0
        %831 = vmatprep.subr.mxu0 0.0
        %832 = vmatpush1.msra.mxu0 0.0
        %833 = vmatprep.subr.mxu0 0.0
        %834 = vmatpush1.msra.mxu0 0.0
        %835 = vmatprep.subr.mxu0 0.0
        %836 = vmatpush1.msra.mxu0 0.0
        %837 = vmatprep.subr.mxu0 0.0
        %838 = vmatpush1.msra.mxu0 0.0
        %839 = vmatprep.subr.mxu0 0.0
        %840 = vmatpush1.msra.mxu0 0.0
        %841 = vmatprep.subr.mxu0 0.0
        %842 = vmatpush1.msra.mxu0 0.0
        %843 = vmatprep.subr.mxu0 0.0
        %844 = vmatpush1.msra.mxu0 0.0
        %845 = vmatprep.subr.mxu0 0.0
        %846 = vmatpush1.msra.mxu0 0.0
        %847 = vmatprep.subr.mxu0 0.0
        %848 = vmatpush1.msra.mxu0 0.0
        %849 = vmatprep.subr.mxu0 0.0
        %v850 = vand.u32 %v356, 4294901760
        %851 = vmatpush1.msra.mxu0 %v850
        %852 = vmatprep.subr.mxu0 0.0
        %v853 = vand.u32 %v355, 4294901760
        %854 = vmatpush1.msra.mxu0 %v853
        %855 = vmatprep.subr.mxu0 0.0
        %v856 = vand.u32 %v354, 4294901760
        %857 = vmatpush1.msra.mxu0 %v856
        %858 = vmatprep.subr.mxu0 0.0
        %v859 = vand.u32 %v353, 4294901760
        %860 = vmatpush1.msra.mxu0 %v859
        %861 = vmatprep.subr.mxu0 0.0
        %862 = vmatpush2.msra.mxu0 0.0
        %863 = vmatprep.subr.mxu0 0.0
        %864 = vmatpush2.msra.mxu0 0.0
        %865 = vmatprep.subr.mxu0 0.0
        %866 = vmatpush2.msra.mxu0 0.0
        %867 = vmatprep.subr.mxu0 0.0
        %868 = vmatpush2.msra.mxu0 0.0
        %869 = vmatprep.subr.mxu0 0.0
        %870 = vmatpush2.msra.mxu0 0.0
        %871 = vmatprep.subr.mxu0 0.0
        %872 = vmatpush2.msra.mxu0 0.0
        %873 = vmatprep.subr.mxu0 0.0
        %874 = vmatpush2.msra.mxu0 0.0
        %875 = vmatprep.subr.mxu0 0.0
        %876 = vmatpush2.msra.mxu0 0.0
        %877 = vmatprep.subr.mxu0 0.0
        %878 = vmatpush2.msra.mxu0 0.0
        %879 = vmatprep.subr.mxu0 0.0
        %880 = vmatpush2.msra.mxu0 0.0
        %881 = vmatprep.subr.mxu0 0.0
        %882 = vmatpush2.msra.mxu0 0.0
        %883 = vmatprep.subr.mxu0 0.0
        %884 = vmatpush2.msra.mxu0 0.0
        %885 = vmatprep.subr.mxu0 0.0
        %886 = vmatpush2.msra.mxu0 0.0
        %887 = vmatprep.subr.mxu0 0.0
        %888 = vmatpush2.msra.mxu0 0.0
        %889 = vmatprep.subr.mxu0 0.0
        %890 = vmatpush2.msra.mxu0 0.0
        %891 = vmatprep.subr.mxu0 0.0
        %892 = vmatpush2.msra.mxu0 0.0
        %893 = vmatprep.mubr.f32.mxu0 0.0
        %v894 = vand.u32 %v373, 4294901760
        %895 = vmatmul.mubr.f32.gmra.mxu0 %v894
        %v896 = vpop.f32.mrf.mxu0
        %v897 = vadd.f32 %v816, %v896
        %v898 = vpop.f32.mrf.mxu0
        %899 = vmatprep.mubr.f32.mxu0 0.0
        %v900 = vand.u32 %v376, 4294901760
        %901 = vmatmul.mubr.f32.gmra.mxu0 %v900
        %v902 = vpop.f32.mrf.mxu0
        %v903 = vadd.f32 %v822, %v902
        %v904 = vpop.f32.mrf.mxu0
        %905 = vdwg.mxu0
        %v906 = vld [vmem:[%s3] sm:$0xff]
        %v907 = vld [vmem:[%s3 + $0x8] sm:$0xff]
        %v908 = vld [vmem:[%s4] sm:$0xff]
        %v909 = vld [vmem:[%s4 + $0x8] sm:$0xff]
        %911 = vset.pattern.permute.xlu0 0
        %912 = vperm.xlu0 %911, %v908
        %v913 = vpop.permute.xlu0 %912
        %916 = vset.pattern.permute.xlu0 0
        %917 = vperm.xlu0 %916, %v909
        %v918 = vpop.permute.xlu0 %917
        %v921 = vsel %vm371, %v906, 0
        %v924 = vsel %vm371, %v907, 0
        %926 = vmatprep.subr.mxu0 0.0
        %927 = vmatpush1.msra.mxu0 0.0
        %928 = vmatprep.subr.mxu0 0.0
        %929 = vmatpush1.msra.mxu0 0.0
        %930 = vmatprep.subr.mxu0 0.0
        %931 = vmatpush1.msra.mxu0 0.0
        %932 = vmatprep.subr.mxu0 0.0
        %933 = vmatpush1.msra.mxu0 0.0
        %934 = vmatprep.subr.mxu0 0.0
        %935 = vmatpush1.msra.mxu0 0.0
        %936 = vmatprep.subr.mxu0 0.0
        %937 = vmatpush1.msra.mxu0 0.0
        %938 = vmatprep.subr.mxu0 0.0
        %939 = vmatpush1.msra.mxu0 0.0
        %940 = vmatprep.subr.mxu0 0.0
        %941 = vmatpush1.msra.mxu0 0.0
        %942 = vmatprep.subr.mxu0 0.0
        %943 = vmatpush1.msra.mxu0 0.0
        %944 = vmatprep.subr.mxu0 0.0
        %945 = vmatpush1.msra.mxu0 0.0
        %946 = vmatprep.subr.mxu0 0.0
        %947 = vmatpush1.msra.mxu0 0.0
        %948 = vmatprep.subr.mxu0 0.0
        %949 = vmatpush1.msra.mxu0 0.0
        %950 = vmatprep.subr.mxu0 0.0
        %v951 = vand.u32 %v356, 4294901760
        %952 = vmatpush1.msra.mxu0 %v951
        %953 = vmatprep.subr.mxu0 0.0
        %v954 = vand.u32 %v355, 4294901760
        %955 = vmatpush1.msra.mxu0 %v954
        %956 = vmatprep.subr.mxu0 0.0
        %v957 = vand.u32 %v354, 4294901760
        %958 = vmatpush1.msra.mxu0 %v957
        %959 = vmatprep.subr.mxu0 0.0
        %v960 = vand.u32 %v353, 4294901760
        %961 = vmatpush1.msra.mxu0 %v960
        %962 = vmatprep.subr.mxu0 0.0
        %963 = vmatpush2.msra.mxu0 0.0
        %964 = vmatprep.subr.mxu0 0.0
        %965 = vmatpush2.msra.mxu0 0.0
        %966 = vmatprep.subr.mxu0 0.0
        %967 = vmatpush2.msra.mxu0 0.0
        %968 = vmatprep.subr.mxu0 0.0
        %969 = vmatpush2.msra.mxu0 0.0
        %970 = vmatprep.subr.mxu0 0.0
        %971 = vmatpush2.msra.mxu0 0.0
        %972 = vmatprep.subr.mxu0 0.0
        %973 = vmatpush2.msra.mxu0 0.0
        %974 = vmatprep.subr.mxu0 0.0
        %975 = vmatpush2.msra.mxu0 0.0
        %976 = vmatprep.subr.mxu0 0.0
        %977 = vmatpush2.msra.mxu0 0.0
        %978 = vmatprep.subr.mxu0 0.0
        %979 = vmatpush2.msra.mxu0 0.0
        %980 = vmatprep.subr.mxu0 0.0
        %981 = vmatpush2.msra.mxu0 0.0
        %982 = vmatprep.subr.mxu0 0.0
        %983 = vmatpush2.msra.mxu0 0.0
        %984 = vmatprep.subr.mxu0 0.0
        %985 = vmatpush2.msra.mxu0 0.0
        %986 = vmatprep.subr.mxu0 0.0
        %987 = vmatpush2.msra.mxu0 0.0
        %988 = vmatprep.subr.mxu0 0.0
        %989 = vmatpush2.msra.mxu0 0.0
        %990 = vmatprep.subr.mxu0 0.0
        %991 = vmatpush2.msra.mxu0 0.0
        %992 = vmatprep.subr.mxu0 0.0
        %993 = vmatpush2.msra.mxu0 0.0
        %994 = vmatprep.mubr.f32.mxu0 0.0
        %v995 = vand.u32 %v921, 4294901760
        %v996 = vsub.f32 %v921, %v995
        %v997 = vand.u32 %v996, 4294901760
        %v998 = vsub.f32 %v996, %v997
        %v999 = vand.u32 %v998, 4294901760
        %1000 = vmatmul.mubr.f32.gmra.mxu0 %v999
        %v1001 = vpop.f32.mrf.mxu0
        %v1002 = vadd.f32 %v913, %v1001
        %v1003 = vpop.f32.mrf.mxu0
        %1004 = vmatprep.mubr.f32.mxu0 0.0
        %v1005 = vand.u32 %v924, 4294901760
        %v1006 = vsub.f32 %v924, %v1005
        %v1007 = vand.u32 %v1006, 4294901760
        %v1008 = vsub.f32 %v1006, %v1007
        %v1009 = vand.u32 %v1008, 4294901760
        %1010 = vmatmul.mubr.f32.gmra.mxu0 %v1009
        %v1011 = vpop.f32.mrf.mxu0
        %v1012 = vadd.f32 %v918, %v1011
        %v1013 = vpop.f32.mrf.mxu0
        %1014 = vdwg.mxu0
        %1015 = vmatprep.subr.mxu0 0.0
        %1016 = vmatpush1.msra.mxu0 0.0
        %1017 = vmatprep.subr.mxu0 0.0
        %1018 = vmatpush1.msra.mxu0 0.0
        %1019 = vmatprep.subr.mxu0 0.0
        %1020 = vmatpush1.msra.mxu0 0.0
        %1021 = vmatprep.subr.mxu0 0.0
        %1022 = vmatpush1.msra.mxu0 0.0
        %1023 = vmatprep.subr.mxu0 0.0
        %1024 = vmatpush1.msra.mxu0 0.0
        %1025 = vmatprep.subr.mxu0 0.0
        %1026 = vmatpush1.msra.mxu0 0.0
        %1027 = vmatprep.subr.mxu0 0.0
        %1028 = vmatpush1.msra.mxu0 0.0
        %1029 = vmatprep.subr.mxu0 0.0
        %1030 = vmatpush1.msra.mxu0 0.0
        %1031 = vmatprep.subr.mxu0 0.0
        %1032 = vmatpush1.msra.mxu0 0.0
        %1033 = vmatprep.subr.mxu0 0.0
        %1034 = vmatpush1.msra.mxu0 0.0
        %1035 = vmatprep.subr.mxu0 0.0
        %1036 = vmatpush1.msra.mxu0 0.0
        %1037 = vmatprep.subr.mxu0 0.0
        %1038 = vmatpush1.msra.mxu0 0.0
        %1039 = vmatprep.subr.mxu0 0.0
        %v1040 = vand.u32 %v356, 4294901760
        %v1041 = vsub.f32 %v356, %v1040
        %v1042 = vand.u32 %v1041, 4294901760
        %v1043 = vsub.f32 %v1041, %v1042
        %v1044 = vand.u32 %v1043, 4294901760
        %1045 = vmatpush1.msra.mxu0 %v1044
        %1046 = vmatprep.subr.mxu0 0.0
        %v1047 = vand.u32 %v355, 4294901760
        %v1048 = vsub.f32 %v355, %v1047
        %v1049 = vand.u32 %v1048, 4294901760
        %v1050 = vsub.f32 %v1048, %v1049
        %v1051 = vand.u32 %v1050, 4294901760
        %1052 = vmatpush1.msra.mxu0 %v1051
        %1053 = vmatprep.subr.mxu0 0.0
        %v1054 = vand.u32 %v354, 4294901760
        %v1055 = vsub.f32 %v354, %v1054
        %v1056 = vand.u32 %v1055, 4294901760
        %v1057 = vsub.f32 %v1055, %v1056
        %v1058 = vand.u32 %v1057, 4294901760
        %1059 = vmatpush1.msra.mxu0 %v1058
        %1060 = vmatprep.subr.mxu0 0.0
        %v1061 = vand.u32 %v353, 4294901760
        %v1062 = vsub.f32 %v353, %v1061
        %v1063 = vand.u32 %v1062, 4294901760
        %v1064 = vsub.f32 %v1062, %v1063
        %v1065 = vand.u32 %v1064, 4294901760
        %1066 = vmatpush1.msra.mxu0 %v1065
        %1067 = vmatprep.subr.mxu0 0.0
        %1068 = vmatpush2.msra.mxu0 0.0
        %1069 = vmatprep.subr.mxu0 0.0
        %1070 = vmatpush2.msra.mxu0 0.0
        %1071 = vmatprep.subr.mxu0 0.0
        %1072 = vmatpush2.msra.mxu0 0.0
        %1073 = vmatprep.subr.mxu0 0.0
        %1074 = vmatpush2.msra.mxu0 0.0
        %1075 = vmatprep.subr.mxu0 0.0
        %1076 = vmatpush2.msra.mxu0 0.0
        %1077 = vmatprep.subr.mxu0 0.0
        %1078 = vmatpush2.msra.mxu0 0.0
        %1079 = vmatprep.subr.mxu0 0.0
        %1080 = vmatpush2.msra.mxu0 0.0
        %1081 = vmatprep.subr.mxu0 0.0
        %1082 = vmatpush2.msra.mxu0 0.0
        %1083 = vmatprep.subr.mxu0 0.0
        %1084 = vmatpush2.msra.mxu0 0.0
        %1085 = vmatprep.subr.mxu0 0.0
        %1086 = vmatpush2.msra.mxu0 0.0
        %1087 = vmatprep.subr.mxu0 0.0
        %1088 = vmatpush2.msra.mxu0 0.0
        %1089 = vmatprep.subr.mxu0 0.0
        %1090 = vmatpush2.msra.mxu0 0.0
        %1091 = vmatprep.subr.mxu0 0.0
        %1092 = vmatpush2.msra.mxu0 0.0
        %1093 = vmatprep.subr.mxu0 0.0
        %1094 = vmatpush2.msra.mxu0 0.0
        %1095 = vmatprep.subr.mxu0 0.0
        %1096 = vmatpush2.msra.mxu0 0.0
        %1097 = vmatprep.subr.mxu0 0.0
        %1098 = vmatpush2.msra.mxu0 0.0
        %1099 = vmatprep.mubr.f32.mxu0 0.0
        %v1100 = vand.u32 %v921, 4294901760
        %1101 = vmatmul.mubr.f32.gmra.mxu0 %v1100
        %v1102 = vpop.f32.mrf.mxu0
        %v1103 = vadd.f32 %v1002, %v1102
        %v1104 = vpop.f32.mrf.mxu0
        %1105 = vmatprep.mubr.f32.mxu0 0.0
        %v1106 = vand.u32 %v924, 4294901760
        %1107 = vmatmul.mubr.f32.gmra.mxu0 %v1106
        %v1108 = vpop.f32.mrf.mxu0
        %v1109 = vadd.f32 %v1012, %v1108
        %v1110 = vpop.f32.mrf.mxu0
        %1111 = vdwg.mxu0
        %1112 = vmatprep.subr.mxu0 0.0
        %1113 = vmatpush1.msra.mxu0 0.0
        %1114 = vmatprep.subr.mxu0 0.0
        %1115 = vmatpush1.msra.mxu0 0.0
        %1116 = vmatprep.subr.mxu0 0.0
        %1117 = vmatpush1.msra.mxu0 0.0
        %1118 = vmatprep.subr.mxu0 0.0
        %1119 = vmatpush1.msra.mxu0 0.0
        %1120 = vmatprep.subr.mxu0 0.0
        %1121 = vmatpush1.msra.mxu0 0.0
        %1122 = vmatprep.subr.mxu0 0.0
        %1123 = vmatpush1.msra.mxu0 0.0
        %1124 = vmatprep.subr.mxu0 0.0
        %1125 = vmatpush1.msra.mxu0 0.0
        %1126 = vmatprep.subr.mxu0 0.0
        %1127 = vmatpush1.msra.mxu0 0.0
        %1128 = vmatprep.subr.mxu0 0.0
        %1129 = vmatpush1.msra.mxu0 0.0
        %1130 = vmatprep.subr.mxu0 0.0
        %1131 = vmatpush1.msra.mxu0 0.0
        %1132 = vmatprep.subr.mxu0 0.0
        %1133 = vmatpush1.msra.mxu0 0.0
        %1134 = vmatprep.subr.mxu0 0.0
        %1135 = vmatpush1.msra.mxu0 0.0
        %1136 = vmatprep.subr.mxu0 0.0
        %v1137 = vand.u32 %v356, 4294901760
        %v1138 = vsub.f32 %v356, %v1137
        %1139 = vmatpush1.msra.mxu0 %v1138
        %1140 = vmatprep.subr.mxu0 0.0
        %v1141 = vand.u32 %v355, 4294901760
        %v1142 = vsub.f32 %v355, %v1141
        %1143 = vmatpush1.msra.mxu0 %v1142
        %1144 = vmatprep.subr.mxu0 0.0
        %v1145 = vand.u32 %v354, 4294901760
        %v1146 = vsub.f32 %v354, %v1145
        %1147 = vmatpush1.msra.mxu0 %v1146
        %1148 = vmatprep.subr.mxu0 0.0
        %v1149 = vand.u32 %v353, 4294901760
        %v1150 = vsub.f32 %v353, %v1149
        %1151 = vmatpush1.msra.mxu0 %v1150
        %1152 = vmatprep.subr.mxu0 0.0
        %1153 = vmatpush2.msra.mxu0 0.0
        %1154 = vmatprep.subr.mxu0 0.0
        %1155 = vmatpush2.msra.mxu0 0.0
        %1156 = vmatprep.subr.mxu0 0.0
        %1157 = vmatpush2.msra.mxu0 0.0
        %1158 = vmatprep.subr.mxu0 0.0
        %1159 = vmatpush2.msra.mxu0 0.0
        %1160 = vmatprep.subr.mxu0 0.0
        %1161 = vmatpush2.msra.mxu0 0.0
        %1162 = vmatprep.subr.mxu0 0.0
        %1163 = vmatpush2.msra.mxu0 0.0
        %1164 = vmatprep.subr.mxu0 0.0
        %1165 = vmatpush2.msra.mxu0 0.0
        %1166 = vmatprep.subr.mxu0 0.0
        %1167 = vmatpush2.msra.mxu0 0.0
        %1168 = vmatprep.subr.mxu0 0.0
        %1169 = vmatpush2.msra.mxu0 0.0
        %1170 = vmatprep.subr.mxu0 0.0
        %1171 = vmatpush2.msra.mxu0 0.0
        %1172 = vmatprep.subr.mxu0 0.0
        %1173 = vmatpush2.msra.mxu0 0.0
        %1174 = vmatprep.subr.mxu0 0.0
        %1175 = vmatpush2.msra.mxu0 0.0
        %1176 = vmatprep.subr.mxu0 0.0
        %1177 = vmatpush2.msra.mxu0 0.0
        %1178 = vmatprep.subr.mxu0 0.0
        %1179 = vmatpush2.msra.mxu0 0.0
        %1180 = vmatprep.subr.mxu0 0.0
        %1181 = vmatpush2.msra.mxu0 0.0
        %1182 = vmatprep.subr.mxu0 0.0
        %1183 = vmatpush2.msra.mxu0 0.0
        %1184 = vmatprep.mubr.f32.mxu0 0.0
        %v1185 = vand.u32 %v921, 4294901760
        %v1186 = vsub.f32 %v921, %v1185
        %1187 = vmatmul.mubr.f32.gmra.mxu0 %v1186
        %v1188 = vpop.f32.mrf.mxu0
        %v1189 = vadd.f32 %v1103, %v1188
        %v1190 = vpop.f32.mrf.mxu0
        %1191 = vmatprep.mubr.f32.mxu0 0.0
        %v1192 = vand.u32 %v924, 4294901760
        %v1193 = vsub.f32 %v924, %v1192
        %1194 = vmatmul.mubr.f32.gmra.mxu0 %v1193
        %v1195 = vpop.f32.mrf.mxu0
        %v1196 = vadd.f32 %v1109, %v1195
        %v1197 = vpop.f32.mrf.mxu0
        %1198 = vdwg.mxu0
        %1199 = vmatprep.subr.mxu0 0.0
        %1200 = vmatpush1.msra.mxu0 0.0
        %1201 = vmatprep.subr.mxu0 0.0
        %1202 = vmatpush1.msra.mxu0 0.0
        %1203 = vmatprep.subr.mxu0 0.0
        %1204 = vmatpush1.msra.mxu0 0.0
        %1205 = vmatprep.subr.mxu0 0.0
        %1206 = vmatpush1.msra.mxu0 0.0
        %1207 = vmatprep.subr.mxu0 0.0
        %1208 = vmatpush1.msra.mxu0 0.0
        %1209 = vmatprep.subr.mxu0 0.0
        %1210 = vmatpush1.msra.mxu0 0.0
        %1211 = vmatprep.subr.mxu0 0.0
        %1212 = vmatpush1.msra.mxu0 0.0
        %1213 = vmatprep.subr.mxu0 0.0
        %1214 = vmatpush1.msra.mxu0 0.0
        %1215 = vmatprep.subr.mxu0 0.0
        %1216 = vmatpush1.msra.mxu0 0.0
        %1217 = vmatprep.subr.mxu0 0.0
        %1218 = vmatpush1.msra.mxu0 0.0
        %1219 = vmatprep.subr.mxu0 0.0
        %1220 = vmatpush1.msra.mxu0 0.0
        %1221 = vmatprep.subr.mxu0 0.0
        %1222 = vmatpush1.msra.mxu0 0.0
        %1223 = vmatprep.subr.mxu0 0.0
        %v1224 = vand.u32 %v356, 4294901760
        %1225 = vmatpush1.msra.mxu0 %v1224
        %1226 = vmatprep.subr.mxu0 0.0
        %v1227 = vand.u32 %v355, 4294901760
        %1228 = vmatpush1.msra.mxu0 %v1227
        %1229 = vmatprep.subr.mxu0 0.0
        %v1230 = vand.u32 %v354, 4294901760
        %1231 = vmatpush1.msra.mxu0 %v1230
        %1232 = vmatprep.subr.mxu0 0.0
        %v1233 = vand.u32 %v353, 4294901760
        %1234 = vmatpush1.msra.mxu0 %v1233
        %1235 = vmatprep.subr.mxu0 0.0
        %1236 = vmatpush2.msra.mxu0 0.0
        %1237 = vmatprep.subr.mxu0 0.0
        %1238 = vmatpush2.msra.mxu0 0.0
        %1239 = vmatprep.subr.mxu0 0.0
        %1240 = vmatpush2.msra.mxu0 0.0
        %1241 = vmatprep.subr.mxu0 0.0
        %1242 = vmatpush2.msra.mxu0 0.0
        %1243 = vmatprep.subr.mxu0 0.0
        %1244 = vmatpush2.msra.mxu0 0.0
        %1245 = vmatprep.subr.mxu0 0.0
        %1246 = vmatpush2.msra.mxu0 0.0
        %1247 = vmatprep.subr.mxu0 0.0
        %1248 = vmatpush2.msra.mxu0 0.0
        %1249 = vmatprep.subr.mxu0 0.0
        %1250 = vmatpush2.msra.mxu0 0.0
        %1251 = vmatprep.subr.mxu0 0.0
        %1252 = vmatpush2.msra.mxu0 0.0
        %1253 = vmatprep.subr.mxu0 0.0
        %1254 = vmatpush2.msra.mxu0 0.0
        %1255 = vmatprep.subr.mxu0 0.0
        %1256 = vmatpush2.msra.mxu0 0.0
        %1257 = vmatprep.subr.mxu0 0.0
        %1258 = vmatpush2.msra.mxu0 0.0
        %1259 = vmatprep.subr.mxu0 0.0
        %1260 = vmatpush2.msra.mxu0 0.0
        %1261 = vmatprep.subr.mxu0 0.0
        %1262 = vmatpush2.msra.mxu0 0.0
        %1263 = vmatprep.subr.mxu0 0.0
        %1264 = vmatpush2.msra.mxu0 0.0
        %1265 = vmatprep.subr.mxu0 0.0
        %1266 = vmatpush2.msra.mxu0 0.0
        %1267 = vmatprep.mubr.f32.mxu0 0.0
        %v1268 = vand.u32 %v921, 4294901760
        %v1269 = vsub.f32 %v921, %v1268
        %v1270 = vand.u32 %v1269, 4294901760
        %1271 = vmatmul.mubr.f32.gmra.mxu0 %v1270
        %v1272 = vpop.f32.mrf.mxu0
        %v1273 = vadd.f32 %v1189, %v1272
        %v1274 = vpop.f32.mrf.mxu0
        %1275 = vmatprep.mubr.f32.mxu0 0.0
        %v1276 = vand.u32 %v924, 4294901760
        %v1277 = vsub.f32 %v924, %v1276
        %v1278 = vand.u32 %v1277, 4294901760
        %1279 = vmatmul.mubr.f32.gmra.mxu0 %v1278
        %v1280 = vpop.f32.mrf.mxu0
        %v1281 = vadd.f32 %v1196, %v1280
        %v1282 = vpop.f32.mrf.mxu0
        %1283 = vdwg.mxu0
        %1284 = vmatprep.subr.mxu0 0.0
        %1285 = vmatpush1.msra.mxu0 0.0
        %1286 = vmatprep.subr.mxu0 0.0
        %1287 = vmatpush1.msra.mxu0 0.0
        %1288 = vmatprep.subr.mxu0 0.0
        %1289 = vmatpush1.msra.mxu0 0.0
        %1290 = vmatprep.subr.mxu0 0.0
        %1291 = vmatpush1.msra.mxu0 0.0
        %1292 = vmatprep.subr.mxu0 0.0
        %1293 = vmatpush1.msra.mxu0 0.0
        %1294 = vmatprep.subr.mxu0 0.0
        %1295 = vmatpush1.msra.mxu0 0.0
        %1296 = vmatprep.subr.mxu0 0.0
        %1297 = vmatpush1.msra.mxu0 0.0
        %1298 = vmatprep.subr.mxu0 0.0
        %1299 = vmatpush1.msra.mxu0 0.0
        %1300 = vmatprep.subr.mxu0 0.0
        %1301 = vmatpush1.msra.mxu0 0.0
        %1302 = vmatprep.subr.mxu0 0.0
        %1303 = vmatpush1.msra.mxu0 0.0
        %1304 = vmatprep.subr.mxu0 0.0
        %1305 = vmatpush1.msra.mxu0 0.0
        %1306 = vmatprep.subr.mxu0 0.0
        %1307 = vmatpush1.msra.mxu0 0.0
        %1308 = vmatprep.subr.mxu0 0.0
        %v1309 = vand.u32 %v356, 4294901760
        %v1310 = vsub.f32 %v356, %v1309
        %v1311 = vand.u32 %v1310, 4294901760
        %1312 = vmatpush1.msra.mxu0 %v1311
        %1313 = vmatprep.subr.mxu0 0.0
        %v1314 = vand.u32 %v355, 4294901760
        %v1315 = vsub.f32 %v355, %v1314
        %v1316 = vand.u32 %v1315, 4294901760
        %1317 = vmatpush1.msra.mxu0 %v1316
        %1318 = vmatprep.subr.mxu0 0.0
        %v1319 = vand.u32 %v354, 4294901760
        %v1320 = vsub.f32 %v354, %v1319
        %v1321 = vand.u32 %v1320, 4294901760
        %1322 = vmatpush1.msra.mxu0 %v1321
        %1323 = vmatprep.subr.mxu0 0.0
        %v1324 = vand.u32 %v353, 4294901760
        %v1325 = vsub.f32 %v353, %v1324
        %v1326 = vand.u32 %v1325, 4294901760
        %1327 = vmatpush1.msra.mxu0 %v1326
        %1328 = vmatprep.subr.mxu0 0.0
        %1329 = vmatpush2.msra.mxu0 0.0
        %1330 = vmatprep.subr.mxu0 0.0
        %1331 = vmatpush2.msra.mxu0 0.0
        %1332 = vmatprep.subr.mxu0 0.0
        %1333 = vmatpush2.msra.mxu0 0.0
        %1334 = vmatprep.subr.mxu0 0.0
        %1335 = vmatpush2.msra.mxu0 0.0
        %1336 = vmatprep.subr.mxu0 0.0
        %1337 = vmatpush2.msra.mxu0 0.0
        %1338 = vmatprep.subr.mxu0 0.0
        %1339 = vmatpush2.msra.mxu0 0.0
        %1340 = vmatprep.subr.mxu0 0.0
        %1341 = vmatpush2.msra.mxu0 0.0
        %1342 = vmatprep.subr.mxu0 0.0
        %1343 = vmatpush2.msra.mxu0 0.0
        %1344 = vmatprep.subr.mxu0 0.0
        %1345 = vmatpush2.msra.mxu0 0.0
        %1346 = vmatprep.subr.mxu0 0.0
        %1347 = vmatpush2.msra.mxu0 0.0
        %1348 = vmatprep.subr.mxu0 0.0
        %1349 = vmatpush2.msra.mxu0 0.0
        %1350 = vmatprep.subr.mxu0 0.0
        %1351 = vmatpush2.msra.mxu0 0.0
        %1352 = vmatprep.subr.mxu0 0.0
        %1353 = vmatpush2.msra.mxu0 0.0
        %1354 = vmatprep.subr.mxu0 0.0
        %1355 = vmatpush2.msra.mxu0 0.0
        %1356 = vmatprep.subr.mxu0 0.0
        %1357 = vmatpush2.msra.mxu0 0.0
        %1358 = vmatprep.subr.mxu0 0.0
        %1359 = vmatpush2.msra.mxu0 0.0
        %1360 = vmatprep.mubr.f32.mxu0 0.0
        %v1361 = vand.u32 %v921, 4294901760
        %1362 = vmatmul.mubr.f32.gmra.mxu0 %v1361
        %v1363 = vpop.f32.mrf.mxu0
        %v1364 = vadd.f32 %v1273, %v1363
        %v1365 = vpop.f32.mrf.mxu0
        %1366 = vmatprep.mubr.f32.mxu0 0.0
        %v1367 = vand.u32 %v924, 4294901760
        %1368 = vmatmul.mubr.f32.gmra.mxu0 %v1367
        %v1369 = vpop.f32.mrf.mxu0
        %v1370 = vadd.f32 %v1281, %v1369
        %v1371 = vpop.f32.mrf.mxu0
        %1372 = vdwg.mxu0
        %1373 = vmatprep.subr.mxu0 0.0
        %1374 = vmatpush1.msra.mxu0 0.0
        %1375 = vmatprep.subr.mxu0 0.0
        %1376 = vmatpush1.msra.mxu0 0.0
        %1377 = vmatprep.subr.mxu0 0.0
        %1378 = vmatpush1.msra.mxu0 0.0
        %1379 = vmatprep.subr.mxu0 0.0
        %1380 = vmatpush1.msra.mxu0 0.0
        %1381 = vmatprep.subr.mxu0 0.0
        %1382 = vmatpush1.msra.mxu0 0.0
        %1383 = vmatprep.subr.mxu0 0.0
        %1384 = vmatpush1.msra.mxu0 0.0
        %1385 = vmatprep.subr.mxu0 0.0
        %1386 = vmatpush1.msra.mxu0 0.0
        %1387 = vmatprep.subr.mxu0 0.0
        %1388 = vmatpush1.msra.mxu0 0.0
        %1389 = vmatprep.subr.mxu0 0.0
        %1390 = vmatpush1.msra.mxu0 0.0
        %1391 = vmatprep.subr.mxu0 0.0
        %1392 = vmatpush1.msra.mxu0 0.0
        %1393 = vmatprep.subr.mxu0 0.0
        %1394 = vmatpush1.msra.mxu0 0.0
        %1395 = vmatprep.subr.mxu0 0.0
        %1396 = vmatpush1.msra.mxu0 0.0
        %1397 = vmatprep.subr.mxu0 0.0
        %v1398 = vand.u32 %v356, 4294901760
        %1399 = vmatpush1.msra.mxu0 %v1398
        %1400 = vmatprep.subr.mxu0 0.0
        %v1401 = vand.u32 %v355, 4294901760
        %1402 = vmatpush1.msra.mxu0 %v1401
        %1403 = vmatprep.subr.mxu0 0.0
        %v1404 = vand.u32 %v354, 4294901760
        %1405 = vmatpush1.msra.mxu0 %v1404
        %1406 = vmatprep.subr.mxu0 0.0
        %v1407 = vand.u32 %v353, 4294901760
        %1408 = vmatpush1.msra.mxu0 %v1407
        %1409 = vmatprep.subr.mxu0 0.0
        %1410 = vmatpush2.msra.mxu0 0.0
        %1411 = vmatprep.subr.mxu0 0.0
        %1412 = vmatpush2.msra.mxu0 0.0
        %1413 = vmatprep.subr.mxu0 0.0
        %1414 = vmatpush2.msra.mxu0 0.0
        %1415 = vmatprep.subr.mxu0 0.0
        %1416 = vmatpush2.msra.mxu0 0.0
        %1417 = vmatprep.subr.mxu0 0.0
        %1418 = vmatpush2.msra.mxu0 0.0
        %1419 = vmatprep.subr.mxu0 0.0
        %1420 = vmatpush2.msra.mxu0 0.0
        %1421 = vmatprep.subr.mxu0 0.0
        %1422 = vmatpush2.msra.mxu0 0.0
        %1423 = vmatprep.subr.mxu0 0.0
        %1424 = vmatpush2.msra.mxu0 0.0
        %1425 = vmatprep.subr.mxu0 0.0
        %1426 = vmatpush2.msra.mxu0 0.0
        %1427 = vmatprep.subr.mxu0 0.0
        %1428 = vmatpush2.msra.mxu0 0.0
        %1429 = vmatprep.subr.mxu0 0.0
        %1430 = vmatpush2.msra.mxu0 0.0
        %1431 = vmatprep.subr.mxu0 0.0
        %1432 = vmatpush2.msra.mxu0 0.0
        %1433 = vmatprep.subr.mxu0 0.0
        %1434 = vmatpush2.msra.mxu0 0.0
        %1435 = vmatprep.subr.mxu0 0.0
        %1436 = vmatpush2.msra.mxu0 0.0
        %1437 = vmatprep.subr.mxu0 0.0
        %1438 = vmatpush2.msra.mxu0 0.0
        %1439 = vmatprep.subr.mxu0 0.0
        %1440 = vmatpush2.msra.mxu0 0.0
        %1441 = vmatprep.mubr.f32.mxu0 0.0
        %v1442 = vand.u32 %v921, 4294901760
        %1443 = vmatmul.mubr.f32.gmra.mxu0 %v1442
        %v1444 = vpop.f32.mrf.mxu0
        %v1445 = vadd.f32 %v1364, %v1444
        %v1446 = vpop.f32.mrf.mxu0
        %1447 = vmatprep.mubr.f32.mxu0 0.0
        %v1448 = vand.u32 %v924, 4294901760
        %1449 = vmatmul.mubr.f32.gmra.mxu0 %v1448
        %v1450 = vpop.f32.mrf.mxu0
        %v1451 = vadd.f32 %v1370, %v1450
        %v1452 = vpop.f32.mrf.mxu0
        %1453 = vdwg.mxu0
        %v1454 = vld [vmem:[%s5] sm:$0xff]
        %v1455 = vld [vmem:[%s5 + $0x8] sm:$0xff]
        %v1456 = vld [vmem:[%s5 + $0x10] sm:$0xff]
        %v1457 = vld [vmem:[%s5 + $0x18] sm:$0xff]
        %v1458 = vld [vmem:[%s6] sm:$0xff]
        %v1459 = vld [vmem:[%s6 + $0x8] sm:$0xff]
        %v1460 = vld [vmem:[%s6 + $0x10] sm:$0xff]
        %v1461 = vld [vmem:[%s6 + $0x18] sm:$0xff]
        %1463 = vset.pattern.permute.xlu0 0
        %1464 = vperm.xlu0 %1463, %v1458
        %v1465 = vpop.permute.xlu0 %1464
        %1468 = vset.pattern.permute.xlu0 0
        %1469 = vperm.xlu0 %1468, %v1459
        %v1470 = vpop.permute.xlu0 %1469
        %1473 = vset.pattern.permute.xlu0 0
        %1474 = vperm.xlu0 %1473, %v1460
        %v1475 = vpop.permute.xlu0 %1474
        %1478 = vset.pattern.permute.xlu0 0
        %1479 = vperm.xlu0 %1478, %v1461
        %v1480 = vpop.permute.xlu0 %1479
        %v1483 = vsel %vm371, %v1454, 0
        %v1486 = vsel %vm371, %v1455, 0
        %v1489 = vsel %vm371, %v1456, 0
        %v1492 = vsel %vm371, %v1457, 0
        %1494 = vmatprep.subr.mxu0 0.0
        %1495 = vmatpush1.msra.mxu0 0.0
        %1496 = vmatprep.subr.mxu0 0.0
        %1497 = vmatpush1.msra.mxu0 0.0
        %1498 = vmatprep.subr.mxu0 0.0
        %1499 = vmatpush1.msra.mxu0 0.0
        %1500 = vmatprep.subr.mxu0 0.0
        %1501 = vmatpush1.msra.mxu0 0.0
        %1502 = vmatprep.subr.mxu0 0.0
        %1503 = vmatpush1.msra.mxu0 0.0
        %1504 = vmatprep.subr.mxu0 0.0
        %1505 = vmatpush1.msra.mxu0 0.0
        %1506 = vmatprep.subr.mxu0 0.0
        %1507 = vmatpush1.msra.mxu0 0.0
        %1508 = vmatprep.subr.mxu0 0.0
        %1509 = vmatpush1.msra.mxu0 0.0
        %1510 = vmatprep.subr.mxu0 0.0
        %1511 = vmatpush1.msra.mxu0 0.0
        %1512 = vmatprep.subr.mxu0 0.0
        %1513 = vmatpush1.msra.mxu0 0.0
        %1514 = vmatprep.subr.mxu0 0.0
        %1515 = vmatpush1.msra.mxu0 0.0
        %1516 = vmatprep.subr.mxu0 0.0
        %1517 = vmatpush1.msra.mxu0 0.0
        %1518 = vmatprep.subr.mxu0 0.0
        %v1519 = vand.u32 %v356, 4294901760
        %1520 = vmatpush1.msra.mxu0 %v1519
        %1521 = vmatprep.subr.mxu0 0.0
        %v1522 = vand.u32 %v355, 4294901760
        %1523 = vmatpush1.msra.mxu0 %v1522
        %1524 = vmatprep.subr.mxu0 0.0
        %v1525 = vand.u32 %v354, 4294901760
        %1526 = vmatpush1.msra.mxu0 %v1525
        %1527 = vmatprep.subr.mxu0 0.0
        %v1528 = vand.u32 %v353, 4294901760
        %1529 = vmatpush1.msra.mxu0 %v1528
        %1530 = vmatprep.subr.mxu0 0.0
        %1531 = vmatpush2.msra.mxu0 0.0
        %1532 = vmatprep.subr.mxu0 0.0
        %1533 = vmatpush2.msra.mxu0 0.0
        %1534 = vmatprep.subr.mxu0 0.0
        %1535 = vmatpush2.msra.mxu0 0.0
        %1536 = vmatprep.subr.mxu0 0.0
        %1537 = vmatpush2.msra.mxu0 0.0
        %1538 = vmatprep.subr.mxu0 0.0
        %1539 = vmatpush2.msra.mxu0 0.0
        %1540 = vmatprep.subr.mxu0 0.0
        %1541 = vmatpush2.msra.mxu0 0.0
        %1542 = vmatprep.subr.mxu0 0.0
        %1543 = vmatpush2.msra.mxu0 0.0
        %1544 = vmatprep.subr.mxu0 0.0
        %1545 = vmatpush2.msra.mxu0 0.0
        %1546 = vmatprep.subr.mxu0 0.0
        %1547 = vmatpush2.msra.mxu0 0.0
        %1548 = vmatprep.subr.mxu0 0.0
        %1549 = vmatpush2.msra.mxu0 0.0
        %1550 = vmatprep.subr.mxu0 0.0
        %1551 = vmatpush2.msra.mxu0 0.0
        %1552 = vmatprep.subr.mxu0 0.0
        %1553 = vmatpush2.msra.mxu0 0.0
        %1554 = vmatprep.subr.mxu0 0.0
        %1555 = vmatpush2.msra.mxu0 0.0
        %1556 = vmatprep.subr.mxu0 0.0
        %1557 = vmatpush2.msra.mxu0 0.0
        %1558 = vmatprep.subr.mxu0 0.0
        %1559 = vmatpush2.msra.mxu0 0.0
        %1560 = vmatprep.subr.mxu0 0.0
        %1561 = vmatpush2.msra.mxu0 0.0
        %1562 = vmatprep.mubr.f32.mxu0 0.0
        %v1563 = vand.u32 %v1483, 4294901760
        %v1564 = vsub.f32 %v1483, %v1563
        %v1565 = vand.u32 %v1564, 4294901760
        %v1566 = vsub.f32 %v1564, %v1565
        %v1567 = vand.u32 %v1566, 4294901760
        %1568 = vmatmul.mubr.f32.gmra.mxu0 %v1567
        %v1569 = vpop.f32.mrf.mxu0
        %v1570 = vadd.f32 %v1465, %v1569
        %v1571 = vpop.f32.mrf.mxu0
        %1572 = vmatprep.mubr.f32.mxu0 0.0
        %v1573 = vand.u32 %v1486, 4294901760
        %v1574 = vsub.f32 %v1486, %v1573
        %v1575 = vand.u32 %v1574, 4294901760
        %v1576 = vsub.f32 %v1574, %v1575
        %v1577 = vand.u32 %v1576, 4294901760
        %1578 = vmatmul.mubr.f32.gmra.mxu0 %v1577
        %v1579 = vpop.f32.mrf.mxu0
        %v1580 = vadd.f32 %v1470, %v1579
        %v1581 = vpop.f32.mrf.mxu0
        %1582 = vmatprep.mubr.f32.mxu0 0.0
        %v1583 = vand.u32 %v1489, 4294901760
        %v1584 = vsub.f32 %v1489, %v1583
        %v1585 = vand.u32 %v1584, 4294901760
        %v1586 = vsub.f32 %v1584, %v1585
        %v1587 = vand.u32 %v1586, 4294901760
        %1588 = vmatmul.mubr.f32.gmra.mxu0 %v1587
        %v1589 = vpop.f32.mrf.mxu0
        %v1590 = vadd.f32 %v1475, %v1589
        %v1591 = vpop.f32.mrf.mxu0
        %1592 = vmatprep.mubr.f32.mxu0 0.0
        %v1593 = vand.u32 %v1492, 4294901760
        %v1594 = vsub.f32 %v1492, %v1593
        %v1595 = vand.u32 %v1594, 4294901760
        %v1596 = vsub.f32 %v1594, %v1595
        %v1597 = vand.u32 %v1596, 4294901760
        %1598 = vmatmul.mubr.f32.gmra.mxu0 %v1597
        %v1599 = vpop.f32.mrf.mxu0
        %v1600 = vadd.f32 %v1480, %v1599
        %v1601 = vpop.f32.mrf.mxu0
        %1602 = vdwg.mxu0
        %1603 = vmatprep.subr.mxu0 0.0
        %1604 = vmatpush1.msra.mxu0 0.0
        %1605 = vmatprep.subr.mxu0 0.0
        %1606 = vmatpush1.msra.mxu0 0.0
        %1607 = vmatprep.subr.mxu0 0.0
        %1608 = vmatpush1.msra.mxu0 0.0
        %1609 = vmatprep.subr.mxu0 0.0
        %1610 = vmatpush1.msra.mxu0 0.0
        %1611 = vmatprep.subr.mxu0 0.0
        %1612 = vmatpush1.msra.mxu0 0.0
        %1613 = vmatprep.subr.mxu0 0.0
        %1614 = vmatpush1.msra.mxu0 0.0
        %1615 = vmatprep.subr.mxu0 0.0
        %1616 = vmatpush1.msra.mxu0 0.0
        %1617 = vmatprep.subr.mxu0 0.0
        %1618 = vmatpush1.msra.mxu0 0.0
        %1619 = vmatprep.subr.mxu0 0.0
        %1620 = vmatpush1.msra.mxu0 0.0
        %1621 = vmatprep.subr.mxu0 0.0
        %1622 = vmatpush1.msra.mxu0 0.0
        %1623 = vmatprep.subr.mxu0 0.0
        %1624 = vmatpush1.msra.mxu0 0.0
        %1625 = vmatprep.subr.mxu0 0.0
        %1626 = vmatpush1.msra.mxu0 0.0
        %1627 = vmatprep.subr.mxu0 0.0
        %v1628 = vand.u32 %v356, 4294901760
        %v1629 = vsub.f32 %v356, %v1628
        %v1630 = vand.u32 %v1629, 4294901760
        %v1631 = vsub.f32 %v1629, %v1630
        %v1632 = vand.u32 %v1631, 4294901760
        %1633 = vmatpush1.msra.mxu0 %v1632
        %1634 = vmatprep.subr.mxu0 0.0
        %v1635 = vand.u32 %v355, 4294901760
        %v1636 = vsub.f32 %v355, %v1635
        %v1637 = vand.u32 %v1636, 4294901760
        %v1638 = vsub.f32 %v1636, %v1637
        %v1639 = vand.u32 %v1638, 4294901760
        %1640 = vmatpush1.msra.mxu0 %v1639
        %1641 = vmatprep.subr.mxu0 0.0
        %v1642 = vand.u32 %v354, 4294901760
        %v1643 = vsub.f32 %v354, %v1642
        %v1644 = vand.u32 %v1643, 4294901760
        %v1645 = vsub.f32 %v1643, %v1644
        %v1646 = vand.u32 %v1645, 4294901760
        %1647 = vmatpush1.msra.mxu0 %v1646
        %1648 = vmatprep.subr.mxu0 0.0
        %v1649 = vand.u32 %v353, 4294901760
        %v1650 = vsub.f32 %v353, %v1649
        %v1651 = vand.u32 %v1650, 4294901760
        %v1652 = vsub.f32 %v1650, %v1651
        %v1653 = vand.u32 %v1652, 4294901760
        %1654 = vmatpush1.msra.mxu0 %v1653
        %1655 = vmatprep.subr.mxu0 0.0
        %1656 = vmatpush2.msra.mxu0 0.0
        %1657 = vmatprep.subr.mxu0 0.0
        %1658 = vmatpush2.msra.mxu0 0.0
        %1659 = vmatprep.subr.mxu0 0.0
        %1660 = vmatpush2.msra.mxu0 0.0
        %1661 = vmatprep.subr.mxu0 0.0
        %1662 = vmatpush2.msra.mxu0 0.0
        %1663 = vmatprep.subr.mxu0 0.0
        %1664 = vmatpush2.msra.mxu0 0.0
        %1665 = vmatprep.subr.mxu0 0.0
        %1666 = vmatpush2.msra.mxu0 0.0
        %1667 = vmatprep.subr.mxu0 0.0
        %1668 = vmatpush2.msra.mxu0 0.0
        %1669 = vmatprep.subr.mxu0 0.0
        %1670 = vmatpush2.msra.mxu0 0.0
        %1671 = vmatprep.subr.mxu0 0.0
        %1672 = vmatpush2.msra.mxu0 0.0
        %1673 = vmatprep.subr.mxu0 0.0
        %1674 = vmatpush2.msra.mxu0 0.0
        %1675 = vmatprep.subr.mxu0 0.0
        %1676 = vmatpush2.msra.mxu0 0.0
        %1677 = vmatprep.subr.mxu0 0.0
        %1678 = vmatpush2.msra.mxu0 0.0
        %1679 = vmatprep.subr.mxu0 0.0
        %1680 = vmatpush2.msra.mxu0 0.0
        %1681 = vmatprep.subr.mxu0 0.0
        %1682 = vmatpush2.msra.mxu0 0.0
        %1683 = vmatprep.subr.mxu0 0.0
        %1684 = vmatpush2.msra.mxu0 0.0
        %1685 = vmatprep.subr.mxu0 0.0
        %1686 = vmatpush2.msra.mxu0 0.0
        %1687 = vmatprep.mubr.f32.mxu0 0.0
        %v1688 = vand.u32 %v1483, 4294901760
        %1689 = vmatmul.mubr.f32.gmra.mxu0 %v1688
        %v1690 = vpop.f32.mrf.mxu0
        %v1691 = vadd.f32 %v1570, %v1690
        %v1692 = vpop.f32.mrf.mxu0
        %1693 = vmatprep.mubr.f32.mxu0 0.0
        %v1694 = vand.u32 %v1486, 4294901760
        %1695 = vmatmul.mubr.f32.gmra.mxu0 %v1694
        %v1696 = vpop.f32.mrf.mxu0
        %v1697 = vadd.f32 %v1580, %v1696
        %v1698 = vpop.f32.mrf.mxu0
        %1699 = vmatprep.mubr.f32.mxu0 0.0
        %v1700 = vand.u32 %v1489, 4294901760
        %1701 = vmatmul.mubr.f32.gmra.mxu0 %v1700
        %v1702 = vpop.f32.mrf.mxu0
        %v1703 = vadd.f32 %v1590, %v1702
        %v1704 = vpop.f32.mrf.mxu0
        %1705 = vmatprep.mubr.f32.mxu0 0.0
        %v1706 = vand.u32 %v1492, 4294901760
        %1707 = vmatmul.mubr.f32.gmra.mxu0 %v1706
        %v1708 = vpop.f32.mrf.mxu0
        %v1709 = vadd.f32 %v1600, %v1708
        %v1710 = vpop.f32.mrf.mxu0
        %1711 = vdwg.mxu0
        %1712 = vmatprep.subr.mxu0 0.0
        %1713 = vmatpush1.msra.mxu0 0.0
        %1714 = vmatprep.subr.mxu0 0.0
        %1715 = vmatpush1.msra.mxu0 0.0
        %1716 = vmatprep.subr.mxu0 0.0
        %1717 = vmatpush1.msra.mxu0 0.0
        %1718 = vmatprep.subr.mxu0 0.0
        %1719 = vmatpush1.msra.mxu0 0.0
        %1720 = vmatprep.subr.mxu0 0.0
        %1721 = vmatpush1.msra.mxu0 0.0
        %1722 = vmatprep.subr.mxu0 0.0
        %1723 = vmatpush1.msra.mxu0 0.0
        %1724 = vmatprep.subr.mxu0 0.0
        %1725 = vmatpush1.msra.mxu0 0.0
        %1726 = vmatprep.subr.mxu0 0.0
        %1727 = vmatpush1.msra.mxu0 0.0
        %1728 = vmatprep.subr.mxu0 0.0
        %1729 = vmatpush1.msra.mxu0 0.0
        %1730 = vmatprep.subr.mxu0 0.0
        %1731 = vmatpush1.msra.mxu0 0.0
        %1732 = vmatprep.subr.mxu0 0.0
        %1733 = vmatpush1.msra.mxu0 0.0
        %1734 = vmatprep.subr.mxu0 0.0
        %1735 = vmatpush1.msra.mxu0 0.0
        %1736 = vmatprep.subr.mxu0 0.0
        %v1737 = vand.u32 %v356, 4294901760
        %v1738 = vsub.f32 %v356, %v1737
        %1739 = vmatpush1.msra.mxu0 %v1738
        %1740 = vmatprep.subr.mxu0 0.0
        %v1741 = vand.u32 %v355, 4294901760
        %v1742 = vsub.f32 %v355, %v1741
        %1743 = vmatpush1.msra.mxu0 %v1742
        %1744 = vmatprep.subr.mxu0 0.0
        %v1745 = vand.u32 %v354, 4294901760
        %v1746 = vsub.f32 %v354, %v1745
        %1747 = vmatpush1.msra.mxu0 %v1746
        %1748 = vmatprep.subr.mxu0 0.0
        %v1749 = vand.u32 %v353, 4294901760
        %v1750 = vsub.f32 %v353, %v1749
        %1751 = vmatpush1.msra.mxu0 %v1750
        %1752 = vmatprep.subr.mxu0 0.0
        %1753 = vmatpush2.msra.mxu0 0.0
        %1754 = vmatprep.subr.mxu0 0.0
        %1755 = vmatpush2.msra.mxu0 0.0
        %1756 = vmatprep.subr.mxu0 0.0
        %1757 = vmatpush2.msra.mxu0 0.0
        %1758 = vmatprep.subr.mxu0 0.0
        %1759 = vmatpush2.msra.mxu0 0.0
        %1760 = vmatprep.subr.mxu0 0.0
        %1761 = vmatpush2.msra.mxu0 0.0
        %1762 = vmatprep.subr.mxu0 0.0
        %1763 = vmatpush2.msra.mxu0 0.0
        %1764 = vmatprep.subr.mxu0 0.0
        %1765 = vmatpush2.msra.mxu0 0.0
        %1766 = vmatprep.subr.mxu0 0.0
        %1767 = vmatpush2.msra.mxu0 0.0
        %1768 = vmatprep.subr.mxu0 0.0
        %1769 = vmatpush2.msra.mxu0 0.0
        %1770 = vmatprep.subr.mxu0 0.0
        %1771 = vmatpush2.msra.mxu0 0.0
        %1772 = vmatprep.subr.mxu0 0.0
        %1773 = vmatpush2.msra.mxu0 0.0
        %1774 = vmatprep.subr.mxu0 0.0
        %1775 = vmatpush2.msra.mxu0 0.0
        %1776 = vmatprep.subr.mxu0 0.0
        %1777 = vmatpush2.msra.mxu0 0.0
        %1778 = vmatprep.subr.mxu0 0.0
        %1779 = vmatpush2.msra.mxu0 0.0
        %1780 = vmatprep.subr.mxu0 0.0
        %1781 = vmatpush2.msra.mxu0 0.0
        %1782 = vmatprep.subr.mxu0 0.0
        %1783 = vmatpush2.msra.mxu0 0.0
        %1784 = vmatprep.mubr.f32.mxu0 0.0
        %v1785 = vand.u32 %v1483, 4294901760
        %v1786 = vsub.f32 %v1483, %v1785
        %1787 = vmatmul.mubr.f32.gmra.mxu0 %v1786
        %v1788 = vpop.f32.mrf.mxu0
        %v1789 = vadd.f32 %v1691, %v1788
        %v1790 = vpop.f32.mrf.mxu0
        %1791 = vmatprep.mubr.f32.mxu0 0.0
        %v1792 = vand.u32 %v1486, 4294901760
        %v1793 = vsub.f32 %v1486, %v1792
        %1794 = vmatmul.mubr.f32.gmra.mxu0 %v1793
        %v1795 = vpop.f32.mrf.mxu0
        %v1796 = vadd.f32 %v1697, %v1795
        %v1797 = vpop.f32.mrf.mxu0
        %1798 = vmatprep.mubr.f32.mxu0 0.0
        %v1799 = vand.u32 %v1489, 4294901760
        %v1800 = vsub.f32 %v1489, %v1799
        %1801 = vmatmul.mubr.f32.gmra.mxu0 %v1800
        %v1802 = vpop.f32.mrf.mxu0
        %v1803 = vadd.f32 %v1703, %v1802
        %v1804 = vpop.f32.mrf.mxu0
        %1805 = vmatprep.mubr.f32.mxu0 0.0
        %v1806 = vand.u32 %v1492, 4294901760
        %v1807 = vsub.f32 %v1492, %v1806
        %1808 = vmatmul.mubr.f32.gmra.mxu0 %v1807
        %v1809 = vpop.f32.mrf.mxu0
        %v1810 = vadd.f32 %v1709, %v1809
        %v1811 = vpop.f32.mrf.mxu0
        %1812 = vdwg.mxu0
        %1813 = vmatprep.subr.mxu0 0.0
        %1814 = vmatpush1.msra.mxu0 0.0
        %1815 = vmatprep.subr.mxu0 0.0
        %1816 = vmatpush1.msra.mxu0 0.0
        %1817 = vmatprep.subr.mxu0 0.0
        %1818 = vmatpush1.msra.mxu0 0.0
        %1819 = vmatprep.subr.mxu0 0.0
        %1820 = vmatpush1.msra.mxu0 0.0
        %1821 = vmatprep.subr.mxu0 0.0
        %1822 = vmatpush1.msra.mxu0 0.0
        %1823 = vmatprep.subr.mxu0 0.0
        %1824 = vmatpush1.msra.mxu0 0.0
        %1825 = vmatprep.subr.mxu0 0.0
        %1826 = vmatpush1.msra.mxu0 0.0
        %1827 = vmatprep.subr.mxu0 0.0
        %1828 = vmatpush1.msra.mxu0 0.0
        %1829 = vmatprep.subr.mxu0 0.0
        %1830 = vmatpush1.msra.mxu0 0.0
        %1831 = vmatprep.subr.mxu0 0.0
        %1832 = vmatpush1.msra.mxu0 0.0
        %1833 = vmatprep.subr.mxu0 0.0
        %1834 = vmatpush1.msra.mxu0 0.0
        %1835 = vmatprep.subr.mxu0 0.0
        %1836 = vmatpush1.msra.mxu0 0.0
        %1837 = vmatprep.subr.mxu0 0.0
        %v1838 = vand.u32 %v356, 4294901760
        %1839 = vmatpush1.msra.mxu0 %v1838
        %1840 = vmatprep.subr.mxu0 0.0
        %v1841 = vand.u32 %v355, 4294901760
        %1842 = vmatpush1.msra.mxu0 %v1841
        %1843 = vmatprep.subr.mxu0 0.0
        %v1844 = vand.u32 %v354, 4294901760
        %1845 = vmatpush1.msra.mxu0 %v1844
        %1846 = vmatprep.subr.mxu0 0.0
        %v1847 = vand.u32 %v353, 4294901760
        %1848 = vmatpush1.msra.mxu0 %v1847
        %1849 = vmatprep.subr.mxu0 0.0
        %1850 = vmatpush2.msra.mxu0 0.0
        %1851 = vmatprep.subr.mxu0 0.0
        %1852 = vmatpush2.msra.mxu0 0.0
        %1853 = vmatprep.subr.mxu0 0.0
        %1854 = vmatpush2.msra.mxu0 0.0
        %1855 = vmatprep.subr.mxu0 0.0
        %1856 = vmatpush2.msra.mxu0 0.0
        %1857 = vmatprep.subr.mxu0 0.0
        %1858 = vmatpush2.msra.mxu0 0.0
        %1859 = vmatprep.subr.mxu0 0.0
        %1860 = vmatpush2.msra.mxu0 0.0
        %1861 = vmatprep.subr.mxu0 0.0
        %1862 = vmatpush2.msra.mxu0 0.0
        %1863 = vmatprep.subr.mxu0 0.0
        %1864 = vmatpush2.msra.mxu0 0.0
        %1865 = vmatprep.subr.mxu0 0.0
        %1866 = vmatpush2.msra.mxu0 0.0
        %1867 = vmatprep.subr.mxu0 0.0
        %1868 = vmatpush2.msra.mxu0 0.0
        %1869 = vmatprep.subr.mxu0 0.0
        %1870 = vmatpush2.msra.mxu0 0.0
        %1871 = vmatprep.subr.mxu0 0.0
        %1872 = vmatpush2.msra.mxu0 0.0
        %1873 = vmatprep.subr.mxu0 0.0
        %1874 = vmatpush2.msra.mxu0 0.0
        %1875 = vmatprep.subr.mxu0 0.0
        %1876 = vmatpush2.msra.mxu0 0.0
        %1877 = vmatprep.subr.mxu0 0.0
        %1878 = vmatpush2.msra.mxu0 0.0
        %1879 = vmatprep.subr.mxu0 0.0
        %1880 = vmatpush2.msra.mxu0 0.0
        %1881 = vmatprep.mubr.f32.mxu0 0.0
        %v1882 = vand.u32 %v1483, 4294901760
        %v1883 = vsub.f32 %v1483, %v1882
        %v1884 = vand.u32 %v1883, 4294901760
        %1885 = vmatmul.mubr.f32.gmra.mxu0 %v1884
        %v1886 = vpop.f32.mrf.mxu0
        %v1887 = vadd.f32 %v1789, %v1886
        %v1888 = vpop.f32.mrf.mxu0
        %1889 = vmatprep.mubr.f32.mxu0 0.0
        %v1890 = vand.u32 %v1486, 4294901760
        %v1891 = vsub.f32 %v1486, %v1890
        %v1892 = vand.u32 %v1891, 4294901760
        %1893 = vmatmul.mubr.f32.gmra.mxu0 %v1892
        %v1894 = vpop.f32.mrf.mxu0
        %v1895 = vadd.f32 %v1796, %v1894
        %v1896 = vpop.f32.mrf.mxu0
        %1897 = vmatprep.mubr.f32.mxu0 0.0
        %v1898 = vand.u32 %v1489, 4294901760
        %v1899 = vsub.f32 %v1489, %v1898
        %v1900 = vand.u32 %v1899, 4294901760
        %1901 = vmatmul.mubr.f32.gmra.mxu0 %v1900
        %v1902 = vpop.f32.mrf.mxu0
        %v1903 = vadd.f32 %v1803, %v1902
        %v1904 = vpop.f32.mrf.mxu0
        %1905 = vmatprep.mubr.f32.mxu0 0.0
        %v1906 = vand.u32 %v1492, 4294901760
        %v1907 = vsub.f32 %v1492, %v1906
        %v1908 = vand.u32 %v1907, 4294901760
        %1909 = vmatmul.mubr.f32.gmra.mxu0 %v1908
        %v1910 = vpop.f32.mrf.mxu0
        %v1911 = vadd.f32 %v1810, %v1910
        %v1912 = vpop.f32.mrf.mxu0
        %1913 = vdwg.mxu0
        %1914 = vmatprep.subr.mxu0 0.0
        %1915 = vmatpush1.msra.mxu0 0.0
        %1916 = vmatprep.subr.mxu0 0.0
        %1917 = vmatpush1.msra.mxu0 0.0
        %1918 = vmatprep.subr.mxu0 0.0
        %1919 = vmatpush1.msra.mxu0 0.0
        %1920 = vmatprep.subr.mxu0 0.0
        %1921 = vmatpush1.msra.mxu0 0.0
        %1922 = vmatprep.subr.mxu0 0.0
        %1923 = vmatpush1.msra.mxu0 0.0
        %1924 = vmatprep.subr.mxu0 0.0
        %1925 = vmatpush1.msra.mxu0 0.0
        %1926 = vmatprep.subr.mxu0 0.0
        %1927 = vmatpush1.msra.mxu0 0.0
        %1928 = vmatprep.subr.mxu0 0.0
        %1929 = vmatpush1.msra.mxu0 0.0
        %1930 = vmatprep.subr.mxu0 0.0
        %1931 = vmatpush1.msra.mxu0 0.0
        %1932 = vmatprep.subr.mxu0 0.0
        %1933 = vmatpush1.msra.mxu0 0.0
        %1934 = vmatprep.subr.mxu0 0.0
        %1935 = vmatpush1.msra.mxu0 0.0
        %1936 = vmatprep.subr.mxu0 0.0
        %1937 = vmatpush1.msra.mxu0 0.0
        %1938 = vmatprep.subr.mxu0 0.0
        %v1939 = vand.u32 %v356, 4294901760
        %v1940 = vsub.f32 %v356, %v1939
        %v1941 = vand.u32 %v1940, 4294901760
        %1942 = vmatpush1.msra.mxu0 %v1941
        %1943 = vmatprep.subr.mxu0 0.0
        %v1944 = vand.u32 %v355, 4294901760
        %v1945 = vsub.f32 %v355, %v1944
        %v1946 = vand.u32 %v1945, 4294901760
        %1947 = vmatpush1.msra.mxu0 %v1946
        %1948 = vmatprep.subr.mxu0 0.0
        %v1949 = vand.u32 %v354, 4294901760
        %v1950 = vsub.f32 %v354, %v1949
        %v1951 = vand.u32 %v1950, 4294901760
        %1952 = vmatpush1.msra.mxu0 %v1951
        %1953 = vmatprep.subr.mxu0 0.0
        %v1954 = vand.u32 %v353, 4294901760
        %v1955 = vsub.f32 %v353, %v1954
        %v1956 = vand.u32 %v1955, 4294901760
        %1957 = vmatpush1.msra.mxu0 %v1956
        %1958 = vmatprep.subr.mxu0 0.0
        %1959 = vmatpush2.msra.mxu0 0.0
        %1960 = vmatprep.subr.mxu0 0.0
        %1961 = vmatpush2.msra.mxu0 0.0
        %1962 = vmatprep.subr.mxu0 0.0
        %1963 = vmatpush2.msra.mxu0 0.0
        %1964 = vmatprep.subr.mxu0 0.0
        %1965 = vmatpush2.msra.mxu0 0.0
        %1966 = vmatprep.subr.mxu0 0.0
        %1967 = vmatpush2.msra.mxu0 0.0
        %1968 = vmatprep.subr.mxu0 0.0
        %1969 = vmatpush2.msra.mxu0 0.0
        %1970 = vmatprep.subr.mxu0 0.0
        %1971 = vmatpush2.msra.mxu0 0.0
        %1972 = vmatprep.subr.mxu0 0.0
        %1973 = vmatpush2.msra.mxu0 0.0
        %1974 = vmatprep.subr.mxu0 0.0
        %1975 = vmatpush2.msra.mxu0 0.0
        %1976 = vmatprep.subr.mxu0 0.0
        %1977 = vmatpush2.msra.mxu0 0.0
        %1978 = vmatprep.subr.mxu0 0.0
        %1979 = vmatpush2.msra.mxu0 0.0
        %1980 = vmatprep.subr.mxu0 0.0
        %1981 = vmatpush2.msra.mxu0 0.0
        %1982 = vmatprep.subr.mxu0 0.0
        %1983 = vmatpush2.msra.mxu0 0.0
        %1984 = vmatprep.subr.mxu0 0.0
        %1985 = vmatpush2.msra.mxu0 0.0
        %1986 = vmatprep.subr.mxu0 0.0
        %1987 = vmatpush2.msra.mxu0 0.0
        %1988 = vmatprep.subr.mxu0 0.0
        %1989 = vmatpush2.msra.mxu0 0.0
        %1990 = vmatprep.mubr.f32.mxu0 0.0
        %v1991 = vand.u32 %v1483, 4294901760
        %1992 = vmatmul.mubr.f32.gmra.mxu0 %v1991
        %v1993 = vpop.f32.mrf.mxu0
        %v1994 = vadd.f32 %v1887, %v1993
        %v1995 = vpop.f32.mrf.mxu0
        %1996 = vmatprep.mubr.f32.mxu0 0.0
        %v1997 = vand.u32 %v1486, 4294901760
        %1998 = vmatmul.mubr.f32.gmra.mxu0 %v1997
        %v1999 = vpop.f32.mrf.mxu0
        %v2000 = vadd.f32 %v1895, %v1999
        %v2001 = vpop.f32.mrf.mxu0
        %2002 = vmatprep.mubr.f32.mxu0 0.0
        %v2003 = vand.u32 %v1489, 4294901760
        %2004 = vmatmul.mubr.f32.gmra.mxu0 %v2003
        %v2005 = vpop.f32.mrf.mxu0
        %v2006 = vadd.f32 %v1903, %v2005
        %v2007 = vpop.f32.mrf.mxu0
        %2008 = vmatprep.mubr.f32.mxu0 0.0
        %v2009 = vand.u32 %v1492, 4294901760
        %2010 = vmatmul.mubr.f32.gmra.mxu0 %v2009
        %v2011 = vpop.f32.mrf.mxu0
        %v2012 = vadd.f32 %v1911, %v2011
        %v2013 = vpop.f32.mrf.mxu0
        %2014 = vdwg.mxu0
        %2015 = vmatprep.subr.mxu0 0.0
        %2016 = vmatpush1.msra.mxu0 0.0
        %2017 = vmatprep.subr.mxu0 0.0
        %2018 = vmatpush1.msra.mxu0 0.0
        %2019 = vmatprep.subr.mxu0 0.0
        %2020 = vmatpush1.msra.mxu0 0.0
        %2021 = vmatprep.subr.mxu0 0.0
        %2022 = vmatpush1.msra.mxu0 0.0
        %2023 = vmatprep.subr.mxu0 0.0
        %2024 = vmatpush1.msra.mxu0 0.0
        %2025 = vmatprep.subr.mxu0 0.0
        %2026 = vmatpush1.msra.mxu0 0.0
        %2027 = vmatprep.subr.mxu0 0.0
        %2028 = vmatpush1.msra.mxu0 0.0
        %2029 = vmatprep.subr.mxu0 0.0
        %2030 = vmatpush1.msra.mxu0 0.0
        %2031 = vmatprep.subr.mxu0 0.0
        %2032 = vmatpush1.msra.mxu0 0.0
        %2033 = vmatprep.subr.mxu0 0.0
        %2034 = vmatpush1.msra.mxu0 0.0
        %2035 = vmatprep.subr.mxu0 0.0
        %2036 = vmatpush1.msra.mxu0 0.0
        %2037 = vmatprep.subr.mxu0 0.0
        %2038 = vmatpush1.msra.mxu0 0.0
        %2039 = vmatprep.subr.mxu0 0.0
        %v2040 = vand.u32 %v356, 4294901760
        %2041 = vmatpush1.msra.mxu0 %v2040
        %2042 = vmatprep.subr.mxu0 0.0
        %v2043 = vand.u32 %v355, 4294901760
        %2044 = vmatpush1.msra.mxu0 %v2043
        %2045 = vmatprep.subr.mxu0 0.0
        %v2046 = vand.u32 %v354, 4294901760
        %2047 = vmatpush1.msra.mxu0 %v2046
        %2048 = vmatprep.subr.mxu0 0.0
        %v2049 = vand.u32 %v353, 4294901760
        %2050 = vmatpush1.msra.mxu0 %v2049
        %2051 = vmatprep.subr.mxu0 0.0
        %2052 = vmatpush2.msra.mxu0 0.0
        %2053 = vmatprep.subr.mxu0 0.0
        %2054 = vmatpush2.msra.mxu0 0.0
        %2055 = vmatprep.subr.mxu0 0.0
        %2056 = vmatpush2.msra.mxu0 0.0
        %2057 = vmatprep.subr.mxu0 0.0
        %2058 = vmatpush2.msra.mxu0 0.0
        %2059 = vmatprep.subr.mxu0 0.0
        %2060 = vmatpush2.msra.mxu0 0.0
        %2061 = vmatprep.subr.mxu0 0.0
        %2062 = vmatpush2.msra.mxu0 0.0
        %2063 = vmatprep.subr.mxu0 0.0
        %2064 = vmatpush2.msra.mxu0 0.0
        %2065 = vmatprep.subr.mxu0 0.0
        %2066 = vmatpush2.msra.mxu0 0.0
        %2067 = vmatprep.subr.mxu0 0.0
        %2068 = vmatpush2.msra.mxu0 0.0
        %2069 = vmatprep.subr.mxu0 0.0
        %2070 = vmatpush2.msra.mxu0 0.0
        %2071 = vmatprep.subr.mxu0 0.0
        %2072 = vmatpush2.msra.mxu0 0.0
        %2073 = vmatprep.subr.mxu0 0.0
        %2074 = vmatpush2.msra.mxu0 0.0
        %2075 = vmatprep.subr.mxu0 0.0
        %2076 = vmatpush2.msra.mxu0 0.0
        %2077 = vmatprep.subr.mxu0 0.0
        %2078 = vmatpush2.msra.mxu0 0.0
        %2079 = vmatprep.subr.mxu0 0.0
        %2080 = vmatpush2.msra.mxu0 0.0
        %2081 = vmatprep.subr.mxu0 0.0
        %2082 = vmatpush2.msra.mxu0 0.0
        %2083 = vmatprep.mubr.f32.mxu0 0.0
        %v2084 = vand.u32 %v1483, 4294901760
        %2085 = vmatmul.mubr.f32.gmra.mxu0 %v2084
        %v2086 = vpop.f32.mrf.mxu0
        %v2087 = vadd.f32 %v1994, %v2086
        %v2088 = vpop.f32.mrf.mxu0
        %2089 = vmatprep.mubr.f32.mxu0 0.0
        %v2090 = vand.u32 %v1486, 4294901760
        %2091 = vmatmul.mubr.f32.gmra.mxu0 %v2090
        %v2092 = vpop.f32.mrf.mxu0
        %v2093 = vadd.f32 %v2000, %v2092
        %v2094 = vpop.f32.mrf.mxu0
        %2095 = vmatprep.mubr.f32.mxu0 0.0
        %v2096 = vand.u32 %v1489, 4294901760
        %2097 = vmatmul.mubr.f32.gmra.mxu0 %v2096
        %v2098 = vpop.f32.mrf.mxu0
        %v2099 = vadd.f32 %v2006, %v2098
        %v2100 = vpop.f32.mrf.mxu0
        %2101 = vmatprep.mubr.f32.mxu0 0.0
        %v2102 = vand.u32 %v1492, 4294901760
        %2103 = vmatmul.mubr.f32.gmra.mxu0 %v2102
        %v2104 = vpop.f32.mrf.mxu0
        %v2105 = vadd.f32 %v2012, %v2104
        %v2106 = vpop.f32.mrf.mxu0
        %2107 = vdwg.mxu0
        %2108 = vxpose.xlu0.b32.start [1/16] %v1445, 128
        %2109 = vxpose.xlu0.b32.cont [2/16] %v1451, 128
        %2110 = vxpose.xlu0.b32.cont [3/16] 0.0, 128
        %2111 = vxpose.xlu0.b32.cont [4/16] 0.0, 128
        %2112 = vxpose.xlu0.b32.cont [5/16] 0.0, 128
        %2113 = vxpose.xlu0.b32.cont [6/16] 0.0, 128
        %2114 = vxpose.xlu0.b32.cont [7/16] 0.0, 128
        %2115 = vxpose.xlu0.b32.cont [8/16] 0.0, 128
        %2116 = vxpose.xlu0.b32.cont [9/16] 0.0, 128
        %2117 = vxpose.xlu0.b32.cont [10/16] 0.0, 128
        %2118 = vxpose.xlu0.b32.cont [11/16] 0.0, 128
        %2119 = vxpose.xlu0.b32.cont [12/16] 0.0, 128
        %2120 = vxpose.xlu0.b32.cont [13/16] 0.0, 128
        %2121 = vxpose.xlu0.b32.cont [14/16] 0.0, 128
        %2122 = vxpose.xlu0.b32.cont [15/16] 0.0, 128
        %2123 = vxpose.xlu0.b32.end [16/16] 0.0, 128
        %v2124 = vpop.trf.xlu0
        %v2125 = vpop.trf.xlu0
        %v2126 = vpop.trf.xlu0
        %v2127 = vpop.trf.xlu0
        %v2128 = vpop.trf.xlu0
        %v2129 = vpop.trf.xlu0
        %v2130 = vpop.trf.xlu0
        %v2131 = vpop.trf.xlu0
        %v2132 = vpop.trf.xlu0
        %v2133 = vpop.trf.xlu0
        %v2134 = vpop.trf.xlu0
        %v2135 = vpop.trf.xlu0
        %v2136 = vpop.trf.xlu0
        %v2137 = vpop.trf.xlu0
        %v2138 = vpop.trf.xlu0
        %v2139 = vpop.trf.xlu0
        %vm2140 = vcmask 130048
        %v2142 = vsel %vm2140, %v2124, 0
        %2144 = vmatprep.subr.mxu0 0.0
        %2145 = vmatpush1.msra.mxu0 0.0
        %2146 = vmatprep.subr.mxu0 0.0
        %2147 = vmatpush1.msra.mxu0 0.0
        %2148 = vmatprep.subr.mxu0 0.0
        %2149 = vmatpush1.msra.mxu0 0.0
        %2150 = vmatprep.subr.mxu0 0.0
        %2151 = vmatpush1.msra.mxu0 0.0
        %2152 = vmatprep.subr.mxu0 0.0
        %2153 = vmatpush1.msra.mxu0 0.0
        %2154 = vmatprep.subr.mxu0 0.0
        %2155 = vmatpush1.msra.mxu0 0.0
        %2156 = vmatprep.subr.mxu0 0.0
        %2157 = vmatpush1.msra.mxu0 0.0
        %2158 = vmatprep.subr.mxu0 0.0
        %2159 = vmatpush1.msra.mxu0 0.0
        %2160 = vmatprep.subr.mxu0 0.0
        %2161 = vmatpush1.msra.mxu0 0.0
        %2162 = vmatprep.subr.mxu0 0.0
        %2163 = vmatpush1.msra.mxu0 0.0
        %2164 = vmatprep.subr.mxu0 0.0
        %2165 = vmatpush1.msra.mxu0 0.0
        %2166 = vmatprep.subr.mxu0 0.0
        %2167 = vmatpush1.msra.mxu0 0.0
        %2168 = vmatprep.subr.mxu0 0.0
        %2169 = vmatpush1.msra.mxu0 0.0
        %2170 = vmatprep.subr.mxu0 0.0
        %2171 = vmatpush1.msra.mxu0 0.0
        %2172 = vmatprep.subr.mxu0 0.0
        %v2173 = vand.u32 %v903, 4294901760
        %2174 = vmatpush1.msra.mxu0 %v2173
        %2175 = vmatprep.subr.mxu0 0.0
        %v2176 = vand.u32 %v897, 4294901760
        %2177 = vmatpush1.msra.mxu0 %v2176
        %2178 = vmatprep.subr.mxu0 0.0
        %2179 = vmatpush2.msra.mxu0 0.0
        %2180 = vmatprep.subr.mxu0 0.0
        %2181 = vmatpush2.msra.mxu0 0.0
        %2182 = vmatprep.subr.mxu0 0.0
        %2183 = vmatpush2.msra.mxu0 0.0
        %2184 = vmatprep.subr.mxu0 0.0
        %2185 = vmatpush2.msra.mxu0 0.0
        %2186 = vmatprep.subr.mxu0 0.0
        %2187 = vmatpush2.msra.mxu0 0.0
        %2188 = vmatprep.subr.mxu0 0.0
        %2189 = vmatpush2.msra.mxu0 0.0
        %2190 = vmatprep.subr.mxu0 0.0
        %2191 = vmatpush2.msra.mxu0 0.0
        %2192 = vmatprep.subr.mxu0 0.0
        %2193 = vmatpush2.msra.mxu0 0.0
        %2194 = vmatprep.subr.mxu0 0.0
        %2195 = vmatpush2.msra.mxu0 0.0
        %2196 = vmatprep.subr.mxu0 0.0
        %2197 = vmatpush2.msra.mxu0 0.0
        %2198 = vmatprep.subr.mxu0 0.0
        %2199 = vmatpush2.msra.mxu0 0.0
        %2200 = vmatprep.subr.mxu0 0.0
        %2201 = vmatpush2.msra.mxu0 0.0
        %2202 = vmatprep.subr.mxu0 0.0
        %2203 = vmatpush2.msra.mxu0 0.0
        %2204 = vmatprep.subr.mxu0 0.0
        %2205 = vmatpush2.msra.mxu0 0.0
        %2206 = vmatprep.subr.mxu0 0.0
        %2207 = vmatpush2.msra.mxu0 0.0
        %2208 = vmatprep.subr.mxu0 0.0
        %2209 = vmatpush2.msra.mxu0 0.0
        %2210 = vmatprep.mubr.f32.mxu0 0.0
        %v2211 = vand.u32 %v2142, 4294901760
        %v2212 = vsub.f32 %v2142, %v2211
        %v2213 = vand.u32 %v2212, 4294901760
        %v2214 = vsub.f32 %v2212, %v2213
        %v2215 = vand.u32 %v2214, 4294901760
        %2216 = vmatmul.mubr.f32.gmra.mxu0 %v2215
        %v2217 = vpop.f32.mrf.mxu0
        %v2218 = vadd.f32 0.0, %v2217
        %v2219 = vpop.f32.mrf.mxu0
        %2220 = vdwg.mxu0
        %2221 = vmatprep.subr.mxu0 0.0
        %2222 = vmatpush1.msra.mxu0 0.0
        %2223 = vmatprep.subr.mxu0 0.0
        %2224 = vmatpush1.msra.mxu0 0.0
        %2225 = vmatprep.subr.mxu0 0.0
        %2226 = vmatpush1.msra.mxu0 0.0
        %2227 = vmatprep.subr.mxu0 0.0
        %2228 = vmatpush1.msra.mxu0 0.0
        %2229 = vmatprep.subr.mxu0 0.0
        %2230 = vmatpush1.msra.mxu0 0.0
        %2231 = vmatprep.subr.mxu0 0.0
        %2232 = vmatpush1.msra.mxu0 0.0
        %2233 = vmatprep.subr.mxu0 0.0
        %2234 = vmatpush1.msra.mxu0 0.0
        %2235 = vmatprep.subr.mxu0 0.0
        %2236 = vmatpush1.msra.mxu0 0.0
        %2237 = vmatprep.subr.mxu0 0.0
        %2238 = vmatpush1.msra.mxu0 0.0
        %2239 = vmatprep.subr.mxu0 0.0
        %2240 = vmatpush1.msra.mxu0 0.0
        %2241 = vmatprep.subr.mxu0 0.0
        %2242 = vmatpush1.msra.mxu0 0.0
        %2243 = vmatprep.subr.mxu0 0.0
        %2244 = vmatpush1.msra.mxu0 0.0
        %2245 = vmatprep.subr.mxu0 0.0
        %2246 = vmatpush1.msra.mxu0 0.0
        %2247 = vmatprep.subr.mxu0 0.0
        %2248 = vmatpush1.msra.mxu0 0.0
        %2249 = vmatprep.subr.mxu0 0.0
        %v2250 = vand.u32 %v903, 4294901760
        %v2251 = vsub.f32 %v903, %v2250
        %v2252 = vand.u32 %v2251, 4294901760
        %v2253 = vsub.f32 %v2251, %v2252
        %v2254 = vand.u32 %v2253, 4294901760
        %2255 = vmatpush1.msra.mxu0 %v2254
        %2256 = vmatprep.subr.mxu0 0.0
        %v2257 = vand.u32 %v897, 4294901760
        %v2258 = vsub.f32 %v897, %v2257
        %v2259 = vand.u32 %v2258, 4294901760
        %v2260 = vsub.f32 %v2258, %v2259
        %v2261 = vand.u32 %v2260, 4294901760
        %2262 = vmatpush1.msra.mxu0 %v2261
        %2263 = vmatprep.subr.mxu0 0.0
        %2264 = vmatpush2.msra.mxu0 0.0
        %2265 = vmatprep.subr.mxu0 0.0
        %2266 = vmatpush2.msra.mxu0 0.0
        %2267 = vmatprep.subr.mxu0 0.0
        %2268 = vmatpush2.msra.mxu0 0.0
        %2269 = vmatprep.subr.mxu0 0.0
        %2270 = vmatpush2.msra.mxu0 0.0
        %2271 = vmatprep.subr.mxu0 0.0
        %2272 = vmatpush2.msra.mxu0 0.0
        %2273 = vmatprep.subr.mxu0 0.0
        %2274 = vmatpush2.msra.mxu0 0.0
        %2275 = vmatprep.subr.mxu0 0.0
        %2276 = vmatpush2.msra.mxu0 0.0
        %2277 = vmatprep.subr.mxu0 0.0
        %2278 = vmatpush2.msra.mxu0 0.0
        %2279 = vmatprep.subr.mxu0 0.0
        %2280 = vmatpush2.msra.mxu0 0.0
        %2281 = vmatprep.subr.mxu0 0.0
        %2282 = vmatpush2.msra.mxu0 0.0
        %2283 = vmatprep.subr.mxu0 0.0
        %2284 = vmatpush2.msra.mxu0 0.0
        %2285 = vmatprep.subr.mxu0 0.0
        %2286 = vmatpush2.msra.mxu0 0.0
        %2287 = vmatprep.subr.mxu0 0.0
        %2288 = vmatpush2.msra.mxu0 0.0
        %2289 = vmatprep.subr.mxu0 0.0
        %2290 = vmatpush2.msra.mxu0 0.0
        %2291 = vmatprep.subr.mxu0 0.0
        %2292 = vmatpush2.msra.mxu0 0.0
        %2293 = vmatprep.subr.mxu0 0.0
        %2294 = vmatpush2.msra.mxu0 0.0
        %2295 = vmatprep.mubr.f32.mxu0 0.0
        %v2296 = vand.u32 %v2142, 4294901760
        %2297 = vmatmul.mubr.f32.gmra.mxu0 %v2296
        %v2298 = vpop.f32.mrf.mxu0
        %v2299 = vadd.f32 %v2218, %v2298
        %v2300 = vpop.f32.mrf.mxu0
        %2301 = vdwg.mxu0
        %2302 = vmatprep.subr.mxu0 0.0
        %2303 = vmatpush1.msra.mxu0 0.0
        %2304 = vmatprep.subr.mxu0 0.0
        %2305 = vmatpush1.msra.mxu0 0.0
        %2306 = vmatprep.subr.mxu0 0.0
        %2307 = vmatpush1.msra.mxu0 0.0
        %2308 = vmatprep.subr.mxu0 0.0
        %2309 = vmatpush1.msra.mxu0 0.0
        %2310 = vmatprep.subr.mxu0 0.0
        %2311 = vmatpush1.msra.mxu0 0.0
        %2312 = vmatprep.subr.mxu0 0.0
        %2313 = vmatpush1.msra.mxu0 0.0
        %2314 = vmatprep.subr.mxu0 0.0
        %2315 = vmatpush1.msra.mxu0 0.0
        %2316 = vmatprep.subr.mxu0 0.0
        %2317 = vmatpush1.msra.mxu0 0.0
        %2318 = vmatprep.subr.mxu0 0.0
        %2319 = vmatpush1.msra.mxu0 0.0
        %2320 = vmatprep.subr.mxu0 0.0
        %2321 = vmatpush1.msra.mxu0 0.0
        %2322 = vmatprep.subr.mxu0 0.0
        %2323 = vmatpush1.msra.mxu0 0.0
        %2324 = vmatprep.subr.mxu0 0.0
        %2325 = vmatpush1.msra.mxu0 0.0
        %2326 = vmatprep.subr.mxu0 0.0
        %2327 = vmatpush1.msra.mxu0 0.0
        %2328 = vmatprep.subr.mxu0 0.0
        %2329 = vmatpush1.msra.mxu0 0.0
        %2330 = vmatprep.subr.mxu0 0.0
        %v2331 = vand.u32 %v903, 4294901760
        %v2332 = vsub.f32 %v903, %v2331
        %2333 = vmatpush1.msra.mxu0 %v2332
        %2334 = vmatprep.subr.mxu0 0.0
        %v2335 = vand.u32 %v897, 4294901760
        %v2336 = vsub.f32 %v897, %v2335
        %2337 = vmatpush1.msra.mxu0 %v2336
        %2338 = vmatprep.subr.mxu0 0.0
        %2339 = vmatpush2.msra.mxu0 0.0
        %2340 = vmatprep.subr.mxu0 0.0
        %2341 = vmatpush2.msra.mxu0 0.0
        %2342 = vmatprep.subr.mxu0 0.0
        %2343 = vmatpush2.msra.mxu0 0.0
        %2344 = vmatprep.subr.mxu0 0.0
        %2345 = vmatpush2.msra.mxu0 0.0
        %2346 = vmatprep.subr.mxu0 0.0
        %2347 = vmatpush2.msra.mxu0 0.0
        %2348 = vmatprep.subr.mxu0 0.0
        %2349 = vmatpush2.msra.mxu0 0.0
        %2350 = vmatprep.subr.mxu0 0.0
        %2351 = vmatpush2.msra.mxu0 0.0
        %2352 = vmatprep.subr.mxu0 0.0
        %2353 = vmatpush2.msra.mxu0 0.0
        %2354 = vmatprep.subr.mxu0 0.0
        %2355 = vmatpush2.msra.mxu0 0.0
        %2356 = vmatprep.subr.mxu0 0.0
        %2357 = vmatpush2.msra.mxu0 0.0
        %2358 = vmatprep.subr.mxu0 0.0
        %2359 = vmatpush2.msra.mxu0 0.0
        %2360 = vmatprep.subr.mxu0 0.0
        %2361 = vmatpush2.msra.mxu0 0.0
        %2362 = vmatprep.subr.mxu0 0.0
        %2363 = vmatpush2.msra.mxu0 0.0
        %2364 = vmatprep.subr.mxu0 0.0
        %2365 = vmatpush2.msra.mxu0 0.0
        %2366 = vmatprep.subr.mxu0 0.0
        %2367 = vmatpush2.msra.mxu0 0.0
        %2368 = vmatprep.subr.mxu0 0.0
        %2369 = vmatpush2.msra.mxu0 0.0
        %2370 = vmatprep.mubr.f32.mxu0 0.0
        %v2371 = vand.u32 %v2142, 4294901760
        %v2372 = vsub.f32 %v2142, %v2371
        %2373 = vmatmul.mubr.f32.gmra.mxu0 %v2372
        %v2374 = vpop.f32.mrf.mxu0
        %v2375 = vadd.f32 %v2299, %v2374
        %v2376 = vpop.f32.mrf.mxu0
        %2377 = vdwg.mxu0
        %2378 = vmatprep.subr.mxu0 0.0
        %2379 = vmatpush1.msra.mxu0 0.0
        %2380 = vmatprep.subr.mxu0 0.0
        %2381 = vmatpush1.msra.mxu0 0.0
        %2382 = vmatprep.subr.mxu0 0.0
        %2383 = vmatpush1.msra.mxu0 0.0
        %2384 = vmatprep.subr.mxu0 0.0
        %2385 = vmatpush1.msra.mxu0 0.0
        %2386 = vmatprep.subr.mxu0 0.0
        %2387 = vmatpush1.msra.mxu0 0.0
        %2388 = vmatprep.subr.mxu0 0.0
        %2389 = vmatpush1.msra.mxu0 0.0
        %2390 = vmatprep.subr.mxu0 0.0
        %2391 = vmatpush1.msra.mxu0 0.0
        %2392 = vmatprep.subr.mxu0 0.0
        %2393 = vmatpush1.msra.mxu0 0.0
        %2394 = vmatprep.subr.mxu0 0.0
        %2395 = vmatpush1.msra.mxu0 0.0
        %2396 = vmatprep.subr.mxu0 0.0
        %2397 = vmatpush1.msra.mxu0 0.0
        %2398 = vmatprep.subr.mxu0 0.0
        %2399 = vmatpush1.msra.mxu0 0.0
        %2400 = vmatprep.subr.mxu0 0.0
        %2401 = vmatpush1.msra.mxu0 0.0
        %2402 = vmatprep.subr.mxu0 0.0
        %2403 = vmatpush1.msra.mxu0 0.0
        %2404 = vmatprep.subr.mxu0 0.0
        %2405 = vmatpush1.msra.mxu0 0.0
        %2406 = vmatprep.subr.mxu0 0.0
        %v2407 = vand.u32 %v903, 4294901760
        %2408 = vmatpush1.msra.mxu0 %v2407
        %2409 = vmatprep.subr.mxu0 0.0
        %v2410 = vand.u32 %v897, 4294901760
        %2411 = vmatpush1.msra.mxu0 %v2410
        %2412 = vmatprep.subr.mxu0 0.0
        %2413 = vmatpush2.msra.mxu0 0.0
        %2414 = vmatprep.subr.mxu0 0.0
        %2415 = vmatpush2.msra.mxu0 0.0
        %2416 = vmatprep.subr.mxu0 0.0
        %2417 = vmatpush2.msra.mxu0 0.0
        %2418 = vmatprep.subr.mxu0 0.0
        %2419 = vmatpush2.msra.mxu0 0.0
        %2420 = vmatprep.subr.mxu0 0.0
        %2421 = vmatpush2.msra.mxu0 0.0
        %2422 = vmatprep.subr.mxu0 0.0
        %2423 = vmatpush2.msra.mxu0 0.0
        %2424 = vmatprep.subr.mxu0 0.0
        %2425 = vmatpush2.msra.mxu0 0.0
        %2426 = vmatprep.subr.mxu0 0.0
        %2427 = vmatpush2.msra.mxu0 0.0
        %2428 = vmatprep.subr.mxu0 0.0
        %2429 = vmatpush2.msra.mxu0 0.0
        %2430 = vmatprep.subr.mxu0 0.0
        %2431 = vmatpush2.msra.mxu0 0.0
        %2432 = vmatprep.subr.mxu0 0.0
        %2433 = vmatpush2.msra.mxu0 0.0
        %2434 = vmatprep.subr.mxu0 0.0
        %2435 = vmatpush2.msra.mxu0 0.0
        %2436 = vmatprep.subr.mxu0 0.0
        %2437 = vmatpush2.msra.mxu0 0.0
        %2438 = vmatprep.subr.mxu0 0.0
        %2439 = vmatpush2.msra.mxu0 0.0
        %2440 = vmatprep.subr.mxu0 0.0
        %2441 = vmatpush2.msra.mxu0 0.0
        %2442 = vmatprep.subr.mxu0 0.0
        %2443 = vmatpush2.msra.mxu0 0.0
        %2444 = vmatprep.mubr.f32.mxu0 0.0
        %v2445 = vand.u32 %v2142, 4294901760
        %v2446 = vsub.f32 %v2142, %v2445
        %v2447 = vand.u32 %v2446, 4294901760
        %2448 = vmatmul.mubr.f32.gmra.mxu0 %v2447
        %v2449 = vpop.f32.mrf.mxu0
        %v2450 = vadd.f32 %v2375, %v2449
        %v2451 = vpop.f32.mrf.mxu0
        %2452 = vdwg.mxu0
        %2453 = vmatprep.subr.mxu0 0.0
        %2454 = vmatpush1.msra.mxu0 0.0
        %2455 = vmatprep.subr.mxu0 0.0
        %2456 = vmatpush1.msra.mxu0 0.0
        %2457 = vmatprep.subr.mxu0 0.0
        %2458 = vmatpush1.msra.mxu0 0.0
        %2459 = vmatprep.subr.mxu0 0.0
        %2460 = vmatpush1.msra.mxu0 0.0
        %2461 = vmatprep.subr.mxu0 0.0
        %2462 = vmatpush1.msra.mxu0 0.0
        %2463 = vmatprep.subr.mxu0 0.0
        %2464 = vmatpush1.msra.mxu0 0.0
        %2465 = vmatprep.subr.mxu0 0.0
        %2466 = vmatpush1.msra.mxu0 0.0
        %2467 = vmatprep.subr.mxu0 0.0
        %2468 = vmatpush1.msra.mxu0 0.0
        %2469 = vmatprep.subr.mxu0 0.0
        %2470 = vmatpush1.msra.mxu0 0.0
        %2471 = vmatprep.subr.mxu0 0.0
        %2472 = vmatpush1.msra.mxu0 0.0
        %2473 = vmatprep.subr.mxu0 0.0
        %2474 = vmatpush1.msra.mxu0 0.0
        %2475 = vmatprep.subr.mxu0 0.0
        %2476 = vmatpush1.msra.mxu0 0.0
        %2477 = vmatprep.subr.mxu0 0.0
        %2478 = vmatpush1.msra.mxu0 0.0
        %2479 = vmatprep.subr.mxu0 0.0
        %2480 = vmatpush1.msra.mxu0 0.0
        %2481 = vmatprep.subr.mxu0 0.0
        %v2482 = vand.u32 %v903, 4294901760
        %v2483 = vsub.f32 %v903, %v2482
        %v2484 = vand.u32 %v2483, 4294901760
        %2485 = vmatpush1.msra.mxu0 %v2484
        %2486 = vmatprep.subr.mxu0 0.0
        %v2487 = vand.u32 %v897, 4294901760
        %v2488 = vsub.f32 %v897, %v2487
        %v2489 = vand.u32 %v2488, 4294901760
        %2490 = vmatpush1.msra.mxu0 %v2489
        %2491 = vmatprep.subr.mxu0 0.0
        %2492 = vmatpush2.msra.mxu0 0.0
        %2493 = vmatprep.subr.mxu0 0.0
        %2494 = vmatpush2.msra.mxu0 0.0
        %2495 = vmatprep.subr.mxu0 0.0
        %2496 = vmatpush2.msra.mxu0 0.0
        %2497 = vmatprep.subr.mxu0 0.0
        %2498 = vmatpush2.msra.mxu0 0.0
        %2499 = vmatprep.subr.mxu0 0.0
        %2500 = vmatpush2.msra.mxu0 0.0
        %2501 = vmatprep.subr.mxu0 0.0
        %2502 = vmatpush2.msra.mxu0 0.0
        %2503 = vmatprep.subr.mxu0 0.0
        %2504 = vmatpush2.msra.mxu0 0.0
        %2505 = vmatprep.subr.mxu0 0.0
        %2506 = vmatpush2.msra.mxu0 0.0
        %2507 = vmatprep.subr.mxu0 0.0
        %2508 = vmatpush2.msra.mxu0 0.0
        %2509 = vmatprep.subr.mxu0 0.0
        %2510 = vmatpush2.msra.mxu0 0.0
        %2511 = vmatprep.subr.mxu0 0.0
        %2512 = vmatpush2.msra.mxu0 0.0
        %2513 = vmatprep.subr.mxu0 0.0
        %2514 = vmatpush2.msra.mxu0 0.0
        %2515 = vmatprep.subr.mxu0 0.0
        %2516 = vmatpush2.msra.mxu0 0.0
        %2517 = vmatprep.subr.mxu0 0.0
        %2518 = vmatpush2.msra.mxu0 0.0
        %2519 = vmatprep.subr.mxu0 0.0
        %2520 = vmatpush2.msra.mxu0 0.0
        %2521 = vmatprep.subr.mxu0 0.0
        %2522 = vmatpush2.msra.mxu0 0.0
        %2523 = vmatprep.mubr.f32.mxu0 0.0
        %v2524 = vand.u32 %v2142, 4294901760
        %2525 = vmatmul.mubr.f32.gmra.mxu0 %v2524
        %v2526 = vpop.f32.mrf.mxu0
        %v2527 = vadd.f32 %v2450, %v2526
        %v2528 = vpop.f32.mrf.mxu0
        %2529 = vdwg.mxu0
        %2530 = vmatprep.subr.mxu0 0.0
        %2531 = vmatpush1.msra.mxu0 0.0
        %2532 = vmatprep.subr.mxu0 0.0
        %2533 = vmatpush1.msra.mxu0 0.0
        %2534 = vmatprep.subr.mxu0 0.0
        %2535 = vmatpush1.msra.mxu0 0.0
        %2536 = vmatprep.subr.mxu0 0.0
        %2537 = vmatpush1.msra.mxu0 0.0
        %2538 = vmatprep.subr.mxu0 0.0
        %2539 = vmatpush1.msra.mxu0 0.0
        %2540 = vmatprep.subr.mxu0 0.0
        %2541 = vmatpush1.msra.mxu0 0.0
        %2542 = vmatprep.subr.mxu0 0.0
        %2543 = vmatpush1.msra.mxu0 0.0
        %2544 = vmatprep.subr.mxu0 0.0
        %2545 = vmatpush1.msra.mxu0 0.0
        %2546 = vmatprep.subr.mxu0 0.0
        %2547 = vmatpush1.msra.mxu0 0.0
        %2548 = vmatprep.subr.mxu0 0.0
        %2549 = vmatpush1.msra.mxu0 0.0
        %2550 = vmatprep.subr.mxu0 0.0
        %2551 = vmatpush1.msra.mxu0 0.0
        %2552 = vmatprep.subr.mxu0 0.0
        %2553 = vmatpush1.msra.mxu0 0.0
        %2554 = vmatprep.subr.mxu0 0.0
        %2555 = vmatpush1.msra.mxu0 0.0
        %2556 = vmatprep.subr.mxu0 0.0
        %2557 = vmatpush1.msra.mxu0 0.0
        %2558 = vmatprep.subr.mxu0 0.0
        %v2559 = vand.u32 %v903, 4294901760
        %2560 = vmatpush1.msra.mxu0 %v2559
        %2561 = vmatprep.subr.mxu0 0.0
        %v2562 = vand.u32 %v897, 4294901760
        %2563 = vmatpush1.msra.mxu0 %v2562
        %2564 = vmatprep.subr.mxu0 0.0
        %2565 = vmatpush2.msra.mxu0 0.0
        %2566 = vmatprep.subr.mxu0 0.0
        %2567 = vmatpush2.msra.mxu0 0.0
        %2568 = vmatprep.subr.mxu0 0.0
        %2569 = vmatpush2.msra.mxu0 0.0
        %2570 = vmatprep.subr.mxu0 0.0
        %2571 = vmatpush2.msra.mxu0 0.0
        %2572 = vmatprep.subr.mxu0 0.0
        %2573 = vmatpush2.msra.mxu0 0.0
        %2574 = vmatprep.subr.mxu0 0.0
        %2575 = vmatpush2.msra.mxu0 0.0
        %2576 = vmatprep.subr.mxu0 0.0
        %2577 = vmatpush2.msra.mxu0 0.0
        %2578 = vmatprep.subr.mxu0 0.0
        %2579 = vmatpush2.msra.mxu0 0.0
        %2580 = vmatprep.subr.mxu0 0.0
        %2581 = vmatpush2.msra.mxu0 0.0
        %2582 = vmatprep.subr.mxu0 0.0
        %2583 = vmatpush2.msra.mxu0 0.0
        %2584 = vmatprep.subr.mxu0 0.0
        %2585 = vmatpush2.msra.mxu0 0.0
        %2586 = vmatprep.subr.mxu0 0.0
        %2587 = vmatpush2.msra.mxu0 0.0
        %2588 = vmatprep.subr.mxu0 0.0
        %2589 = vmatpush2.msra.mxu0 0.0
        %2590 = vmatprep.subr.mxu0 0.0
        %2591 = vmatpush2.msra.mxu0 0.0
        %2592 = vmatprep.subr.mxu0 0.0
        %2593 = vmatpush2.msra.mxu0 0.0
        %2594 = vmatprep.subr.mxu0 0.0
        %2595 = vmatpush2.msra.mxu0 0.0
        %2596 = vmatprep.mubr.f32.mxu0 0.0
        %v2597 = vand.u32 %v2142, 4294901760
        %2598 = vmatmul.mubr.f32.gmra.mxu0 %v2597
        %v2599 = vpop.f32.mrf.mxu0
        %v2600 = vadd.f32 %v2527, %v2599
        %v2601 = vpop.f32.mrf.mxu0
        %2602 = vdwg.mxu0
        %v2603 = vrcp.pop 4.0
        %v2604 = vmul.f32 %v2600, %v2603
        %v2605 = vlaneseq
        %v2606 = vshrl.u32 %v2605, 7
        %v2607 = vlaneseq
        %v2608 = vand.u32 %v2607, 127
        %vm2609 = vcmp.gt.s32.totalorder %v2606, %v2608
        %v2610 = vsel %vm2609, -1e+30, %v2604
        %vm2611 = vcmask 64512
        %v2612 = vsel %vm2611, %v2610, -inf
        %2613 = vmax.xlane.f32.xlu0 %v2612
        %v2614 = vpop.xlane.xlu0 %2613
        %v2615 = vsub.f32 %v2610, %v2614
        %v2616 = vmul.f32 %v2615, 1.442695
        %v2617 = vpow.pop %v2616
        %v2618 = vsel %vm2611, %v2617, 0.0
        %2619 = vadd.xlane.f32.xlu0 %v2618
        %v2620 = vpop.xlane.xlu0 %2619
        %v2621 = vrcp.pop %v2620
        %v2622 = vmul.f32 %v2617, %v2621
        %v2624 = vsel %vm2611, %v2087, 0
        %v2627 = vsel %vm2611, %v2093, 0
        %v2630 = vsel %vm2611, %v2099, 0
        %v2633 = vsel %vm2611, %v2105, 0
        %2635 = vmatprep.subr.mxu0 0.0
        %2636 = vmatpush1.msra.mxu0 0.0
        %2637 = vmatprep.subr.mxu0 0.0
        %2638 = vmatpush1.msra.mxu0 0.0
        %2639 = vmatprep.subr.mxu0 0.0
        %2640 = vmatpush1.msra.mxu0 0.0
        %2641 = vmatprep.subr.mxu0 0.0
        %2642 = vmatpush1.msra.mxu0 0.0
        %2643 = vmatprep.subr.mxu0 0.0
        %2644 = vmatpush1.msra.mxu0 0.0
        %2645 = vmatprep.subr.mxu0 0.0
        %2646 = vmatpush1.msra.mxu0 0.0
        %2647 = vmatprep.subr.mxu0 0.0
        %2648 = vmatpush1.msra.mxu0 0.0
        %2649 = vmatprep.subr.mxu0 0.0
        %2650 = vmatpush1.msra.mxu0 0.0
        %2651 = vmatprep.subr.mxu0 0.0
        %2652 = vmatpush1.msra.mxu0 0.0
        %2653 = vmatprep.subr.mxu0 0.0
        %2654 = vmatpush1.msra.mxu0 0.0
        %2655 = vmatprep.subr.mxu0 0.0
        %2656 = vmatpush1.msra.mxu0 0.0
        %2657 = vmatprep.subr.mxu0 0.0
        %2658 = vmatpush1.msra.mxu0 0.0
        %2659 = vmatprep.subr.mxu0 0.0
        %2660 = vmatpush1.msra.mxu0 0.0
        %2661 = vmatprep.subr.mxu0 0.0
        %2662 = vmatpush1.msra.mxu0 0.0
        %2663 = vmatprep.subr.mxu0 0.0
        %2664 = vmatpush1.msra.mxu0 0.0
        %2665 = vmatprep.subr.mxu0 0.0
        %v2666 = vand.u32 %v2622, 4294901760
        %2667 = vmatpush1.msra.mxu0 %v2666
        %2668 = vmatprep.subr.mxu0 0.0
        %2669 = vmatpush2.msra.mxu0 0.0
        %2670 = vmatprep.subr.mxu0 0.0
        %2671 = vmatpush2.msra.mxu0 0.0
        %2672 = vmatprep.subr.mxu0 0.0
        %2673 = vmatpush2.msra.mxu0 0.0
        %2674 = vmatprep.subr.mxu0 0.0
        %2675 = vmatpush2.msra.mxu0 0.0
        %2676 = vmatprep.subr.mxu0 0.0
        %2677 = vmatpush2.msra.mxu0 0.0
        %2678 = vmatprep.subr.mxu0 0.0
        %2679 = vmatpush2.msra.mxu0 0.0
        %2680 = vmatprep.subr.mxu0 0.0
        %2681 = vmatpush2.msra.mxu0 0.0
        %2682 = vmatprep.subr.mxu0 0.0
        %2683 = vmatpush2.msra.mxu0 0.0
        %2684 = vmatprep.subr.mxu0 0.0
        %2685 = vmatpush2.msra.mxu0 0.0
        %2686 = vmatprep.subr.mxu0 0.0
        %2687 = vmatpush2.msra.mxu0 0.0
        %2688 = vmatprep.subr.mxu0 0.0
        %2689 = vmatpush2.msra.mxu0 0.0
        %2690 = vmatprep.subr.mxu0 0.0
        %2691 = vmatpush2.msra.mxu0 0.0
        %2692 = vmatprep.subr.mxu0 0.0
        %2693 = vmatpush2.msra.mxu0 0.0
        %2694 = vmatprep.subr.mxu0 0.0
        %2695 = vmatpush2.msra.mxu0 0.0
        %2696 = vmatprep.subr.mxu0 0.0
        %2697 = vmatpush2.msra.mxu0 0.0
        %2698 = vmatprep.subr.mxu0 0.0
        %2699 = vmatpush2.msra.mxu0 0.0
        %2700 = vmatprep.mubr.f32.mxu0 0.0
        %v2701 = vand.u32 %v2624, 4294901760
        %v2702 = vsub.f32 %v2624, %v2701
        %v2703 = vand.u32 %v2702, 4294901760
        %v2704 = vsub.f32 %v2702, %v2703
        %v2705 = vand.u32 %v2704, 4294901760
        %2706 = vmatmul.mubr.f32.gmra.mxu0 %v2705
        %v2707 = vpop.f32.mrf.mxu0
        %v2708 = vadd.f32 0.0, %v2707
        %v2709 = vpop.f32.mrf.mxu0
        %2710 = vmatprep.mubr.f32.mxu0 0.0
        %v2711 = vand.u32 %v2627, 4294901760
        %v2712 = vsub.f32 %v2627, %v2711
        %v2713 = vand.u32 %v2712, 4294901760
        %v2714 = vsub.f32 %v2712, %v2713
        %v2715 = vand.u32 %v2714, 4294901760
        %2716 = vmatmul.mubr.f32.gmra.mxu0 %v2715
        %v2717 = vpop.f32.mrf.mxu0
        %v2718 = vadd.f32 0.0, %v2717
        %v2719 = vpop.f32.mrf.mxu0
        %2720 = vmatprep.mubr.f32.mxu0 0.0
        %v2721 = vand.u32 %v2630, 4294901760
        %v2722 = vsub.f32 %v2630, %v2721
        %v2723 = vand.u32 %v2722, 4294901760
        %v2724 = vsub.f32 %v2722, %v2723
        %v2725 = vand.u32 %v2724, 4294901760
        %2726 = vmatmul.mubr.f32.gmra.mxu0 %v2725
        %v2727 = vpop.f32.mrf.mxu0
        %v2728 = vadd.f32 0.0, %v2727
        %v2729 = vpop.f32.mrf.mxu0
        %2730 = vmatprep.mubr.f32.mxu0 0.0
        %v2731 = vand.u32 %v2633, 4294901760
        %v2732 = vsub.f32 %v2633, %v2731
        %v2733 = vand.u32 %v2732, 4294901760
        %v2734 = vsub.f32 %v2732, %v2733
        %v2735 = vand.u32 %v2734, 4294901760
        %2736 = vmatmul.mubr.f32.gmra.mxu0 %v2735
        %v2737 = vpop.f32.mrf.mxu0
        %v2738 = vadd.f32 0.0, %v2737
        %v2739 = vpop.f32.mrf.mxu0
        %2740 = vdwg.mxu0
        %2741 = vmatprep.subr.mxu0 0.0
        %2742 = vmatpush1.msra.mxu0 0.0
        %2743 = vmatprep.subr.mxu0 0.0
        %2744 = vmatpush1.msra.mxu0 0.0
        %2745 = vmatprep.subr.mxu0 0.0
        %2746 = vmatpush1.msra.mxu0 0.0
        %2747 = vmatprep.subr.mxu0 0.0
        %2748 = vmatpush1.msra.mxu0 0.0
        %2749 = vmatprep.subr.mxu0 0.0
        %2750 = vmatpush1.msra.mxu0 0.0
        %2751 = vmatprep.subr.mxu0 0.0
        %2752 = vmatpush1.msra.mxu0 0.0
        %2753 = vmatprep.subr.mxu0 0.0
        %2754 = vmatpush1.msra.mxu0 0.0
        %2755 = vmatprep.subr.mxu0 0.0
        %2756 = vmatpush1.msra.mxu0 0.0
        %2757 = vmatprep.subr.mxu0 0.0
        %2758 = vmatpush1.msra.mxu0 0.0
        %2759 = vmatprep.subr.mxu0 0.0
        %2760 = vmatpush1.msra.mxu0 0.0
        %2761 = vmatprep.subr.mxu0 0.0
        %2762 = vmatpush1.msra.mxu0 0.0
        %2763 = vmatprep.subr.mxu0 0.0
        %2764 = vmatpush1.msra.mxu0 0.0
        %2765 = vmatprep.subr.mxu0 0.0
        %2766 = vmatpush1.msra.mxu0 0.0
        %2767 = vmatprep.subr.mxu0 0.0
        %2768 = vmatpush1.msra.mxu0 0.0
        %2769 = vmatprep.subr.mxu0 0.0
        %2770 = vmatpush1.msra.mxu0 0.0
        %2771 = vmatprep.subr.mxu0 0.0
        %v2772 = vand.u32 %v2622, 4294901760
        %v2773 = vsub.f32 %v2622, %v2772
        %v2774 = vand.u32 %v2773, 4294901760
        %v2775 = vsub.f32 %v2773, %v2774
        %v2776 = vand.u32 %v2775, 4294901760
        %2777 = vmatpush1.msra.mxu0 %v2776
        %2778 = vmatprep.subr.mxu0 0.0
        %2779 = vmatpush2.msra.mxu0 0.0
        %2780 = vmatprep.subr.mxu0 0.0
        %2781 = vmatpush2.msra.mxu0 0.0
        %2782 = vmatprep.subr.mxu0 0.0
        %2783 = vmatpush2.msra.mxu0 0.0
        %2784 = vmatprep.subr.mxu0 0.0
        %2785 = vmatpush2.msra.mxu0 0.0
        %2786 = vmatprep.subr.mxu0 0.0
        %2787 = vmatpush2.msra.mxu0 0.0
        %2788 = vmatprep.subr.mxu0 0.0
        %2789 = vmatpush2.msra.mxu0 0.0
        %2790 = vmatprep.subr.mxu0 0.0
        %2791 = vmatpush2.msra.mxu0 0.0
        %2792 = vmatprep.subr.mxu0 0.0
        %2793 = vmatpush2.msra.mxu0 0.0
        %2794 = vmatprep.subr.mxu0 0.0
        %2795 = vmatpush2.msra.mxu0 0.0
        %2796 = vmatprep.subr.mxu0 0.0
        %2797 = vmatpush2.msra.mxu0 0.0
        %2798 = vmatprep.subr.mxu0 0.0
        %2799 = vmatpush2.msra.mxu0 0.0
        %2800 = vmatprep.subr.mxu0 0.0
        %2801 = vmatpush2.msra.mxu0 0.0
        %2802 = vmatprep.subr.mxu0 0.0
        %2803 = vmatpush2.msra.mxu0 0.0
        %2804 = vmatprep.subr.mxu0 0.0
        %2805 = vmatpush2.msra.mxu0 0.0
        %2806 = vmatprep.subr.mxu0 0.0
        %2807 = vmatpush2.msra.mxu0 0.0
        %2808 = vmatprep.subr.mxu0 0.0
        %2809 = vmatpush2.msra.mxu0 0.0
        %2810 = vmatprep.mubr.f32.mxu0 0.0
        %v2811 = vand.u32 %v2624, 4294901760
        %2812 = vmatmul.mubr.f32.gmra.mxu0 %v2811
        %v2813 = vpop.f32.mrf.mxu0
        %v2814 = vadd.f32 %v2708, %v2813
        %v2815 = vpop.f32.mrf.mxu0
        %2816 = vmatprep.mubr.f32.mxu0 0.0
        %v2817 = vand.u32 %v2627, 4294901760
        %2818 = vmatmul.mubr.f32.gmra.mxu0 %v2817
        %v2819 = vpop.f32.mrf.mxu0
        %v2820 = vadd.f32 %v2718, %v2819
        %v2821 = vpop.f32.mrf.mxu0
        %2822 = vmatprep.mubr.f32.mxu0 0.0
        %v2823 = vand.u32 %v2630, 4294901760
        %2824 = vmatmul.mubr.f32.gmra.mxu0 %v2823
        %v2825 = vpop.f32.mrf.mxu0
        %v2826 = vadd.f32 %v2728, %v2825
        %v2827 = vpop.f32.mrf.mxu0
        %2828 = vmatprep.mubr.f32.mxu0 0.0
        %v2829 = vand.u32 %v2633, 4294901760
        %2830 = vmatmul.mubr.f32.gmra.mxu0 %v2829
        %v2831 = vpop.f32.mrf.mxu0
        %v2832 = vadd.f32 %v2738, %v2831
        %v2833 = vpop.f32.mrf.mxu0
        %2834 = vdwg.mxu0
        %2835 = vmatprep.subr.mxu0 0.0
        %2836 = vmatpush1.msra.mxu0 0.0
        %2837 = vmatprep.subr.mxu0 0.0
        %2838 = vmatpush1.msra.mxu0 0.0
        %2839 = vmatprep.subr.mxu0 0.0
        %2840 = vmatpush1.msra.mxu0 0.0
        %2841 = vmatprep.subr.mxu0 0.0
        %2842 = vmatpush1.msra.mxu0 0.0
        %2843 = vmatprep.subr.mxu0 0.0
        %2844 = vmatpush1.msra.mxu0 0.0
        %2845 = vmatprep.subr.mxu0 0.0
        %2846 = vmatpush1.msra.mxu0 0.0
        %2847 = vmatprep.subr.mxu0 0.0
        %2848 = vmatpush1.msra.mxu0 0.0
        %2849 = vmatprep.subr.mxu0 0.0
        %2850 = vmatpush1.msra.mxu0 0.0
        %2851 = vmatprep.subr.mxu0 0.0
        %2852 = vmatpush1.msra.mxu0 0.0
        %2853 = vmatprep.subr.mxu0 0.0
        %2854 = vmatpush1.msra.mxu0 0.0
        %2855 = vmatprep.subr.mxu0 0.0
        %2856 = vmatpush1.msra.mxu0 0.0
        %2857 = vmatprep.subr.mxu0 0.0
        %2858 = vmatpush1.msra.mxu0 0.0
        %2859 = vmatprep.subr.mxu0 0.0
        %2860 = vmatpush1.msra.mxu0 0.0
        %2861 = vmatprep.subr.mxu0 0.0
        %2862 = vmatpush1.msra.mxu0 0.0
        %2863 = vmatprep.subr.mxu0 0.0
        %2864 = vmatpush1.msra.mxu0 0.0
        %2865 = vmatprep.subr.mxu0 0.0
        %v2866 = vand.u32 %v2622, 4294901760
        %v2867 = vsub.f32 %v2622, %v2866
        %2868 = vmatpush1.msra.mxu0 %v2867
        %2869 = vmatprep.subr.mxu0 0.0
        %2870 = vmatpush2.msra.mxu0 0.0
        %2871 = vmatprep.subr.mxu0 0.0
        %2872 = vmatpush2.msra.mxu0 0.0
        %2873 = vmatprep.subr.mxu0 0.0
        %2874 = vmatpush2.msra.mxu0 0.0
        %2875 = vmatprep.subr.mxu0 0.0
        %2876 = vmatpush2.msra.mxu0 0.0
        %2877 = vmatprep.subr.mxu0 0.0
        %2878 = vmatpush2.msra.mxu0 0.0
        %2879 = vmatprep.subr.mxu0 0.0
        %2880 = vmatpush2.msra.mxu0 0.0
        %2881 = vmatprep.subr.mxu0 0.0
        %2882 = vmatpush2.msra.mxu0 0.0
        %2883 = vmatprep.subr.mxu0 0.0
        %2884 = vmatpush2.msra.mxu0 0.0
        %2885 = vmatprep.subr.mxu0 0.0
        %2886 = vmatpush2.msra.mxu0 0.0
        %2887 = vmatprep.subr.mxu0 0.0
        %2888 = vmatpush2.msra.mxu0 0.0
        %2889 = vmatprep.subr.mxu0 0.0
        %2890 = vmatpush2.msra.mxu0 0.0
        %2891 = vmatprep.subr.mxu0 0.0
        %2892 = vmatpush2.msra.mxu0 0.0
        %2893 = vmatprep.subr.mxu0 0.0
        %2894 = vmatpush2.msra.mxu0 0.0
        %2895 = vmatprep.subr.mxu0 0.0
        %2896 = vmatpush2.msra.mxu0 0.0
        %2897 = vmatprep.subr.mxu0 0.0
        %2898 = vmatpush2.msra.mxu0 0.0
        %2899 = vmatprep.subr.mxu0 0.0
        %2900 = vmatpush2.msra.mxu0 0.0
        %2901 = vmatprep.mubr.f32.mxu0 0.0
        %v2902 = vand.u32 %v2624, 4294901760
        %v2903 = vsub.f32 %v2624, %v2902
        %2904 = vmatmul.mubr.f32.gmra.mxu0 %v2903
        %v2905 = vpop.f32.mrf.mxu0
        %v2906 = vadd.f32 %v2814, %v2905
        %v2907 = vpop.f32.mrf.mxu0
        %2908 = vmatprep.mubr.f32.mxu0 0.0
        %v2909 = vand.u32 %v2627, 4294901760
        %v2910 = vsub.f32 %v2627, %v2909
        %2911 = vmatmul.mubr.f32.gmra.mxu0 %v2910
        %v2912 = vpop.f32.mrf.mxu0
        %v2913 = vadd.f32 %v2820, %v2912
        %v2914 = vpop.f32.mrf.mxu0
        %2915 = vmatprep.mubr.f32.mxu0 0.0
        %v2916 = vand.u32 %v2630, 4294901760
        %v2917 = vsub.f32 %v2630, %v2916
        %2918 = vmatmul.mubr.f32.gmra.mxu0 %v2917
        %v2919 = vpop.f32.mrf.mxu0
        %v2920 = vadd.f32 %v2826, %v2919
        %v2921 = vpop.f32.mrf.mxu0
        %2922 = vmatprep.mubr.f32.mxu0 0.0
        %v2923 = vand.u32 %v2633, 4294901760
        %v2924 = vsub.f32 %v2633, %v2923
        %2925 = vmatmul.mubr.f32.gmra.mxu0 %v2924
        %v2926 = vpop.f32.mrf.mxu0
        %v2927 = vadd.f32 %v2832, %v2926
        %v2928 = vpop.f32.mrf.mxu0
        %2929 = vdwg.mxu0
        %2930 = vmatprep.subr.mxu0 0.0
        %2931 = vmatpush1.msra.mxu0 0.0
        %2932 = vmatprep.subr.mxu0 0.0
        %2933 = vmatpush1.msra.mxu0 0.0
        %2934 = vmatprep.subr.mxu0 0.0
        %2935 = vmatpush1.msra.mxu0 0.0
        %2936 = vmatprep.subr.mxu0 0.0
        %2937 = vmatpush1.msra.mxu0 0.0
        %2938 = vmatprep.subr.mxu0 0.0
        %2939 = vmatpush1.msra.mxu0 0.0
        %2940 = vmatprep.subr.mxu0 0.0
        %2941 = vmatpush1.msra.mxu0 0.0
        %2942 = vmatprep.subr.mxu0 0.0
        %2943 = vmatpush1.msra.mxu0 0.0
        %2944 = vmatprep.subr.mxu0 0.0
        %2945 = vmatpush1.msra.mxu0 0.0
        %2946 = vmatprep.subr.mxu0 0.0
        %2947 = vmatpush1.msra.mxu0 0.0
        %2948 = vmatprep.subr.mxu0 0.0
        %2949 = vmatpush1.msra.mxu0 0.0
        %2950 = vmatprep.subr.mxu0 0.0
        %2951 = vmatpush1.msra.mxu0 0.0
        %2952 = vmatprep.subr.mxu0 0.0
        %2953 = vmatpush1.msra.mxu0 0.0
        %2954 = vmatprep.subr.mxu0 0.0
        %2955 = vmatpush1.msra.mxu0 0.0
        %2956 = vmatprep.subr.mxu0 0.0
        %2957 = vmatpush1.msra.mxu0 0.0
        %2958 = vmatprep.subr.mxu0 0.0
        %2959 = vmatpush1.msra.mxu0 0.0
        %2960 = vmatprep.subr.mxu0 0.0
        %v2961 = vand.u32 %v2622, 4294901760
        %2962 = vmatpush1.msra.mxu0 %v2961
        %2963 = vmatprep.subr.mxu0 0.0
        %2964 = vmatpush2.msra.mxu0 0.0
        %2965 = vmatprep.subr.mxu0 0.0
        %2966 = vmatpush2.msra.mxu0 0.0
        %2967 = vmatprep.subr.mxu0 0.0
        %2968 = vmatpush2.msra.mxu0 0.0
        %2969 = vmatprep.subr.mxu0 0.0
        %2970 = vmatpush2.msra.mxu0 0.0
        %2971 = vmatprep.subr.mxu0 0.0
        %2972 = vmatpush2.msra.mxu0 0.0
        %2973 = vmatprep.subr.mxu0 0.0
        %2974 = vmatpush2.msra.mxu0 0.0
        %2975 = vmatprep.subr.mxu0 0.0
        %2976 = vmatpush2.msra.mxu0 0.0
        %2977 = vmatprep.subr.mxu0 0.0
        %2978 = vmatpush2.msra.mxu0 0.0
        %2979 = vmatprep.subr.mxu0 0.0
        %2980 = vmatpush2.msra.mxu0 0.0
        %2981 = vmatprep.subr.mxu0 0.0
        %2982 = vmatpush2.msra.mxu0 0.0
        %2983 = vmatprep.subr.mxu0 0.0
        %2984 = vmatpush2.msra.mxu0 0.0
        %2985 = vmatprep.subr.mxu0 0.0
        %2986 = vmatpush2.msra.mxu0 0.0
        %2987 = vmatprep.subr.mxu0 0.0
        %2988 = vmatpush2.msra.mxu0 0.0
        %2989 = vmatprep.subr.mxu0 0.0
        %2990 = vmatpush2.msra.mxu0 0.0
        %2991 = vmatprep.subr.mxu0 0.0
        %2992 = vmatpush2.msra.mxu0 0.0
        %2993 = vmatprep.subr.mxu0 0.0
        %2994 = vmatpush2.msra.mxu0 0.0
        %2995 = vmatprep.mubr.f32.mxu0 0.0
        %v2996 = vand.u32 %v2624, 4294901760
        %v2997 = vsub.f32 %v2624, %v2996
        %v2998 = vand.u32 %v2997, 4294901760
        %2999 = vmatmul.mubr.f32.gmra.mxu0 %v2998
        %v3000 = vpop.f32.mrf.mxu0
        %v3001 = vadd.f32 %v2906, %v3000
        %v3002 = vpop.f32.mrf.mxu0
        %3003 = vmatprep.mubr.f32.mxu0 0.0
        %v3004 = vand.u32 %v2627, 4294901760
        %v3005 = vsub.f32 %v2627, %v3004
        %v3006 = vand.u32 %v3005, 4294901760
        %3007 = vmatmul.mubr.f32.gmra.mxu0 %v3006
        %v3008 = vpop.f32.mrf.mxu0
        %v3009 = vadd.f32 %v2913, %v3008
        %v3010 = vpop.f32.mrf.mxu0
        %3011 = vmatprep.mubr.f32.mxu0 0.0
        %v3012 = vand.u32 %v2630, 4294901760
        %v3013 = vsub.f32 %v2630, %v3012
        %v3014 = vand.u32 %v3013, 4294901760
        %3015 = vmatmul.mubr.f32.gmra.mxu0 %v3014
        %v3016 = vpop.f32.mrf.mxu0
        %v3017 = vadd.f32 %v2920, %v3016
        %v3018 = vpop.f32.mrf.mxu0
        %3019 = vmatprep.mubr.f32.mxu0 0.0
        %v3020 = vand.u32 %v2633, 4294901760
        %v3021 = vsub.f32 %v2633, %v3020
        %v3022 = vand.u32 %v3021, 4294901760
        %3023 = vmatmul.mubr.f32.gmra.mxu0 %v3022
        %v3024 = vpop.f32.mrf.mxu0
        %v3025 = vadd.f32 %v2927, %v3024
        %v3026 = vpop.f32.mrf.mxu0
        %3027 = vdwg.mxu0
        %3028 = vmatprep.subr.mxu0 0.0
        %3029 = vmatpush1.msra.mxu0 0.0
        %3030 = vmatprep.subr.mxu0 0.0
        %3031 = vmatpush1.msra.mxu0 0.0
        %3032 = vmatprep.subr.mxu0 0.0
        %3033 = vmatpush1.msra.mxu0 0.0
        %3034 = vmatprep.subr.mxu0 0.0
        %3035 = vmatpush1.msra.mxu0 0.0
        %3036 = vmatprep.subr.mxu0 0.0
        %3037 = vmatpush1.msra.mxu0 0.0
        %3038 = vmatprep.subr.mxu0 0.0
        %3039 = vmatpush1.msra.mxu0 0.0
        %3040 = vmatprep.subr.mxu0 0.0
        %3041 = vmatpush1.msra.mxu0 0.0
        %3042 = vmatprep.subr.mxu0 0.0
        %3043 = vmatpush1.msra.mxu0 0.0
        %3044 = vmatprep.subr.mxu0 0.0
        %3045 = vmatpush1.msra.mxu0 0.0
        %3046 = vmatprep.subr.mxu0 0.0
        %3047 = vmatpush1.msra.mxu0 0.0
        %3048 = vmatprep.subr.mxu0 0.0
        %3049 = vmatpush1.msra.mxu0 0.0
        %3050 = vmatprep.subr.mxu0 0.0
        %3051 = vmatpush1.msra.mxu0 0.0
        %3052 = vmatprep.subr.mxu0 0.0
        %3053 = vmatpush1.msra.mxu0 0.0
        %3054 = vmatprep.subr.mxu0 0.0
        %3055 = vmatpush1.msra.mxu0 0.0
        %3056 = vmatprep.subr.mxu0 0.0
        %3057 = vmatpush1.msra.mxu0 0.0
        %3058 = vmatprep.subr.mxu0 0.0
        %v3059 = vand.u32 %v2622, 4294901760
        %v3060 = vsub.f32 %v2622, %v3059
        %v3061 = vand.u32 %v3060, 4294901760
        %3062 = vmatpush1.msra.mxu0 %v3061
        %3063 = vmatprep.subr.mxu0 0.0
        %3064 = vmatpush2.msra.mxu0 0.0
        %3065 = vmatprep.subr.mxu0 0.0
        %3066 = vmatpush2.msra.mxu0 0.0
        %3067 = vmatprep.subr.mxu0 0.0
        %3068 = vmatpush2.msra.mxu0 0.0
        %3069 = vmatprep.subr.mxu0 0.0
        %3070 = vmatpush2.msra.mxu0 0.0
        %3071 = vmatprep.subr.mxu0 0.0
        %3072 = vmatpush2.msra.mxu0 0.0
        %3073 = vmatprep.subr.mxu0 0.0
        %3074 = vmatpush2.msra.mxu0 0.0
        %3075 = vmatprep.subr.mxu0 0.0
        %3076 = vmatpush2.msra.mxu0 0.0
        %3077 = vmatprep.subr.mxu0 0.0
        %3078 = vmatpush2.msra.mxu0 0.0
        %3079 = vmatprep.subr.mxu0 0.0
        %3080 = vmatpush2.msra.mxu0 0.0
        %3081 = vmatprep.subr.mxu0 0.0
        %3082 = vmatpush2.msra.mxu0 0.0
        %3083 = vmatprep.subr.mxu0 0.0
        %3084 = vmatpush2.msra.mxu0 0.0
        %3085 = vmatprep.subr.mxu0 0.0
        %3086 = vmatpush2.msra.mxu0 0.0
        %3087 = vmatprep.subr.mxu0 0.0
        %3088 = vmatpush2.msra.mxu0 0.0
        %3089 = vmatprep.subr.mxu0 0.0
        %3090 = vmatpush2.msra.mxu0 0.0
        %3091 = vmatprep.subr.mxu0 0.0
        %3092 = vmatpush2.msra.mxu0 0.0
        %3093 = vmatprep.subr.mxu0 0.0
        %3094 = vmatpush2.msra.mxu0 0.0
        %3095 = vmatprep.mubr.f32.mxu0 0.0
        %v3096 = vand.u32 %v2624, 4294901760
        %3097 = vmatmul.mubr.f32.gmra.mxu0 %v3096
        %v3098 = vpop.f32.mrf.mxu0
        %v3099 = vadd.f32 %v3001, %v3098
        %v3100 = vpop.f32.mrf.mxu0
        %3101 = vmatprep.mubr.f32.mxu0 0.0
        %v3102 = vand.u32 %v2627, 4294901760
        %3103 = vmatmul.mubr.f32.gmra.mxu0 %v3102
        %v3104 = vpop.f32.mrf.mxu0
        %v3105 = vadd.f32 %v3009, %v3104
        %v3106 = vpop.f32.mrf.mxu0
        %3107 = vmatprep.mubr.f32.mxu0 0.0
        %v3108 = vand.u32 %v2630, 4294901760
        %3109 = vmatmul.mubr.f32.gmra.mxu0 %v3108
        %v3110 = vpop.f32.mrf.mxu0
        %v3111 = vadd.f32 %v3017, %v3110
        %v3112 = vpop.f32.mrf.mxu0
        %3113 = vmatprep.mubr.f32.mxu0 0.0
        %v3114 = vand.u32 %v2633, 4294901760
        %3115 = vmatmul.mubr.f32.gmra.mxu0 %v3114
        %v3116 = vpop.f32.mrf.mxu0
        %v3117 = vadd.f32 %v3025, %v3116
        %v3118 = vpop.f32.mrf.mxu0
        %3119 = vdwg.mxu0
        %3120 = vmatprep.subr.mxu0 0.0
        %3121 = vmatpush1.msra.mxu0 0.0
        %3122 = vmatprep.subr.mxu0 0.0
        %3123 = vmatpush1.msra.mxu0 0.0
        %3124 = vmatprep.subr.mxu0 0.0
        %3125 = vmatpush1.msra.mxu0 0.0
        %3126 = vmatprep.subr.mxu0 0.0
        %3127 = vmatpush1.msra.mxu0 0.0
        %3128 = vmatprep.subr.mxu0 0.0
        %3129 = vmatpush1.msra.mxu0 0.0
        %3130 = vmatprep.subr.mxu0 0.0
        %3131 = vmatpush1.msra.mxu0 0.0
        %3132 = vmatprep.subr.mxu0 0.0
        %3133 = vmatpush1.msra.mxu0 0.0
        %3134 = vmatprep.subr.mxu0 0.0
        %3135 = vmatpush1.msra.mxu0 0.0
        %3136 = vmatprep.subr.mxu0 0.0
        %3137 = vmatpush1.msra.mxu0 0.0
        %3138 = vmatprep.subr.mxu0 0.0
        %3139 = vmatpush1.msra.mxu0 0.0
        %3140 = vmatprep.subr.mxu0 0.0
        %3141 = vmatpush1.msra.mxu0 0.0
        %3142 = vmatprep.subr.mxu0 0.0
        %3143 = vmatpush1.msra.mxu0 0.0
        %3144 = vmatprep.subr.mxu0 0.0
        %3145 = vmatpush1.msra.mxu0 0.0
        %3146 = vmatprep.subr.mxu0 0.0
        %3147 = vmatpush1.msra.mxu0 0.0
        %3148 = vmatprep.subr.mxu0 0.0
        %3149 = vmatpush1.msra.mxu0 0.0
        %3150 = vmatprep.subr.mxu0 0.0
        %v3151 = vand.u32 %v2622, 4294901760
        %3152 = vmatpush1.msra.mxu0 %v3151
        %3153 = vmatprep.subr.mxu0 0.0
        %3154 = vmatpush2.msra.mxu0 0.0
        %3155 = vmatprep.subr.mxu0 0.0
        %3156 = vmatpush2.msra.mxu0 0.0
        %3157 = vmatprep.subr.mxu0 0.0
        %3158 = vmatpush2.msra.mxu0 0.0
        %3159 = vmatprep.subr.mxu0 0.0
        %3160 = vmatpush2.msra.mxu0 0.0
        %3161 = vmatprep.subr.mxu0 0.0
        %3162 = vmatpush2.msra.mxu0 0.0
        %3163 = vmatprep.subr.mxu0 0.0
        %3164 = vmatpush2.msra.mxu0 0.0
        %3165 = vmatprep.subr.mxu0 0.0
        %3166 = vmatpush2.msra.mxu0 0.0
        %3167 = vmatprep.subr.mxu0 0.0
        %3168 = vmatpush2.msra.mxu0 0.0
        %3169 = vmatprep.subr.mxu0 0.0
        %3170 = vmatpush2.msra.mxu0 0.0
        %3171 = vmatprep.subr.mxu0 0.0
        %3172 = vmatpush2.msra.mxu0 0.0
        %3173 = vmatprep.subr.mxu0 0.0
        %3174 = vmatpush2.msra.mxu0 0.0
        %3175 = vmatprep.subr.mxu0 0.0
        %3176 = vmatpush2.msra.mxu0 0.0
        %3177 = vmatprep.subr.mxu0 0.0
        %3178 = vmatpush2.msra.mxu0 0.0
        %3179 = vmatprep.subr.mxu0 0.0
        %3180 = vmatpush2.msra.mxu0 0.0
        %3181 = vmatprep.subr.mxu0 0.0
        %3182 = vmatpush2.msra.mxu0 0.0
        %3183 = vmatprep.subr.mxu0 0.0
        %3184 = vmatpush2.msra.mxu0 0.0
        %3185 = vmatprep.mubr.f32.mxu0 0.0
        %v3186 = vand.u32 %v2624, 4294901760
        %3187 = vmatmul.mubr.f32.gmra.mxu0 %v3186
        %v3188 = vpop.f32.mrf.mxu0
        %v3189 = vadd.f32 %v3099, %v3188
        %v3190 = vpop.f32.mrf.mxu0
        %3191 = vmatprep.mubr.f32.mxu0 0.0
        %v3192 = vand.u32 %v2627, 4294901760
        %3193 = vmatmul.mubr.f32.gmra.mxu0 %v3192
        %v3194 = vpop.f32.mrf.mxu0
        %v3195 = vadd.f32 %v3105, %v3194
        %v3196 = vpop.f32.mrf.mxu0
        %3197 = vmatprep.mubr.f32.mxu0 0.0
        %v3198 = vand.u32 %v2630, 4294901760
        %3199 = vmatmul.mubr.f32.gmra.mxu0 %v3198
        %v3200 = vpop.f32.mrf.mxu0
        %v3201 = vadd.f32 %v3111, %v3200
        %v3202 = vpop.f32.mrf.mxu0
        %3203 = vmatprep.mubr.f32.mxu0 0.0
        %v3204 = vand.u32 %v2633, 4294901760
        %3205 = vmatmul.mubr.f32.gmra.mxu0 %v3204
        %v3206 = vpop.f32.mrf.mxu0
        %v3207 = vadd.f32 %v3117, %v3206
        %v3208 = vpop.f32.mrf.mxu0
        %3209 = vdwg.mxu0
        %3210 = vst.msk [vmem:[%s352] sm:$0xff] %vm2611, %v3189
        %3211 = vst.msk [vmem:[%s352 + $0x8] sm:$0xff] %vm2611, %v3195
        %3212 = vst.msk [vmem:[%s352 + $0x10] sm:$0xff] %vm2611, %v3201
        %3213 = vst.msk [vmem:[%s352 + $0x18] sm:$0xff] %vm2611, %v3207
        %3214 = vxpose.xlu0.b32.start [1/16] %v2622, 128
        %3215 = vxpose.xlu0.b32.cont [2/16] 0.0, 128
        %3216 = vxpose.xlu0.b32.cont [3/16] 0.0, 128
        %3217 = vxpose.xlu0.b32.cont [4/16] 0.0, 128
        %3218 = vxpose.xlu0.b32.cont [5/16] 0.0, 128
        %3219 = vxpose.xlu0.b32.cont [6/16] 0.0, 128
        %3220 = vxpose.xlu0.b32.cont [7/16] 0.0, 128
        %3221 = vxpose.xlu0.b32.cont [8/16] 0.0, 128
        %3222 = vxpose.xlu0.b32.cont [9/16] 0.0, 128
        %3223 = vxpose.xlu0.b32.cont [10/16] 0.0, 128
        %3224 = vxpose.xlu0.b32.cont [11/16] 0.0, 128
        %3225 = vxpose.xlu0.b32.cont [12/16] 0.0, 128
        %3226 = vxpose.xlu0.b32.cont [13/16] 0.0, 128
        %3227 = vxpose.xlu0.b32.cont [14/16] 0.0, 128
        %3228 = vxpose.xlu0.b32.cont [15/16] 0.0, 128
        %3229 = vxpose.xlu0.b32.end [16/16] 0.0, 128
        %v3230 = vpop.trf.xlu0
        %v3231 = vpop.trf.xlu0
        %v3232 = vpop.trf.xlu0
        %v3233 = vpop.trf.xlu0
        %v3234 = vpop.trf.xlu0
        %v3235 = vpop.trf.xlu0
        %v3236 = vpop.trf.xlu0
        %v3237 = vpop.trf.xlu0
        %v3238 = vpop.trf.xlu0
        %v3239 = vpop.trf.xlu0
        %v3240 = vpop.trf.xlu0
        %v3241 = vpop.trf.xlu0
        %v3242 = vpop.trf.xlu0
        %v3243 = vpop.trf.xlu0
        %v3244 = vpop.trf.xlu0
        %v3245 = vpop.trf.xlu0
        %3246 = vst.msk [vmem:[%s336] sm:$0xff] %vm2611, %v3230
        %v3247 = vsel %vm2611, %v2622, 0.0
        %v3248 = vrot.slane %v3247, 4
        %v3249 = vadd.f32 %v3247, %v3248
        %v3250 = vrot.slane %v3249, 2
        %v3251 = vadd.f32 %v3249, %v3250
        %v3252 = vrot.slane %v3251, 1
        %v3253 = vadd.f32 %v3251, %v3252
        %v3254 = vsel %vm2611, %v3253, -inf
        %3255 = vmax.xlane.f32.xlu0 %v3254
        %v3256 = vpop.xlane.xlu0 %3255
        %v3257 = vsub.f32 %v3253, %v3256
        %v3258 = vmul.f32 %v3257, 1.442695
        %v3259 = vpow.pop %v3258
        %v3260 = vsel %vm2611, %v3259, 0.0
        %3261 = vadd.xlane.f32.xlu0 %v3260
        %v3262 = vpop.xlane.xlu0 %3261
        %v3263 = vrcp.pop %v3262
        %v3264 = vmul.f32 %v3259, %v3263
        %vm3265 = vcmask 57344
        %3266 = vst.msk [vmem:[%s342] sm:$0x1] %vm3265, %v3264
        %p3267 = scmp.lt.s32.totalorder %s27, 1
        %s3268 = scalar_select %p3267, %s27, 1
        %s3269 = smul.addr %s3268, 4
        %s3270 = smul.addr %s3269, 8
        %s3271 = scalar_lea.vmem %s7, %s3270
        %s3272 = sand.u32 %s213, 1
        %s3273 = scalar_lea.sflag [#allocation3], %s3272
        %s3274 = sand.u32 %s213, 1
        %s3275 = smul.addr %s3274, 8
        %s3276 = scalar_lea.vmem [#allocation2], %s3275
        %s3277 = sand.u32 %s239, 1
        %s3278 = scalar_lea.sflag [#allocation5], %s3277
        %s3279 = sand.u32 %s239, 1
        %s3280 = scalar_lea.vmem [#allocation4], %s3279
        // Predicated region
        $region49: #{tpu_custom_call.1} parent=47 // pred_check
          %p3281 = pneg %p197
        $region50: #{tpu_custom_call.1} parent=47 // pred_check_branch
          %3283 = sbr.rel (%p3281) target = $region52
        $region51: #{tpu_custom_call.1} parent=47 // pred_region
          _
        $region52: #{tpu_custom_call.1} parent=47 // pred_fallthru
          _
        // Predicated region
        $region53: #{tpu_custom_call.1} parent=47 // pred_check
          %p3284 = pneg %p223
        $region54: #{tpu_custom_call.1} parent=47 // pred_check_branch
          %3286 = sbr.rel (%p3284) target = $region56
        $region55: #{tpu_custom_call.1} parent=47 // pred_region
          %s3288 = ssub.s32 128, 128
          %3289 = vsyncadd %s3273, %s3288
          %s3290 = smul.addr %s27, 128
          %s3291 = scalar_lea.hbm %s8, %s3290
          %s3293 = sshll.u32 %s3276, 4
          %s3294 = int_to_ptr.vmem [resolvable:$true] %s3293
          %3296 = dma.vmem_to_hbm [thread:$0]  %s3294, 128, %s3291, %s3273
        $region56: #{tpu_custom_call.1} parent=47 // pred_fallthru
          _
        // Predicated region
        $region57: #{tpu_custom_call.1} parent=47 // pred_check
          %p3297 = pneg %p249
        $region58: #{tpu_custom_call.1} parent=47 // pred_check_branch
          %3299 = sbr.rel (%p3297) target = $region60
        $region59: #{tpu_custom_call.1} parent=47 // pred_region
          %s3301 = ssub.s32 16, 16
          %3302 = vsyncadd %s3278, %s3301
          %s3303 = smul.addr %s27, 16
          %s3304 = scalar_lea.hbm %s9, %s3303
          %s3306 = sshll.u32 %s3280, 4
          %s3307 = int_to_ptr.vmem [resolvable:$true] %s3306
          %3309 = dma.vmem_to_hbm [thread:$0]  %s3307, 16, %s3304, %s3278
        $region60: #{tpu_custom_call.1} parent=47 // pred_fallthru
          _
      $region48: #{tpu_custom_call.1} parent=5 // pred_fallthru
        _
      %p3310 = scmp.le.s32.totalorder 2, %s22
      // Predicated region
      $region61: #{tpu_custom_call.1} parent=5 // pred_check
        %p3311 = pneg %p3310
      $region62: #{tpu_custom_call.1} parent=5 // pred_check_branch
        %3313 = sbr.rel (%p3311) target = $region64
      $region63: #{tpu_custom_call.1} parent=5 // pred_region
        %s3314 = ssub.s32 %s22, 2
        // Predicated region
        $region65: #{tpu_custom_call.1} parent=63 // pred_check
          %p3315 = pneg %p203
        $region66: #{tpu_custom_call.1} parent=63 // pred_check_branch
          %3317 = sbr.rel (%p3315) target = $region68
        $region67: #{tpu_custom_call.1} parent=63 // pred_region
          %p3318 = scmp.lt.s32.totalorder %s28, 1
          %s3319 = scalar_select %p3318, %s28, 1
          %s3320 = smul.addr %s3319, 4
          %s3321 = smul.addr %s3320, 8
          %s3322 = scalar_lea.vmem %s7, %s3321
        $region68: #{tpu_custom_call.1} parent=63 // pred_fallthru
          _
        // Predicated region
        $region69: #{tpu_custom_call.1} parent=63 // pred_check
          %p3323 = pneg %p229
        $region70: #{tpu_custom_call.1} parent=63 // pred_check_branch
          %3325 = sbr.rel (%p3323) target = $region72
        $region71: #{tpu_custom_call.1} parent=63 // pred_region
          %s3326 = sand.u32 %s214, 1
          %s3327 = scalar_lea.sflag [#allocation3], %s3326
          %s3328 = sand.u32 %s214, 1
          %s3329 = smul.addr %s3328, 8
          %s3330 = scalar_lea.vmem [#allocation2], %s3329
          %3331 = dma.done %s3327, 128
        $region72: #{tpu_custom_call.1} parent=63 // pred_fallthru
          _
        // Predicated region
        $region73: #{tpu_custom_call.1} parent=63 // pred_check
          %p3332 = pneg %p255
        $region74: #{tpu_custom_call.1} parent=63 // pred_check_branch
          %3334 = sbr.rel (%p3332) target = $region76
        $region75: #{tpu_custom_call.1} parent=63 // pred_region
          %s3335 = sand.u32 %s240, 1
          %s3336 = scalar_lea.sflag [#allocation5], %s3335
          %s3337 = sand.u32 %s240, 1
          %s3338 = scalar_lea.vmem [#allocation4], %s3337
          %3339 = dma.done %s3336, 16
        $region76: #{tpu_custom_call.1} parent=63 // pred_fallthru
          _
      $region64: #{tpu_custom_call.1} parent=5 // pred_fallthru
        _
    $region6: #{tpu_custom_call.1} parent=1 // loop_footer
      %s26 = sadd.s32 1, %s22
    $region7: #{tpu_custom_call.1} parent=1 // loop_footer_branch
      %21 = sbr.rel target = $region3
    $region8: #{tpu_custom_call.1} parent=1 // loop_exit
      _
    %3340 = vsyncpa [#allocation3], 1
    %s3341 = scalar_lea.sflag [#allocation3], 1
    %3342 = vsyncpa %s3341, 1
    %3343 = vsyncpa [#allocation5], 1
    %s3344 = scalar_lea.sflag [#allocation5], 1
    %3345 = vsyncpa %s3344, 1

</llo_original>
